<compile_context>
chip_gen: v7x
topology: tpu7x:2x2x1
jax: 0.10.0
libtpu: 0.0.40
codegen_flags: <defaults>
</compile_context>

<pallas_src>
import functools

import jax
import jax.numpy as jnp
from jax import lax
from jax.experimental import pallas as pl
from jax.experimental.pallas import tpu as pltpu

LN_EPS = 1e-5
_MASK31 = 0x7FFFFFFF


def _tpu_vmem_capacity_bytes():
    try:
        return int(pltpu.get_tpu_info().vmem_capacity_bytes)
    except Exception:
        return 64 << 20   # conservative (v7x-sized) fallback


_VMEM_CAP = _tpu_vmem_capacity_bytes()
_VMEM_LIMIT = min((_VMEM_CAP * 3) // 4, 96 << 20)     # 96 MiB on v5e/v6e, 48 MiB on v7x
_ROW_TILE_TARGET = 512 if _VMEM_CAP >= (100 << 20) else 256


# ----------------------------------------------------------------------------
# Small jnp-only helpers (usable both inside kernels and in the JAX reference).
# ----------------------------------------------------------------------------
def _layer_norm(x, gamma, beta):
    mean = jnp.mean(x, axis=-1, keepdims=True)
    xc = x - mean
    var = jnp.mean(xc * xc, axis=-1, keepdims=True)
    return xc * lax.rsqrt(var + LN_EPS) * gamma + beta


def _gelu_tanh(x):
    c = 0.7978845608028654  # sqrt(2/pi)
    return 0.5 * x * (1.0 + jnp.tanh(c * (x + 0.044715 * (x * x * x))))


def _srl(x, k):
    # Logical right shift for int32 (mask off sign-extended bits).
    return (x >> k) & jnp.int32((1 << (32 - k)) - 1)


def _avalanche(x):
    """One-round Jenkins-style add/shift/xor mixer (VPU/scalar ops only)."""
    x = x + (x << 10)
    x = x ^ _srl(x, 6)
    x = x + (x << 3)
    x = x ^ _srl(x, 11)
    x = x + (x << 15)
    return x & jnp.int32(_MASK31)


def _op_salt(seed, tag, extra=None):
    """Well-mixed per-op salt from the traced seed + a static op/layer tag."""
    base = jnp.int32((tag * 2654435761) & _MASK31)   # static Python mixing
    x = seed + base
    if extra is not None:
        x = x + extra
    return _avalanche(x)


def _dropout_scale(shape, rate, salt, row_offset=0):
    """Per-element keep mask scaled by 1/(1-rate).

    Integer threshold compare on 31-bit hash bits.  Uses *global* row
    coordinates so the mask is independent of the row tiling.
    NOTE: coordinates are packed as (r << 16) + c, so rows >= 32768 wrap;
    fine for the sizes used here.
    """
    r = lax.broadcasted_iota(jnp.int32, shape, 0) + row_offset
    c = lax.broadcasted_iota(jnp.int32, shape, 1)
    bits = _avalanche(((r << 16) + c) ^ salt)
    thresh = jnp.int32(int(rate * 2147483648.0))     # floor(rate * 2**31)
    keep = bits >= thresh
    return jnp.where(keep, jnp.float32(1.0 / (1.0 - rate)), jnp.float32(0.0))


def _round_up(x, m):
    return ((x + m - 1) // m) * m


def _rows_and_tile(m, target):
    """(padded_rows, row_tile): pad M up to the tile instead of shrinking it."""
    if m <= target:
        tm = _round_up(m, 16)        # 16 keeps bf16 sublane packing happy
        return tm, tm
    return _round_up(m, target), target


def _cparams(n_parallel_axes):
    return pltpu.CompilerParams(
        dimension_semantics=("parallel",) * n_parallel_axes,
        vmem_limit_bytes=_VMEM_LIMIT)


# ----------------------------------------------------------------------------
# Kernel 1: row-tiled LayerNorm + QKV projection.  Output is bf16 (M, 3*D).
# ----------------------------------------------------------------------------
def _ln_qkv_kernel(x_ref, g_ref, b_ref, w_ref, bq_ref, o_ref):
    xn = _layer_norm(x_ref[...].astype(jnp.float32), g_ref[...], b_ref[...])
    y = jnp.dot(xn.astype(jnp.bfloat16), w_ref[...],
                preferred_element_type=jnp.float32)
    o_ref[...] = (y + bq_ref[...]).astype(o_ref.dtype)


def ln_qkv(x2d, gamma, beta, w_qkv, b_qkv, *, tm):
    Mp, D = x2d.shape
    O = w_qkv.shape[1]
    return pl.pallas_call(
        _ln_qkv_kernel,
        out_shape=jax.ShapeDtypeStruct((Mp, O), jnp.bfloat16),
        grid_spec=pltpu.PrefetchScalarGridSpec(
            num_scalar_prefetch=0,
            grid=(Mp // tm,),
            in_specs=[
                pl.BlockSpec((tm, D), lambda i: (i, 0)),
                pl.BlockSpec((1, D), lambda i: (0, 0)),
                pl.BlockSpec((1, D), lambda i: (0, 0)),
                pl.BlockSpec((D, O), lambda i: (0, 0)),
                pl.BlockSpec((1, O), lambda i: (0, 0)),
            ],
            out_specs=pl.BlockSpec((tm, O), lambda i: (i, 0)),
        ),
        compiler_params=_cparams(1),
        cost_estimate=pl.CostEstimate(
            flops=2 * Mp * D * O, transcendentals=0,
            bytes_accessed=4 * Mp * D + 2 * Mp * O + 2 * D * O + 4 * O),
    )(x2d, gamma, beta, w_qkv, b_qkv)


# ----------------------------------------------------------------------------
# Kernel 2: per-batch attention over ALL heads.
#   Reads the (N, 3*D) bf16 qkv slab directly (columns ordered (3, heads, dh)),
#   writes a lane-dense (N, D) bf16 context block -> no XLA transposes needed.
# ----------------------------------------------------------------------------
def _attention_kernel(seed_ref, qkv_ref, o_ref, *, heads, dh, scale, rate, tag):
    D = heads * dh
    qkv = qkv_ref[...]                               # (N, 3*D) bf16
    if rate > 0.0:
        b = pl.program_id(0)
    ctx_cols = []
    for h in range(heads):                           # static unroll over heads
        q = qkv[:, h * dh:(h + 1) * dh]
        k = qkv[:, D + h * dh:D + (h + 1) * dh]
        v = qkv[:, 2 * D + h * dh:2 * D + (h + 1) * dh]
        s = lax.dot_general(q, k, (((1,), (1,)), ((), ())),
                            preferred_element_type=jnp.float32)   # (N, N)
        s = s * jnp.float32(scale)
        s = s - jnp.max(s, axis=-1, keepdims=True)
        p = jnp.exp(s)
        p = p / jnp.sum(p, axis=-1, keepdims=True)
        if rate > 0.0:
            salt = _op_salt(seed_ref[0], tag, (b << 8) + h)
            p = p * _dropout_scale(p.shape, rate, salt)
        ctx_cols.append(jnp.dot(p.astype(jnp.bfloat16), v,
                                preferred_element_type=jnp.float32))
    # TODO(synk): flash-style KV tiling (online softmax) for large N.
    o_ref[...] = jnp.concatenate(ctx_cols, axis=-1).astype(o_ref.dtype)


def attention(qkv2d, seeds, *, batch, seq, heads, scale, rate, tag):
    Mp, threeD = qkv2d.shape
    D = threeD // 3
    dh = D // heads
    kern = functools.partial(_attention_kernel, heads=heads, dh=dh,
                             scale=scale, rate=rate, tag=tag)
    return pl.pallas_call(
        kern,
        out_shape=jax.ShapeDtypeStruct((Mp, D), jnp.bfloat16),
        grid_spec=pltpu.PrefetchScalarGridSpec(
            num_scalar_prefetch=1,
            grid=(batch,),
            in_specs=[pl.BlockSpec((seq, threeD), lambda b, s: (b, 0))],
            out_specs=pl.BlockSpec((seq, D), lambda b, s: (b, 0)),
        ),
        compiler_params=_cparams(1),
        cost_estimate=pl.CostEstimate(
            flops=4 * batch * heads * seq * seq * dh,
            transcendentals=batch * heads * seq * seq,
            bytes_accessed=2 * batch * seq * (threeD + D)),
    )(seeds, qkv2d)


# ----------------------------------------------------------------------------
# Kernel 3 (fused): proj + merged dropout + residual + LN2 + FFN + residual.
#   out = x1 + Drop(W2 . Drop(GELU(W1 . LN2(x1) + b1)) + b2)
#   x1  = x + Drop_merged(ctx @ W_o + b_o)
# ----------------------------------------------------------------------------
def _post_attn_ffn_kernel(seed_ref, ctx_ref, x_ref, wo_ref, bo_ref,
                          g2_ref, b2n_ref, w1_ref, b1_ref, w2_ref, b2_ref,
                          o_ref, *, rate_attn_out, rate, tag, tm):
    row0 = pl.program_id(0) * tm
    seed = seed_ref[0]
    # attention output projection (ctx and w_o are bf16 -> MXU, f32 accumulate)
    z = jnp.dot(ctx_ref[...], wo_ref[...],
                preferred_element_type=jnp.float32) + bo_ref[...]
    if rate_attn_out > 0.0:      # merged proj_drop + PreNormDrop dropout
        z = z * _dropout_scale(z.shape, rate_attn_out, _op_salt(seed, tag), row0)
    x1 = x_ref[...].astype(jnp.float32) + z
    # Residual(PreNorm(FeedForward))
    xn = _layer_norm(x1, g2_ref[...], b2n_ref[...])
    h = jnp.dot(xn.astype(jnp.bfloat16), w1_ref[...],
                preferred_element_type=jnp.float32) + b1_ref[...]
    h = _gelu_tanh(h)
    if rate > 0.0:
        h = h * _dropout_scale(h.shape, rate, _op_salt(seed, tag + 1), row0)
    # TODO(synk): chunk the hidden (mlp_dim) axis here for very large mlp_dim on v7x.
    y = jnp.dot(h.astype(jnp.bfloat16), w2_ref[...],
                preferred_element_type=jnp.float32) + b2_ref[...]
    if rate > 0.0:
        y = y * _dropout_scale(y.shape, rate, _op_salt(seed, tag + 2), row0)
    o_ref[...] = (x1 + y).astype(o_ref.dtype)


def post_attn_ffn(ctx2d, x2d, w_o, b_o, g2, b2n, w1, b1, w2, b2, seeds, *,
                  rate_attn_out, rate, tag, tm):
    Mp, D = x2d.shape
    H = w1.shape[1]
    kern = functools.partial(_post_attn_ffn_kernel, rate_attn_out=rate_attn_out,
                             rate=rate, tag=tag, tm=tm)
    row = lambda i, s: (i, 0)
    const = lambda i, s: (0, 0)
    # NOTE: on v7x the constant (weight) specs could use pipeline_mode=pl.Buffered(1)
    # to halve resident-weight VMEM; left at the default for portability.
    return pl.pallas_call(
        kern,
        out_shape=jax.ShapeDtypeStruct((Mp, D), x2d.dtype),
        grid_spec=pltpu.PrefetchScalarGridSpec(
            num_scalar_prefetch=1,
            grid=(Mp // tm,),
            in_specs=[
                pl.BlockSpec((tm, D), row),     # ctx (bf16)
                pl.BlockSpec((tm, D), row),     # x residual (f32)
                pl.BlockSpec((D, D), const),    # w_o (bf16)
                pl.BlockSpec((1, D), const),    # b_o
                pl.BlockSpec((1, D), const),    # ln2 gamma
                pl.BlockSpec((1, D), const),    # ln2 beta
                pl.BlockSpec((D, H), const),    # w1 (bf16)
                pl.BlockSpec((1, H), const),    # b1
                pl.BlockSpec((H, D), const),    # w2 (bf16)
                pl.BlockSpec((1, D), const),    # b2
            ],
            out_specs=pl.BlockSpec((tm, D), row),
        ),
        compiler_params=_cparams(1),
        cost_estimate=pl.CostEstimate(
            flops=2 * Mp * D * D + 4 * Mp * D * H,
            transcendentals=Mp * H,
            bytes_accessed=(2 * Mp * D + 4 * Mp * D + 4 * Mp * D
                            + 2 * D * D + 4 * D * H)),
    )(seeds, ctx2d, x2d, w_o, b_o, g2, b2n, w1, b1, w2, b2)


# ----------------------------------------------------------------------------
# Full TransformerModel forward
# ----------------------------------------------------------------------------
def transformer_forward(x, params, *, heads, dropout_rate, attn_dropout_rate,
                        seed, row_tile=None):
    """x: (B, N, D) float32.  params: list (one dict per layer)."""
    B, N, D = x.shape
    dh = D // heads
    M = B * N
    target = _ROW_TILE_TARGET if row_tile is None else row_tile
    Mp, tm = _rows_and_tile(M, target)
    seeds = jnp.array([seed], jnp.int32)

    x2d = x.reshape(M, D)
    if Mp != M:
        x2d = jnp.pad(x2d, ((0, Mp - M), (0, 0)))   # pad rows; sliced off at the end

    # merged keep prob for (assumed) proj dropout @ attn rate + PreNormDrop @ dropout rate
    keep = (1.0 - attn_dropout_rate) * (1.0 - dropout_rate)
    rate_attn_out = 1.0 - keep

    for li, p in enumerate(params):
        tag = li * 16
        # --- Residual(PreNormDrop(SelfAttention)) ---
        qkv2d = ln_qkv(x2d, p["ln1_g"], p["ln1_b"], p["w_qkv"], p["b_qkv"], tm=tm)
        ctx2d = attention(qkv2d, seeds, batch=B, seq=N, heads=heads,
                          scale=dh ** -0.5, rate=attn_dropout_rate, tag=tag + 1)
        # --- fused: proj + dropout + residual + Residual(PreNorm(FeedForward)) ---
        x2d = post_attn_ffn(ctx2d, x2d, p["w_o"], p["b_o"],
                            p["ln2_g"], p["ln2_b"], p["w1"], p["b1"],
                            p["w2"], p["b2"], seeds,
                            rate_attn_out=rate_attn_out, rate=dropout_rate,
                            tag=tag + 4, tm=tm)

    out2d = x2d[:M] if Mp != M else x2d
    return out2d.reshape(B, N, D)


def init_params(key, depth, dim, heads, mlp_dim):
    """Weights stored in bf16 (consumed in bf16 by the MXU); biases/LN in f32."""
    params = []
    for _ in range(depth):
        key, k1, k2, k3, k4, k5, k6, k7, k8 = jax.random.split(key, 9)
        params.append(dict(
            ln1_g=jnp.ones((1, dim), jnp.float32),
            ln1_b=jnp.zeros((1, dim), jnp.float32),
            w_qkv=(0.02 * jax.random.normal(k1, (dim, 3 * dim), jnp.float32)
                   ).astype(jnp.bfloat16),
            b_qkv=0.02 * jax.random.normal(k5, (1, 3 * dim), jnp.float32),
            w_o=(0.02 * jax.random.normal(k2, (dim, dim), jnp.float32)
                 ).astype(jnp.bfloat16),
            b_o=0.02 * jax.random.normal(k6, (1, dim), jnp.float32),
            ln2_g=jnp.ones((1, dim), jnp.float32),
            ln2_b=jnp.zeros((1, dim), jnp.float32),
            w1=(0.02 * jax.random.normal(k3, (dim, mlp_dim), jnp.float32)
                ).astype(jnp.bfloat16),
            b1=0.02 * jax.random.normal(k7, (1, mlp_dim), jnp.float32),
            w2=(0.02 * jax.random.normal(k4, (mlp_dim, dim), jnp.float32)
                ).astype(jnp.bfloat16),
            b2=0.02 * jax.random.normal(k8, (1, dim), jnp.float32),
        ))
    return params


def reference_forward(x, params, *, heads):
    """Pure-JAX f32 reference (dropout disabled == eval-mode forward)."""
    B, N, D = x.shape
    dh = D // heads
    for p in params:
        w_qkv = p["w_qkv"].astype(jnp.float32)
        w_o = p["w_o"].astype(jnp.float32)
        w1 = p["w1"].astype(jnp.float32)
        w2 = p["w2"].astype(jnp.float32)
        xn = _layer_norm(x, p["ln1_g"], p["ln1_b"])
        qkv = xn @ w_qkv + p["b_qkv"]
        qkv = qkv.reshape(B, N, 3, heads, dh).transpose(2, 0, 3, 1, 4)
        q, k, v = qkv[0], qkv[1], qkv[2]
        s = jnp.einsum("bhnd,bhmd->bhnm", q, k) * (dh ** -0.5)
        a = jax.nn.softmax(s, axis=-1)
        ctx = jnp.einsum("bhnm,bhmd->bhnd", a, v)
        ctx = ctx.transpose(0, 2, 1, 3).reshape(B, N, D)
        x = x + (ctx @ w_o + p["b_o"])
        xn = _layer_norm(x, p["ln2_g"], p["ln2_b"])
        h = _gelu_tanh(xn @ w1 + p["b1"])
        x = x + (h @ w2 + p["b2"])
    return x


if __name__ == "__main__":
    DIM, DEPTH, HEADS, MLP_DIM = 128, 2, 4, 256   # dim lane-dense (multiple of 128)
    B, N = 2, 16
    DROPOUT, ATTN_DROPOUT = 0.1, 0.1

    key = jax.random.PRNGKey(0)
    kx, kp = jax.random.split(key)
    x = jax.random.normal(kx, (B, N, DIM), jnp.float32)
    params = init_params(kp, DEPTH, DIM, HEADS, MLP_DIM)

    # Deterministic check (dropout disabled -> eval-mode forward).
    fwd_eval = jax.jit(functools.partial(
        transformer_forward, heads=HEADS, dropout_rate=0.0,
        attn_dropout_rate=0.0, seed=0))
    out_eval = jax.block_until_ready(fwd_eval(x, params))
    ref = reference_forward(x, params, heads=HEADS)
    assert out_eval.shape == (B, N, DIM)
    max_diff = float(jnp.max(jnp.abs(out_eval - ref)))
    assert bool(jnp.allclose(out_eval, ref, atol=3e-2, rtol=3e-2)), (
        f"mismatch vs reference: max abs diff {max_diff}")

    # Training-mode forward (dropout active, deterministic given the seed).
    fwd_train = jax.jit(functools.partial(
        transformer_forward, heads=HEADS, dropout_rate=DROPOUT,
        attn_dropout_rate=ATTN_DROPOUT, seed=1234))
    out_train = jax.block_until_ready(fwd_train(x, params))
    assert bool(jnp.all(jnp.isfinite(out_train)))

    print("KERNEL_OK")
</pallas_src>

<mosaic_0001>
module attributes {stable_mosaic.version = 11 : i64} {
  func.func @_ln_qkv_kernel(%arg0: i32, %arg1: memref<32x128xf32, #tpu.memory_space<vmem>>, %arg2: memref<1x128xf32, #tpu.memory_space<vmem>>, %arg3: memref<1x128xf32, #tpu.memory_space<vmem>>, %arg4: memref<128x384xbf16, #tpu.memory_space<vmem>>, %arg5: memref<1x384xf32, #tpu.memory_space<vmem>>, %arg6: memref<32x384xbf16, #tpu.memory_space<vmem>>) attributes {dimension_semantics = [#tpu.dimension_semantics<parallel>], iteration_bounds = array<i64: 1>, scalar_prefetch = 0 : i64, scratch_operands = 0 : i64, tpu.core_type = #tpu.core_type<tc>, window_params = [{transform_indices = @transform_0, window_bounds = array<i64: 32, 128>}, {pipeline_mode = #tpu.pipeline_mode<synchronous>, transform_indices = @transform_1, window_bounds = array<i64: 1, 128>}, {pipeline_mode = #tpu.pipeline_mode<synchronous>, transform_indices = @transform_2, window_bounds = array<i64: 1, 128>}, {pipeline_mode = #tpu.pipeline_mode<synchronous>, transform_indices = @transform_3, window_bounds = array<i64: 128, 384>}, {pipeline_mode = #tpu.pipeline_mode<synchronous>, transform_indices = @transform_4, window_bounds = array<i64: 1, 384>}, {transform_indices = @transform_5, window_bounds = array<i64: 32, 384>}]} {
    %c0 = arith.constant 0 : index
    %c0_0 = arith.constant 0 : index
    %0 = vector.load %arg1[%c0, %c0_0] : memref<32x128xf32, #tpu.memory_space<vmem>>, vector<32x128xf32>
    %c0_1 = arith.constant 0 : index
    %c0_2 = arith.constant 0 : index
    %1 = vector.load %arg2[%c0_1, %c0_2] : memref<1x128xf32, #tpu.memory_space<vmem>>, vector<1x128xf32>
    %c0_3 = arith.constant 0 : index
    %c0_4 = arith.constant 0 : index
    %2 = vector.load %arg3[%c0_3, %c0_4] : memref<1x128xf32, #tpu.memory_space<vmem>>, vector<1x128xf32>
    %cst = arith.constant dense<0.000000e+00> : vector<32xf32>
    %3 = vector.multi_reduction <add>, %0, %cst [1] : vector<32x128xf32> to vector<32xf32>
    %4 = vector.shape_cast %3 : vector<32xf32> to vector<32x1xf32>
    %cst_5 = arith.constant 1.280000e+02 : f32
    %5 = vector.broadcast %cst_5 : f32 to vector<32x1xf32>
    %6 = arith.divf %4, %5 : vector<32x1xf32>
    %7 = vector.broadcast %6 : vector<32x1xf32> to vector<32x128xf32>
    %8 = arith.subf %0, %7 : vector<32x128xf32>
    %9 = arith.mulf %8, %8 : vector<32x128xf32>
    %cst_6 = arith.constant dense<0.000000e+00> : vector<32xf32>
    %10 = vector.multi_reduction <add>, %9, %cst_6 [1] : vector<32x128xf32> to vector<32xf32>
    %11 = vector.shape_cast %10 : vector<32xf32> to vector<32x1xf32>
    %cst_7 = arith.constant 1.280000e+02 : f32
    %12 = vector.broadcast %cst_7 : f32 to vector<32x1xf32>
    %13 = arith.divf %11, %12 : vector<32x1xf32>
    %cst_8 = arith.constant 9.99999974E-6 : f32
    %14 = vector.broadcast %cst_8 : f32 to vector<32x1xf32>
    %15 = arith.addf %13, %14 : vector<32x1xf32>
    %16 = math.rsqrt %15 : vector<32x1xf32>
    %17 = vector.broadcast %16 : vector<32x1xf32> to vector<32x128xf32>
    %18 = arith.mulf %8, %17 : vector<32x128xf32>
    %19 = vector.broadcast %1 : vector<1x128xf32> to vector<32x128xf32>
    %20 = arith.mulf %18, %19 : vector<32x128xf32>
    %21 = vector.broadcast %2 : vector<1x128xf32> to vector<32x128xf32>
    %22 = arith.addf %20, %21 : vector<32x128xf32>
    %23 = arith.truncf %22 : vector<32x128xf32> to vector<32x128xbf16>
    %c0_9 = arith.constant 0 : index
    %c0_10 = arith.constant 0 : index
    %24 = vector.load %arg4[%c0_9, %c0_10] : memref<128x384xbf16, #tpu.memory_space<vmem>>, vector<128x384xbf16>
    %cst_11 = arith.constant dense<0.000000e+00> : vector<32x384xf32>
    %25 = tpu.matmul %23, %24, %cst_11 {dimension_numbers = #tpu.dot_dimension_numbers<[1], [0], [0], [1], [0, 0, 1, 1], [], []>} : vector<32x128xbf16>, vector<128x384xbf16>, vector<32x384xf32> -> vector<32x384xf32>
    %c0_12 = arith.constant 0 : index
    %c0_13 = arith.constant 0 : index
    %26 = vector.load %arg5[%c0_12, %c0_13] : memref<1x384xf32, #tpu.memory_space<vmem>>, vector<1x384xf32>
    %27 = vector.broadcast %26 : vector<1x384xf32> to vector<32x384xf32>
    %28 = arith.addf %25, %27 : vector<32x384xf32>
    %29 = arith.truncf %28 : vector<32x384xf32> to vector<32x384xbf16>
    %c0_14 = arith.constant 0 : index
    %c0_15 = arith.constant 0 : index
    %30 = vector.load %arg6[%c0_14, %c0_15] : memref<32x384xbf16, #tpu.memory_space<vmem>>, vector<32x384xbf16>
    tpu.vector_store %arg6[%c0_14, %c0_15], %29 {strides = array<i32>} : memref<32x384xbf16, #tpu.memory_space<vmem>>, vector<32x384xbf16>,
    return
  }
  func.func @transform_0(%arg0: i32) -> (i32, i32) {
    %c0_i32 = arith.constant 0 : i32
    %c0_i32_0 = arith.constant 0 : i32
    return %arg0, %c0_i32 : i32, i32
  }
  func.func @transform_1(%arg0: i32) -> (i32, i32) {
    %c0_i32 = arith.constant 0 : i32
    %c0_i32_0 = arith.constant 0 : i32
    %c0_i32_1 = arith.constant 0 : i32
    return %c0_i32, %c0_i32_0 : i32, i32
  }
  func.func @transform_2(%arg0: i32) -> (i32, i32) {
    %c0_i32 = arith.constant 0 : i32
    %c0_i32_0 = arith.constant 0 : i32
    %c0_i32_1 = arith.constant 0 : i32
    return %c0_i32, %c0_i32_0 : i32, i32
  }
  func.func @transform_3(%arg0: i32) -> (i32, i32) {
    %c0_i32 = arith.constant 0 : i32
    %c0_i32_0 = arith.constant 0 : i32
    %c0_i32_1 = arith.constant 0 : i32
    return %c0_i32, %c0_i32_0 : i32, i32
  }
  func.func @transform_4(%arg0: i32) -> (i32, i32) {
    %c0_i32 = arith.constant 0 : i32
    %c0_i32_0 = arith.constant 0 : i32
    %c0_i32_1 = arith.constant 0 : i32
    return %c0_i32, %c0_i32_0 : i32, i32
  }
  func.func @transform_5(%arg0: i32) -> (i32, i32) {
    %c0_i32 = arith.constant 0 : i32
    %c0_i32_0 = arith.constant 0 : i32
    return %arg0, %c0_i32 : i32, i32
  }
}

module attributes {stable_mosaic.version = 11 : i64} {
  func.func @_post_attn_ffn_kernel(%arg0: i32, %arg1: memref<1xi32, #tpu.memory_space<smem>>, %arg2: memref<32x128xbf16, #tpu.memory_space<vmem>>, %arg3: memref<32x128xf32, #tpu.memory_space<vmem>>, %arg4: memref<128x128xbf16, #tpu.memory_space<vmem>>, %arg5: memref<1x128xf32, #tpu.memory_space<vmem>>, %arg6: memref<1x128xf32, #tpu.memory_space<vmem>>, %arg7: memref<1x128xf32, #tpu.memory_space<vmem>>, %arg8: memref<128x256xbf16, #tpu.memory_space<vmem>>, %arg9: memref<1x256xf32, #tpu.memory_space<vmem>>, %arg10: memref<256x128xbf16, #tpu.memory_space<vmem>>, %arg11: memref<1x128xf32, #tpu.memory_space<vmem>>, %arg12: memref<32x128xf32, #tpu.memory_space<vmem>>) attributes {dimension_semantics = [#tpu.dimension_semantics<parallel>], iteration_bounds = array<i64: 1>, scalar_prefetch = 1 : i64, scratch_operands = 0 : i64, tpu.core_type = #tpu.core_type<tc>, window_params = [{transform_indices = @transform_0, window_bounds = array<i64: 32, 128>}, {transform_indices = @transform_1, window_bounds = array<i64: 32, 128>}, {pipeline_mode = #tpu.pipeline_mode<synchronous>, transform_indices = @transform_2, window_bounds = array<i64: 128, 128>}, {pipeline_mode = #tpu.pipeline_mode<synchronous>, transform_indices = @transform_3, window_bounds = array<i64: 1, 128>}, {pipeline_mode = #tpu.pipeline_mode<synchronous>, transform_indices = @transform_4, window_bounds = array<i64: 1, 128>}, {pipeline_mode = #tpu.pipeline_mode<synchronous>, transform_indices = @transform_5, window_bounds = array<i64: 1, 128>}, {pipeline_mode = #tpu.pipeline_mode<synchronous>, transform_indices = @transform_6, window_bounds = array<i64: 128, 256>}, {pipeline_mode = #tpu.pipeline_mode<synchronous>, transform_indices = @transform_7, window_bounds = array<i64: 1, 256>}, {pipeline_mode = #tpu.pipeline_mode<synchronous>, transform_indices = @transform_8, window_bounds = array<i64: 256, 128>}, {pipeline_mode = #tpu.pipeline_mode<synchronous>, transform_indices = @transform_9, window_bounds = array<i64: 1, 128>}, {transform_indices = @transform_10, window_bounds = array<i64: 32, 128>}]} {
    %c0 = arith.constant 0 : index
    %c0_0 = arith.constant 0 : index
    %0 = vector.load %arg2[%c0, %c0_0] : memref<32x128xbf16, #tpu.memory_space<vmem>>, vector<32x128xbf16>
    %c0_1 = arith.constant 0 : index
    %c0_2 = arith.constant 0 : index
    %1 = vector.load %arg4[%c0_1, %c0_2] : memref<128x128xbf16, #tpu.memory_space<vmem>>, vector<128x128xbf16>
    %cst = arith.constant dense<0.000000e+00> : vector<32x128xf32>
    %2 = tpu.matmul %0, %1, %cst {dimension_numbers = #tpu.dot_dimension_numbers<[1], [0], [0], [1], [0, 0, 1, 1], [], []>} : vector<32x128xbf16>, vector<128x128xbf16>, vector<32x128xf32> -> vector<32x128xf32>
    %c0_3 = arith.constant 0 : index
    %c0_4 = arith.constant 0 : index
    %3 = vector.load %arg5[%c0_3, %c0_4] : memref<1x128xf32, #tpu.memory_space<vmem>>, vector<1x128xf32>
    %4 = vector.broadcast %3 : vector<1x128xf32> to vector<32x128xf32>
    %5 = arith.addf %2, %4 : vector<32x128xf32>
    %c0_5 = arith.constant 0 : index
    %c0_6 = arith.constant 0 : index
    %6 = vector.load %arg3[%c0_5, %c0_6] : memref<32x128xf32, #tpu.memory_space<vmem>>, vector<32x128xf32>
    %7 = arith.addf %6, %5 : vector<32x128xf32>
    %c0_7 = arith.constant 0 : index
    %c0_8 = arith.constant 0 : index
    %8 = vector.load %arg6[%c0_7, %c0_8] : memref<1x128xf32, #tpu.memory_space<vmem>>, vector<1x128xf32>
    %c0_9 = arith.constant 0 : index
    %c0_10 = arith.constant 0 : index
    %9 = vector.load %arg7[%c0_9, %c0_10] : memref<1x128xf32, #tpu.memory_space<vmem>>, vector<1x128xf32>
    %cst_11 = arith.constant dense<0.000000e+00> : vector<32xf32>
    %10 = vector.multi_reduction <add>, %7, %cst_11 [1] : vector<32x128xf32> to vector<32xf32>
    %11 = vector.shape_cast %10 : vector<32xf32> to vector<32x1xf32>
    %cst_12 = arith.constant 1.280000e+02 : f32
    %12 = vector.broadcast %cst_12 : f32 to vector<32x1xf32>
    %13 = arith.divf %11, %12 : vector<32x1xf32>
    %14 = vector.broadcast %13 : vector<32x1xf32> to vector<32x128xf32>
    %15 = arith.subf %7, %14 : vector<32x128xf32>
    %16 = arith.mulf %15, %15 : vector<32x128xf32>
    %cst_13 = arith.constant dense<0.000000e+00> : vector<32xf32>
    %17 = vector.multi_reduction <add>, %16, %cst_13 [1] : vector<32x128xf32> to vector<32xf32>
    %18 = vector.shape_cast %17 : vector<32xf32> to vector<32x1xf32>
    %cst_14 = arith.constant 1.280000e+02 : f32
    %19 = vector.broadcast %cst_14 : f32 to vector<32x1xf32>
    %20 = arith.divf %18, %19 : vector<32x1xf32>
    %cst_15 = arith.constant 9.99999974E-6 : f32
    %21 = vector.broadcast %cst_15 : f32 to vector<32x1xf32>
    %22 = arith.addf %20, %21 : vector<32x1xf32>
    %23 = math.rsqrt %22 : vector<32x1xf32>
    %24 = vector.broadcast %23 : vector<32x1xf32> to vector<32x128xf32>
    %25 = arith.mulf %15, %24 : vector<32x128xf32>
    %26 = vector.broadcast %8 : vector<1x128xf32> to vector<32x128xf32>
    %27 = arith.mulf %25, %26 : vector<32x128xf32>
    %28 = vector.broadcast %9 : vector<1x128xf32> to vector<32x128xf32>
    %29 = arith.addf %27, %28 : vector<32x128xf32>
    %30 = arith.truncf %29 : vector<32x128xf32> to vector<32x128xbf16>
    %c0_16 = arith.constant 0 : index
    %c0_17 = arith.constant 0 : index
    %31 = vector.load %arg8[%c0_16, %c0_17] : memref<128x256xbf16, #tpu.memory_space<vmem>>, vector<128x256xbf16>
    %cst_18 = arith.constant dense<0.000000e+00> : vector<32x256xf32>
    %32 = tpu.matmul %30, %31, %cst_18 {dimension_numbers = #tpu.dot_dimension_numbers<[1], [0], [0], [1], [0, 0, 1, 1], [], []>} : vector<32x128xbf16>, vector<128x256xbf16>, vector<32x256xf32> -> vector<32x256xf32>
    %c0_19 = arith.constant 0 : index
    %c0_20 = arith.constant 0 : index
    %33 = vector.load %arg9[%c0_19, %c0_20] : memref<1x256xf32, #tpu.memory_space<vmem>>, vector<1x256xf32>
    %34 = vector.broadcast %33 : vector<1x256xf32> to vector<32x256xf32>
    %35 = arith.addf %32, %34 : vector<32x256xf32>
    %cst_21 = arith.constant 5.000000e-01 : f32
    %36 = vector.broadcast %cst_21 : f32 to vector<32x256xf32>
    %37 = arith.mulf %36, %35 : vector<32x256xf32>
    %38 = arith.mulf %35, %35 : vector<32x256xf32>
    %39 = arith.mulf %38, %35 : vector<32x256xf32>
    %cst_22 = arith.constant 4.471500e-02 : f32
    %40 = vector.broadcast %cst_22 : f32 to vector<32x256xf32>
    %41 = arith.mulf %40, %39 : vector<32x256xf32>
    %42 = arith.addf %35, %41 : vector<32x256xf32>
    %cst_23 = arith.constant 0.797884583 : f32
    %43 = vector.broadcast %cst_23 : f32 to vector<32x256xf32>
    %44 = arith.mulf %43, %42 : vector<32x256xf32>
    %45 = math.tanh %44 : vector<32x256xf32>
    %cst_24 = arith.constant 1.000000e+00 : f32
    %46 = vector.broadcast %cst_24 : f32 to vector<32x256xf32>
    %47 = arith.addf %46, %45 : vector<32x256xf32>
    %48 = arith.mulf %37, %47 : vector<32x256xf32>
    %49 = arith.truncf %48 : vector<32x256xf32> to vector<32x256xbf16>
    %c0_25 = arith.constant 0 : index
    %c0_26 = arith.constant 0 : index
    %50 = vector.load %arg10[%c0_25, %c0_26] : memref<256x128xbf16, #tpu.memory_space<vmem>>, vector<256x128xbf16>
    %cst_27 = arith.constant dense<0.000000e+00> : vector<32x128xf32>
    %51 = tpu.matmul %49, %50, %cst_27 {dimension_numbers = #tpu.dot_dimension_numbers<[1], [0], [0], [1], [0, 0, 1, 1], [], []>} : vector<32x256xbf16>, vector<256x128xbf16>, vector<32x128xf32> -> vector<32x128xf32>
    %c0_28 = arith.constant 0 : index
    %c0_29 = arith.constant 0 : index
    %52 = vector.load %arg11[%c0_28, %c0_29] : memref<1x128xf32, #tpu.memory_space<vmem>>, vector<1x128xf32>
    %53 = vector.broadcast %52 : vector<1x128xf32> to vector<32x128xf32>
    %54 = arith.addf %51, %53 : vector<32x128xf32>
    %55 = arith.addf %7, %54 : vector<32x128xf32>
    %c0_30 = arith.constant 0 : index
    %c0_31 = arith.constant 0 : index
    %56 = vector.load %arg12[%c0_30, %c0_31] : memref<32x128xf32, #tpu.memory_space<vmem>>, vector<32x128xf32>
    tpu.vector_store %arg12[%c0_30, %c0_31], %55 {strides = array<i32>} : memref<32x128xf32, #tpu.memory_space<vmem>>, vector<32x128xf32>,
    return
  }
  func.func @transform_0(%arg0: i32, %arg1: memref<1xi32, #tpu.memory_space<smem>>) -> (i32, i32) {
    %c0_i32 = arith.constant 0 : i32
    %c0_i32_0 = arith.constant 0 : i32
    return %arg0, %c0_i32 : i32, i32
  }
  func.func @transform_1(%arg0: i32, %arg1: memref<1xi32, #tpu.memory_space<smem>>) -> (i32, i32) {
    %c0_i32 = arith.constant 0 : i32
    %c0_i32_0 = arith.constant 0 : i32
    return %arg0, %c0_i32 : i32, i32
  }
  func.func @transform_2(%arg0: i32, %arg1: memref<1xi32, #tpu.memory_space<smem>>) -> (i32, i32) {
    %c0_i32 = arith.constant 0 : i32
    %c0_i32_0 = arith.constant 0 : i32
    %c0_i32_1 = arith.constant 0 : i32
    return %c0_i32, %c0_i32_0 : i32, i32
  }
  func.func @transform_3(%arg0: i32, %arg1: memref<1xi32, #tpu.memory_space<smem>>) -> (i32, i32) {
    %c0_i32 = arith.constant 0 : i32
    %c0_i32_0 = arith.constant 0 : i32
    %c0_i32_1 = arith.constant 0 : i32
    return %c0_i32, %c0_i32_0 : i32, i32
  }
  func.func @transform_4(%arg0: i32, %arg1: memref<1xi32, #tpu.memory_space<smem>>) -> (i32, i32) {
    %c0_i32 = arith.constant 0 : i32
    %c0_i32_0 = arith.constant 0 : i32
    %c0_i32_1 = arith.constant 0 : i32
    return %c0_i32, %c0_i32_0 : i32, i32
  }
  func.func @transform_5(%arg0: i32, %arg1: memref<1xi32, #tpu.memory_space<smem>>) -> (i32, i32) {
    %c0_i32 = arith.constant 0 : i32
    %c0_i32_0 = arith.constant 0 : i32
    %c0_i32_1 = arith.constant 0 : i32
    return %c0_i32, %c0_i32_0 : i32, i32
  }
  func.func @transform_6(%arg0: i32, %arg1: memref<1xi32, #tpu.memory_space<smem>>) -> (i32, i32) {
    %c0_i32 = arith.constant 0 : i32
    %c0_i32_0 = arith.constant 0 : i32
    %c0_i32_1 = arith.constant 0 : i32
    return %c0_i32, %c0_i32_0 : i32, i32
  }
  func.func @transform_7(%arg0: i32, %arg1: memref<1xi32, #tpu.memory_space<smem>>) -> (i32, i32) {
    %c0_i32 = arith.constant 0 : i32
    %c0_i32_0 = arith.constant 0 : i32
    %c0_i32_1 = arith.constant 0 : i32
    return %c0_i32, %c0_i32_0 : i32, i32
  }
  func.func @transform_8(%arg0: i32, %arg1: memref<1xi32, #tpu.memory_space<smem>>) -> (i32, i32) {
    %c0_i32 = arith.constant 0 : i32
    %c0_i32_0 = arith.constant 0 : i32
    %c0_i32_1 = arith.constant 0 : i32
    return %c0_i32, %c0_i32_0 : i32, i32
  }
  func.func @transform_9(%arg0: i32, %arg1: memref<1xi32, #tpu.memory_space<smem>>) -> (i32, i32) {
    %c0_i32 = arith.constant 0 : i32
    %c0_i32_0 = arith.constant 0 : i32
    %c0_i32_1 = arith.constant 0 : i32
    return %c0_i32, %c0_i32_0 : i32, i32
  }
  func.func @transform_10(%arg0: i32, %arg1: memref<1xi32, #tpu.memory_space<smem>>) -> (i32, i32) {
    %c0_i32 = arith.constant 0 : i32
    %c0_i32_0 = arith.constant 0 : i32
    return %arg0, %c0_i32 : i32, i32
  }
}

module attributes {stable_mosaic.version = 11 : i64} {
  func.func @_ln_qkv_kernel(%arg0: i32, %arg1: memref<32x128xf32, #tpu.memory_space<vmem>>, %arg2: memref<1x128xf32, #tpu.memory_space<vmem>>, %arg3: memref<1x128xf32, #tpu.memory_space<vmem>>, %arg4: memref<128x384xbf16, #tpu.memory_space<vmem>>, %arg5: memref<1x384xf32, #tpu.memory_space<vmem>>, %arg6: memref<32x384xbf16, #tpu.memory_space<vmem>>) attributes {dimension_semantics = [#tpu.dimension_semantics<parallel>], iteration_bounds = array<i64: 1>, scalar_prefetch = 0 : i64, scratch_operands = 0 : i64, tpu.core_type = #tpu.core_type<tc>, window_params = [{transform_indices = @transform_0, window_bounds = array<i64: 32, 128>}, {pipeline_mode = #tpu.pipeline_mode<synchronous>, transform_indices = @transform_1, window_bounds = array<i64: 1, 128>}, {pipeline_mode = #tpu.pipeline_mode<synchronous>, transform_indices = @transform_2, window_bounds = array<i64: 1, 128>}, {pipeline_mode = #tpu.pipeline_mode<synchronous>, transform_indices = @transform_3, window_bounds = array<i64: 128, 384>}, {pipeline_mode = #tpu.pipeline_mode<synchronous>, transform_indices = @transform_4, window_bounds = array<i64: 1, 384>}, {transform_indices = @transform_5, window_bounds = array<i64: 32, 384>}]} {
    %c0 = arith.constant 0 : index
    %c0_0 = arith.constant 0 : index
    %0 = vector.load %arg1[%c0, %c0_0] : memref<32x128xf32, #tpu.memory_space<vmem>>, vector<32x128xf32>
    %c0_1 = arith.constant 0 : index
    %c0_2 = arith.constant 0 : index
    %1 = vector.load %arg2[%c0_1, %c0_2] : memref<1x128xf32, #tpu.memory_space<vmem>>, vector<1x128xf32>
    %c0_3 = arith.constant 0 : index
    %c0_4 = arith.constant 0 : index
    %2 = vector.load %arg3[%c0_3, %c0_4] : memref<1x128xf32, #tpu.memory_space<vmem>>, vector<1x128xf32>
    %cst = arith.constant dense<0.000000e+00> : vector<32xf32>
    %3 = vector.multi_reduction <add>, %0, %cst [1] : vector<32x128xf32> to vector<32xf32>
    %4 = vector.shape_cast %3 : vector<32xf32> to vector<32x1xf32>
    %cst_5 = arith.constant 1.280000e+02 : f32
    %5 = vector.broadcast %cst_5 : f32 to vector<32x1xf32>
    %6 = arith.divf %4, %5 : vector<32x1xf32>
    %7 = vector.broadcast %6 : vector<32x1xf32> to vector<32x128xf32>
    %8 = arith.subf %0, %7 : vector<32x128xf32>
    %9 = arith.mulf %8, %8 : vector<32x128xf32>
    %cst_6 = arith.constant dense<0.000000e+00> : vector<32xf32>
    %10 = vector.multi_reduction <add>, %9, %cst_6 [1] : vector<32x128xf32> to vector<32xf32>
    %11 = vector.shape_cast %10 : vector<32xf32> to vector<32x1xf32>
    %cst_7 = arith.constant 1.280000e+02 : f32
    %12 = vector.broadcast %cst_7 : f32 to vector<32x1xf32>
    %13 = arith.divf %11, %12 : vector<32x1xf32>
    %cst_8 = arith.constant 9.99999974E-6 : f32
    %14 = vector.broadcast %cst_8 : f32 to vector<32x1xf32>
    %15 = arith.addf %13, %14 : vector<32x1xf32>
    %16 = math.rsqrt %15 : vector<32x1xf32>
    %17 = vector.broadcast %16 : vector<32x1xf32> to vector<32x128xf32>
    %18 = arith.mulf %8, %17 : vector<32x128xf32>
    %19 = vector.broadcast %1 : vector<1x128xf32> to vector<32x128xf32>
    %20 = arith.mulf %18, %19 : vector<32x128xf32>
    %21 = vector.broadcast %2 : vector<1x128xf32> to vector<32x128xf32>
    %22 = arith.addf %20, %21 : vector<32x128xf32>
    %23 = arith.truncf %22 : vector<32x128xf32> to vector<32x128xbf16>
    %c0_9 = arith.constant 0 : index
    %c0_10 = arith.constant 0 : index
    %24 = vector.load %arg4[%c0_9, %c0_10] : memref<128x384xbf16, #tpu.memory_space<vmem>>, vector<128x384xbf16>
    %cst_11 = arith.constant dense<0.000000e+00> : vector<32x384xf32>
    %25 = tpu.matmul %23, %24, %cst_11 {dimension_numbers = #tpu.dot_dimension_numbers<[1], [0], [0], [1], [0, 0, 1, 1], [], []>} : vector<32x128xbf16>, vector<128x384xbf16>, vector<32x384xf32> -> vector<32x384xf32>
    %c0_12 = arith.constant 0 : index
    %c0_13 = arith.constant 0 : index
    %26 = vector.load %arg5[%c0_12, %c0_13] : memref<1x384xf32, #tpu.memory_space<vmem>>, vector<1x384xf32>
    %27 = vector.broadcast %26 : vector<1x384xf32> to vector<32x384xf32>
    %28 = arith.addf %25, %27 : vector<32x384xf32>
    %29 = arith.truncf %28 : vector<32x384xf32> to vector<32x384xbf16>
    %c0_14 = arith.constant 0 : index
    %c0_15 = arith.constant 0 : index
    %30 = vector.load %arg6[%c0_14, %c0_15] : memref<32x384xbf16, #tpu.memory_space<vmem>>, vector<32x384xbf16>
    tpu.vector_store %arg6[%c0_14, %c0_15], %29 {strides = array<i32>} : memref<32x384xbf16, #tpu.memory_space<vmem>>, vector<32x384xbf16>,
    return
  }
  func.func @transform_0(%arg0: i32) -> (i32, i32) {
    %c0_i32 = arith.constant 0 : i32
    %c0_i32_0 = arith.constant 0 : i32
    return %arg0, %c0_i32 : i32, i32
  }
  func.func @transform_1(%arg0: i32) -> (i32, i32) {
    %c0_i32 = arith.constant 0 : i32
    %c0_i32_0 = arith.constant 0 : i32
    %c0_i32_1 = arith.constant 0 : i32
    return %c0_i32, %c0_i32_0 : i32, i32
  }
  func.func @transform_2(%arg0: i32) -> (i32, i32) {
    %c0_i32 = arith.constant 0 : i32
    %c0_i32_0 = arith.constant 0 : i32
    %c0_i32_1 = arith.constant 0 : i32
    return %c0_i32, %c0_i32_0 : i32, i32
  }
  func.func @transform_3(%arg0: i32) -> (i32, i32) {
    %c0_i32 = arith.constant 0 : i32
    %c0_i32_0 = arith.constant 0 : i32
    %c0_i32_1 = arith.constant 0 : i32
    return %c0_i32, %c0_i32_0 : i32, i32
  }
  func.func @transform_4(%arg0: i32) -> (i32, i32) {
    %c0_i32 = arith.constant 0 : i32
    %c0_i32_0 = arith.constant 0 : i32
    %c0_i32_1 = arith.constant 0 : i32
    return %c0_i32, %c0_i32_0 : i32, i32
  }
  func.func @transform_5(%arg0: i32) -> (i32, i32) {
    %c0_i32 = arith.constant 0 : i32
    %c0_i32_0 = arith.constant 0 : i32
    return %arg0, %c0_i32 : i32, i32
  }
}

module attributes {stable_mosaic.version = 11 : i64} {
  func.func @_attention_kernel(%arg0: i32, %arg1: memref<1xi32, #tpu.memory_space<smem>>, %arg2: memref<16x384xbf16, #tpu.memory_space<vmem>>, %arg3: memref<16x128xbf16, #tpu.memory_space<vmem>>) attributes {dimension_semantics = [#tpu.dimension_semantics<parallel>], iteration_bounds = array<i64: 2>, scalar_prefetch = 1 : i64, scratch_operands = 0 : i64, tpu.core_type = #tpu.core_type<tc>, window_params = [{transform_indices = @transform_0, window_bounds = array<i64: 16, 384>}, {transform_indices = @transform_1, window_bounds = array<i64: 16, 128>}]} {
    %c0 = arith.constant 0 : index
    %c0_0 = arith.constant 0 : index
    %0 = vector.load %arg2[%c0, %c0_0] : memref<16x384xbf16, #tpu.memory_space<vmem>>, vector<16x384xbf16>
    %1 = vector.extract_strided_slice %0 {offsets = [0, 0], sizes = [16, 32], strides = [1, 1]} : vector<16x384xbf16> to vector<16x32xbf16>
    %2 = vector.extract_strided_slice %0 {offsets = [0, 128], sizes = [16, 32], strides = [1, 1]} : vector<16x384xbf16> to vector<16x32xbf16>
    %3 = vector.extract_strided_slice %0 {offsets = [0, 256], sizes = [16, 32], strides = [1, 1]} : vector<16x384xbf16> to vector<16x32xbf16>
    %cst = arith.constant dense<0.000000e+00> : vector<16x16xf32>
    %4 = tpu.matmul %1, %2, %cst {dimension_numbers = #tpu.dot_dimension_numbers<[1], [1], [0], [0], [0, 0, 1, 0], [], []>} : vector<16x32xbf16>, vector<16x32xbf16>, vector<16x16xf32> -> vector<16x16xf32>
    %cst_1 = arith.constant 0.176776692 : f32
    %5 = vector.broadcast %cst_1 : f32 to vector<16x16xf32>
    %6 = arith.mulf %4, %5 : vector<16x16xf32>
    %cst_2 = arith.constant dense<0xFF800000> : vector<16xf32>
    %7 = vector.multi_reduction <maximumf>, %6, %cst_2 [1] : vector<16x16xf32> to vector<16xf32>
    %8 = vector.shape_cast %7 : vector<16xf32> to vector<16x1xf32>
    %9 = vector.broadcast %8 : vector<16x1xf32> to vector<16x16xf32>
    %10 = arith.subf %6, %9 : vector<16x16xf32>
    %11 = math.exp %10 : vector<16x16xf32>
    %cst_3 = arith.constant dense<0.000000e+00> : vector<16xf32>
    %12 = vector.multi_reduction <add>, %11, %cst_3 [1] : vector<16x16xf32> to vector<16xf32>
    %13 = vector.shape_cast %12 : vector<16xf32> to vector<16x1xf32>
    %14 = vector.broadcast %13 : vector<16x1xf32> to vector<16x16xf32>
    %15 = arith.divf %11, %14 : vector<16x16xf32>
    %16 = arith.truncf %15 : vector<16x16xf32> to vector<16x16xbf16>
    %cst_4 = arith.constant dense<0.000000e+00> : vector<16x32xf32>
    %17 = tpu.matmul %16, %3, %cst_4 {dimension_numbers = #tpu.dot_dimension_numbers<[1], [0], [0], [1], [0, 0, 1, 1], [], []>} : vector<16x16xbf16>, vector<16x32xbf16>, vector<16x32xf32> -> vector<16x32xf32>
    %18 = vector.extract_strided_slice %0 {offsets = [0, 32], sizes = [16, 32], strides = [1, 1]} : vector<16x384xbf16> to vector<16x32xbf16>
    %19 = vector.extract_strided_slice %0 {offsets = [0, 160], sizes = [16, 32], strides = [1, 1]} : vector<16x384xbf16> to vector<16x32xbf16>
    %20 = vector.extract_strided_slice %0 {offsets = [0, 288], sizes = [16, 32], strides = [1, 1]} : vector<16x384xbf16> to vector<16x32xbf16>
    %cst_5 = arith.constant dense<0.000000e+00> : vector<16x16xf32>
    %21 = tpu.matmul %18, %19, %cst_5 {dimension_numbers = #tpu.dot_dimension_numbers<[1], [1], [0], [0], [0, 0, 1, 0], [], []>} : vector<16x32xbf16>, vector<16x32xbf16>, vector<16x16xf32> -> vector<16x16xf32>
    %cst_6 = arith.constant 0.176776692 : f32
    %22 = vector.broadcast %cst_6 : f32 to vector<16x16xf32>
    %23 = arith.mulf %21, %22 : vector<16x16xf32>
    %cst_7 = arith.constant dense<0xFF800000> : vector<16xf32>
    %24 = vector.multi_reduction <maximumf>, %23, %cst_7 [1] : vector<16x16xf32> to vector<16xf32>
    %25 = vector.shape_cast %24 : vector<16xf32> to vector<16x1xf32>
    %26 = vector.broadcast %25 : vector<16x1xf32> to vector<16x16xf32>
    %27 = arith.subf %23, %26 : vector<16x16xf32>
    %28 = math.exp %27 : vector<16x16xf32>
    %cst_8 = arith.constant dense<0.000000e+00> : vector<16xf32>
    %29 = vector.multi_reduction <add>, %28, %cst_8 [1] : vector<16x16xf32> to vector<16xf32>
    %30 = vector.shape_cast %29 : vector<16xf32> to vector<16x1xf32>
    %31 = vector.broadcast %30 : vector<16x1xf32> to vector<16x16xf32>
    %32 = arith.divf %28, %31 : vector<16x16xf32>
    %33 = arith.truncf %32 : vector<16x16xf32> to vector<16x16xbf16>
    %cst_9 = arith.constant dense<0.000000e+00> : vector<16x32xf32>
    %34 = tpu.matmul %33, %20, %cst_9 {dimension_numbers = #tpu.dot_dimension_numbers<[1], [0], [0], [1], [0, 0, 1, 1], [], []>} : vector<16x16xbf16>, vector<16x32xbf16>, vector<16x32xf32> -> vector<16x32xf32>
    %35 = vector.extract_strided_slice %0 {offsets = [0, 64], sizes = [16, 32], strides = [1, 1]} : vector<16x384xbf16> to vector<16x32xbf16>
    %36 = vector.extract_strided_slice %0 {offsets = [0, 192], sizes = [16, 32], strides = [1, 1]} : vector<16x384xbf16> to vector<16x32xbf16>
    %37 = vector.extract_strided_slice %0 {offsets = [0, 320], sizes = [16, 32], strides = [1, 1]} : vector<16x384xbf16> to vector<16x32xbf16>
    %cst_10 = arith.constant dense<0.000000e+00> : vector<16x16xf32>
    %38 = tpu.matmul %35, %36, %cst_10 {dimension_numbers = #tpu.dot_dimension_numbers<[1], [1], [0], [0], [0, 0, 1, 0], [], []>} : vector<16x32xbf16>, vector<16x32xbf16>, vector<16x16xf32> -> vector<16x16xf32>
    %cst_11 = arith.constant 0.176776692 : f32
    %39 = vector.broadcast %cst_11 : f32 to vector<16x16xf32>
    %40 = arith.mulf %38, %39 : vector<16x16xf32>
    %cst_12 = arith.constant dense<0xFF800000> : vector<16xf32>
    %41 = vector.multi_reduction <maximumf>, %40, %cst_12 [1] : vector<16x16xf32> to vector<16xf32>
    %42 = vector.shape_cast %41 : vector<16xf32> to vector<16x1xf32>
    %43 = vector.broadcast %42 : vector<16x1xf32> to vector<16x16xf32>
    %44 = arith.subf %40, %43 : vector<16x16xf32>
    %45 = math.exp %44 : vector<16x16xf32>
    %cst_13 = arith.constant dense<0.000000e+00> : vector<16xf32>
    %46 = vector.multi_reduction <add>, %45, %cst_13 [1] : vector<16x16xf32> to vector<16xf32>
    %47 = vector.shape_cast %46 : vector<16xf32> to vector<16x1xf32>
    %48 = vector.broadcast %47 : vector<16x1xf32> to vector<16x16xf32>
    %49 = arith.divf %45, %48 : vector<16x16xf32>
    %50 = arith.truncf %49 : vector<16x16xf32> to vector<16x16xbf16>
    %cst_14 = arith.constant dense<0.000000e+00> : vector<16x32xf32>
    %51 = tpu.matmul %50, %37, %cst_14 {dimension_numbers = #tpu.dot_dimension_numbers<[1], [0], [0], [1], [0, 0, 1, 1], [], []>} : vector<16x16xbf16>, vector<16x32xbf16>, vector<16x32xf32> -> vector<16x32xf32>
    %52 = vector.extract_strided_slice %0 {offsets = [0, 96], sizes = [16, 32], strides = [1, 1]} : vector<16x384xbf16> to vector<16x32xbf16>
    %53 = vector.extract_strided_slice %0 {offsets = [0, 224], sizes = [16, 32], strides = [1, 1]} : vector<16x384xbf16> to vector<16x32xbf16>
    %54 = vector.extract_strided_slice %0 {offsets = [0, 352], sizes = [16, 32], strides = [1, 1]} : vector<16x384xbf16> to vector<16x32xbf16>
    %cst_15 = arith.constant dense<0.000000e+00> : vector<16x16xf32>
    %55 = tpu.matmul %52, %53, %cst_15 {dimension_numbers = #tpu.dot_dimension_numbers<[1], [1], [0], [0], [0, 0, 1, 0], [], []>} : vector<16x32xbf16>, vector<16x32xbf16>, vector<16x16xf32> -> vector<16x16xf32>
    %cst_16 = arith.constant 0.176776692 : f32
    %56 = vector.broadcast %cst_16 : f32 to vector<16x16xf32>
    %57 = arith.mulf %55, %56 : vector<16x16xf32>
    %cst_17 = arith.constant dense<0xFF800000> : vector<16xf32>
    %58 = vector.multi_reduction <maximumf>, %57, %cst_17 [1] : vector<16x16xf32> to vector<16xf32>
    %59 = vector.shape_cast %58 : vector<16xf32> to vector<16x1xf32>
    %60 = vector.broadcast %59 : vector<16x1xf32> to vector<16x16xf32>
    %61 = arith.subf %57, %60 : vector<16x16xf32>
    %62 = math.exp %61 : vector<16x16xf32>
    %cst_18 = arith.constant dense<0.000000e+00> : vector<16xf32>
    %63 = vector.multi_reduction <add>, %62, %cst_18 [1] : vector<16x16xf32> to vector<16xf32>
    %64 = vector.shape_cast %63 : vector<16xf32> to vector<16x1xf32>
    %65 = vector.broadcast %64 : vector<16x1xf32> to vector<16x16xf32>
    %66 = arith.divf %62, %65 : vector<16x16xf32>
    %67 = arith.truncf %66 : vector<16x16xf32> to vector<16x16xbf16>
    %cst_19 = arith.constant dense<0.000000e+00> : vector<16x32xf32>
    %68 = tpu.matmul %67, %54, %cst_19 {dimension_numbers = #tpu.dot_dimension_numbers<[1], [0], [0], [1], [0, 0, 1, 1], [], []>} : vector<16x16xbf16>, vector<16x32xbf16>, vector<16x32xf32> -> vector<16x32xf32>
    %69 = tpu.concatenate %17, %34, %51, %68 in 1 : vector<16x32xf32>, vector<16x32xf32>, vector<16x32xf32>, vector<16x32xf32> -> vector<16x128xf32>
    %70 = arith.truncf %69 : vector<16x128xf32> to vector<16x128xbf16>
    %c0_20 = arith.constant 0 : index
    %c0_21 = arith.constant 0 : index
    %71 = vector.load %arg3[%c0_20, %c0_21] : memref<16x128xbf16, #tpu.memory_space<vmem>>, vector<16x128xbf16>
    tpu.vector_store %arg3[%c0_20, %c0_21], %70 {strides = array<i32>} : memref<16x128xbf16, #tpu.memory_space<vmem>>, vector<16x128xbf16>,
    return
  }
  func.func @transform_0(%arg0: i32, %arg1: memref<1xi32, #tpu.memory_space<smem>>) -> (i32, i32) {
    %c0_i32 = arith.constant 0 : i32
    %c0_i32_0 = arith.constant 0 : i32
    return %arg0, %c0_i32 : i32, i32
  }
  func.func @transform_1(%arg0: i32, %arg1: memref<1xi32, #tpu.memory_space<smem>>) -> (i32, i32) {
    %c0_i32 = arith.constant 0 : i32
    %c0_i32_0 = arith.constant 0 : i32
    return %arg0, %c0_i32 : i32, i32
  }
}

module attributes {stable_mosaic.version = 11 : i64} {
  func.func @_post_attn_ffn_kernel(%arg0: i32, %arg1: memref<1xi32, #tpu.memory_space<smem>>, %arg2: memref<32x128xbf16, #tpu.memory_space<vmem>>, %arg3: memref<32x128xf32, #tpu.memory_space<vmem>>, %arg4: memref<128x128xbf16, #tpu.memory_space<vmem>>, %arg5: memref<1x128xf32, #tpu.memory_space<vmem>>, %arg6: memref<1x128xf32, #tpu.memory_space<vmem>>, %arg7: memref<1x128xf32, #tpu.memory_space<vmem>>, %arg8: memref<128x256xbf16, #tpu.memory_space<vmem>>, %arg9: memref<1x256xf32, #tpu.memory_space<vmem>>, %arg10: memref<256x128xbf16, #tpu.memory_space<vmem>>, %arg11: memref<1x128xf32, #tpu.memory_space<vmem>>, %arg12: memref<32x128xf32, #tpu.memory_space<vmem>>) attributes {dimension_semantics = [#tpu.dimension_semantics<parallel>], iteration_bounds = array<i64: 1>, scalar_prefetch = 1 : i64, scratch_operands = 0 : i64, tpu.core_type = #tpu.core_type<tc>, window_params = [{transform_indices = @transform_0, window_bounds = array<i64: 32, 128>}, {transform_indices = @transform_1, window_bounds = array<i64: 32, 128>}, {pipeline_mode = #tpu.pipeline_mode<synchronous>, transform_indices = @transform_2, window_bounds = array<i64: 128, 128>}, {pipeline_mode = #tpu.pipeline_mode<synchronous>, transform_indices = @transform_3, window_bounds = array<i64: 1, 128>}, {pipeline_mode = #tpu.pipeline_mode<synchronous>, transform_indices = @transform_4, window_bounds = array<i64: 1, 128>}, {pipeline_mode = #tpu.pipeline_mode<synchronous>, transform_indices = @transform_5, window_bounds = array<i64: 1, 128>}, {pipeline_mode = #tpu.pipeline_mode<synchronous>, transform_indices = @transform_6, window_bounds = array<i64: 128, 256>}, {pipeline_mode = #tpu.pipeline_mode<synchronous>, transform_indices = @transform_7, window_bounds = array<i64: 1, 256>}, {pipeline_mode = #tpu.pipeline_mode<synchronous>, transform_indices = @transform_8, window_bounds = array<i64: 256, 128>}, {pipeline_mode = #tpu.pipeline_mode<synchronous>, transform_indices = @transform_9, window_bounds = array<i64: 1, 128>}, {transform_indices = @transform_10, window_bounds = array<i64: 32, 128>}]} {
    %c0 = arith.constant 0 : index
    %c0_0 = arith.constant 0 : index
    %0 = vector.load %arg2[%c0, %c0_0] : memref<32x128xbf16, #tpu.memory_space<vmem>>, vector<32x128xbf16>
    %c0_1 = arith.constant 0 : index
    %c0_2 = arith.constant 0 : index
    %1 = vector.load %arg4[%c0_1, %c0_2] : memref<128x128xbf16, #tpu.memory_space<vmem>>, vector<128x128xbf16>
    %cst = arith.constant dense<0.000000e+00> : vector<32x128xf32>
    %2 = tpu.matmul %0, %1, %cst {dimension_numbers = #tpu.dot_dimension_numbers<[1], [0], [0], [1], [0, 0, 1, 1], [], []>} : vector<32x128xbf16>, vector<128x128xbf16>, vector<32x128xf32> -> vector<32x128xf32>
    %c0_3 = arith.constant 0 : index
    %c0_4 = arith.constant 0 : index
    %3 = vector.load %arg5[%c0_3, %c0_4] : memref<1x128xf32, #tpu.memory_space<vmem>>, vector<1x128xf32>
    %4 = vector.broadcast %3 : vector<1x128xf32> to vector<32x128xf32>
    %5 = arith.addf %2, %4 : vector<32x128xf32>
    %c0_5 = arith.constant 0 : index
    %c0_6 = arith.constant 0 : index
    %6 = vector.load %arg3[%c0_5, %c0_6] : memref<32x128xf32, #tpu.memory_space<vmem>>, vector<32x128xf32>
    %7 = arith.addf %6, %5 : vector<32x128xf32>
    %c0_7 = arith.constant 0 : index
    %c0_8 = arith.constant 0 : index
    %8 = vector.load %arg6[%c0_7, %c0_8] : memref<1x128xf32, #tpu.memory_space<vmem>>, vector<1x128xf32>
    %c0_9 = arith.constant 0 : index
    %c0_10 = arith.constant 0 : index
    %9 = vector.load %arg7[%c0_9, %c0_10] : memref<1x128xf32, #tpu.memory_space<vmem>>, vector<1x128xf32>
    %cst_11 = arith.constant dense<0.000000e+00> : vector<32xf32>
    %10 = vector.multi_reduction <add>, %7, %cst_11 [1] : vector<32x128xf32> to vector<32xf32>
    %11 = vector.shape_cast %10 : vector<32xf32> to vector<32x1xf32>
    %cst_12 = arith.constant 1.280000e+02 : f32
    %12 = vector.broadcast %cst_12 : f32 to vector<32x1xf32>
    %13 = arith.divf %11, %12 : vector<32x1xf32>
    %14 = vector.broadcast %13 : vector<32x1xf32> to vector<32x128xf32>
    %15 = arith.subf %7, %14 : vector<32x128xf32>
    %16 = arith.mulf %15, %15 : vector<32x128xf32>
    %cst_13 = arith.constant dense<0.000000e+00> : vector<32xf32>
    %17 = vector.multi_reduction <add>, %16, %cst_13 [1] : vector<32x128xf32> to vector<32xf32>
    %18 = vector.shape_cast %17 : vector<32xf32> to vector<32x1xf32>
    %cst_14 = arith.constant 1.280000e+02 : f32
    %19 = vector.broadcast %cst_14 : f32 to vector<32x1xf32>
    %20 = arith.divf %18, %19 : vector<32x1xf32>
    %cst_15 = arith.constant 9.99999974E-6 : f32
    %21 = vector.broadcast %cst_15 : f32 to vector<32x1xf32>
    %22 = arith.addf %20, %21 : vector<32x1xf32>
    %23 = math.rsqrt %22 : vector<32x1xf32>
    %24 = vector.broadcast %23 : vector<32x1xf32> to vector<32x128xf32>
    %25 = arith.mulf %15, %24 : vector<32x128xf32>
    %26 = vector.broadcast %8 : vector<1x128xf32> to vector<32x128xf32>
    %27 = arith.mulf %25, %26 : vector<32x128xf32>
    %28 = vector.broadcast %9 : vector<1x128xf32> to vector<32x128xf32>
    %29 = arith.addf %27, %28 : vector<32x128xf32>
    %30 = arith.truncf %29 : vector<32x128xf32> to vector<32x128xbf16>
    %c0_16 = arith.constant 0 : index
    %c0_17 = arith.constant 0 : index
    %31 = vector.load %arg8[%c0_16, %c0_17] : memref<128x256xbf16, #tpu.memory_space<vmem>>, vector<128x256xbf16>
    %cst_18 = arith.constant dense<0.000000e+00> : vector<32x256xf32>
    %32 = tpu.matmul %30, %31, %cst_18 {dimension_numbers = #tpu.dot_dimension_numbers<[1], [0], [0], [1], [0, 0, 1, 1], [], []>} : vector<32x128xbf16>, vector<128x256xbf16>, vector<32x256xf32> -> vector<32x256xf32>
    %c0_19 = arith.constant 0 : index
    %c0_20 = arith.constant 0 : index
    %33 = vector.load %arg9[%c0_19, %c0_20] : memref<1x256xf32, #tpu.memory_space<vmem>>, vector<1x256xf32>
    %34 = vector.broadcast %33 : vector<1x256xf32> to vector<32x256xf32>
    %35 = arith.addf %32, %34 : vector<32x256xf32>
    %cst_21 = arith.constant 5.000000e-01 : f32
    %36 = vector.broadcast %cst_21 : f32 to vector<32x256xf32>
    %37 = arith.mulf %36, %35 : vector<32x256xf32>
    %38 = arith.mulf %35, %35 : vector<32x256xf32>
    %39 = arith.mulf %38, %35 : vector<32x256xf32>
    %cst_22 = arith.constant 4.471500e-02 : f32
    %40 = vector.broadcast %cst_22 : f32 to vector<32x256xf32>
    %41 = arith.mulf %40, %39 : vector<32x256xf32>
    %42 = arith.addf %35, %41 : vector<32x256xf32>
    %cst_23 = arith.constant 0.797884583 : f32
    %43 = vector.broadcast %cst_23 : f32 to vector<32x256xf32>
    %44 = arith.mulf %43, %42 : vector<32x256xf32>
    %45 = math.tanh %44 : vector<32x256xf32>
    %cst_24 = arith.constant 1.000000e+00 : f32
    %46 = vector.broadcast %cst_24 : f32 to vector<32x256xf32>
    %47 = arith.addf %46, %45 : vector<32x256xf32>
    %48 = arith.mulf %37, %47 : vector<32x256xf32>
    %49 = arith.truncf %48 : vector<32x256xf32> to vector<32x256xbf16>
    %c0_25 = arith.constant 0 : index
    %c0_26 = arith.constant 0 : index
    %50 = vector.load %arg10[%c0_25, %c0_26] : memref<256x128xbf16, #tpu.memory_space<vmem>>, vector<256x128xbf16>
    %cst_27 = arith.constant dense<0.000000e+00> : vector<32x128xf32>
    %51 = tpu.matmul %49, %50, %cst_27 {dimension_numbers = #tpu.dot_dimension_numbers<[1], [0], [0], [1], [0, 0, 1, 1], [], []>} : vector<32x256xbf16>, vector<256x128xbf16>, vector<32x128xf32> -> vector<32x128xf32>
    %c0_28 = arith.constant 0 : index
    %c0_29 = arith.constant 0 : index
    %52 = vector.load %arg11[%c0_28, %c0_29] : memref<1x128xf32, #tpu.memory_space<vmem>>, vector<1x128xf32>
    %53 = vector.broadcast %52 : vector<1x128xf32> to vector<32x128xf32>
    %54 = arith.addf %51, %53 : vector<32x128xf32>
    %55 = arith.addf %7, %54 : vector<32x128xf32>
    %c0_30 = arith.constant 0 : index
    %c0_31 = arith.constant 0 : index
    %56 = vector.load %arg12[%c0_30, %c0_31] : memref<32x128xf32, #tpu.memory_space<vmem>>, vector<32x128xf32>
    tpu.vector_store %arg12[%c0_30, %c0_31], %55 {strides = array<i32>} : memref<32x128xf32, #tpu.memory_space<vmem>>, vector<32x128xf32>,
    return
  }
  func.func @transform_0(%arg0: i32, %arg1: memref<1xi32, #tpu.memory_space<smem>>) -> (i32, i32) {
    %c0_i32 = arith.constant 0 : i32
    %c0_i32_0 = arith.constant 0 : i32
    return %arg0, %c0_i32 : i32, i32
  }
  func.func @transform_1(%arg0: i32, %arg1: memref<1xi32, #tpu.memory_space<smem>>) -> (i32, i32) {
    %c0_i32 = arith.constant 0 : i32
    %c0_i32_0 = arith.constant 0 : i32
    return %arg0, %c0_i32 : i32, i32
  }
  func.func @transform_2(%arg0: i32, %arg1: memref<1xi32, #tpu.memory_space<smem>>) -> (i32, i32) {
    %c0_i32 = arith.constant 0 : i32
    %c0_i32_0 = arith.constant 0 : i32
    %c0_i32_1 = arith.constant 0 : i32
    return %c0_i32, %c0_i32_0 : i32, i32
  }
  func.func @transform_3(%arg0: i32, %arg1: memref<1xi32, #tpu.memory_space<smem>>) -> (i32, i32) {
    %c0_i32 = arith.constant 0 : i32
    %c0_i32_0 = arith.constant 0 : i32
    %c0_i32_1 = arith.constant 0 : i32
    return %c0_i32, %c0_i32_0 : i32, i32
  }
  func.func @transform_4(%arg0: i32, %arg1: memref<1xi32, #tpu.memory_space<smem>>) -> (i32, i32) {
    %c0_i32 = arith.constant 0 : i32
    %c0_i32_0 = arith.constant 0 : i32
    %c0_i32_1 = arith.constant 0 : i32
    return %c0_i32, %c0_i32_0 : i32, i32
  }
  func.func @transform_5(%arg0: i32, %arg1: memref<1xi32, #tpu.memory_space<smem>>) -> (i32, i32) {
    %c0_i32 = arith.constant 0 : i32
    %c0_i32_0 = arith.constant 0 : i32
    %c0_i32_1 = arith.constant 0 : i32
    return %c0_i32, %c0_i32_0 : i32, i32
  }
  func.func @transform_6(%arg0: i32, %arg1: memref<1xi32, #tpu.memory_space<smem>>) -> (i32, i32) {
    %c0_i32 = arith.constant 0 : i32
    %c0_i32_0 = arith.constant 0 : i32
    %c0_i32_1 = arith.constant 0 : i32
    return %c0_i32, %c0_i32_0 : i32, i32
  }
  func.func @transform_7(%arg0: i32, %arg1: memref<1xi32, #tpu.memory_space<smem>>) -> (i32, i32) {
    %c0_i32 = arith.constant 0 : i32
    %c0_i32_0 = arith.constant 0 : i32
    %c0_i32_1 = arith.constant 0 : i32
    return %c0_i32, %c0_i32_0 : i32, i32
  }
  func.func @transform_8(%arg0: i32, %arg1: memref<1xi32, #tpu.memory_space<smem>>) -> (i32, i32) {
    %c0_i32 = arith.constant 0 : i32
    %c0_i32_0 = arith.constant 0 : i32
    %c0_i32_1 = arith.constant 0 : i32
    return %c0_i32, %c0_i32_0 : i32, i32
  }
  func.func @transform_9(%arg0: i32, %arg1: memref<1xi32, #tpu.memory_space<smem>>) -> (i32, i32) {
    %c0_i32 = arith.constant 0 : i32
    %c0_i32_0 = arith.constant 0 : i32
    %c0_i32_1 = arith.constant 0 : i32
    return %c0_i32, %c0_i32_0 : i32, i32
  }
  func.func @transform_10(%arg0: i32, %arg1: memref<1xi32, #tpu.memory_space<smem>>) -> (i32, i32) {
    %c0_i32 = arith.constant 0 : i32
    %c0_i32_0 = arith.constant 0 : i32
    return %arg0, %c0_i32 : i32, i32
  }
}

</mosaic_0001>

<llo_original>
// kernel: transformer_forward.6
$region0: #{transformer_forward.6}
  #allocation0 [shape = 'u32[]', space=smem, size = 0x4, offset = 0x4, fixed_abs, tag = 'smem constant byte address 0x4 - core index']
  #allocation1 [shape = 'u32[144,128]{1,0:T(1,128)}', space=vmem, size = 0x12000, scoped, tag = 'internal scratch']
  %s0 = inlined_call_operand.hbm [shape: f32[32,128], index: 0, kind: input, shape index: {}]
  %s1 = inlined_call_operand.vmem [shape: f32[1,128], index: 1, kind: input, shape index: {}]
  %s2 = inlined_call_operand.vmem [shape: f32[1,128], index: 2, kind: input, shape index: {}]
  %s3 = inlined_call_operand.hbm [shape: bf16[128,384], index: 3, kind: input, shape index: {}]
  %s4 = inlined_call_operand.vmem [shape: f32[1,384], index: 4, kind: input, shape index: {}]
  %s5 = inlined_call_operand.vmem [shape: bf16[32,384], index: 5, kind: output, shape index: {}]
  %s6 = sld [smem:[#allocation0]]
  $region38: #{transformer_forward.6} parent=0
    _
  %s8 = ssub.s32 1, %s6
  %s9 = scalar_select 0, %s8, %s6
  $region1: #{transformer_forward.6} parent=0
    #allocation2 [shape = 'u8[16384]{0}', space=vmem, size = 0x4000, scoped, tag = 'input window, operand 0, single buffered']
    #allocation3 [shape = 's32[1]{0}', space=sflag, size = 0x4, scoped, tag = 'scoped memory for transformer_forward.6']
    #allocation4 [shape = 'u8[98304]{0}', space=vmem, size = 0x18000, scoped, tag = 'input window, operand 3, single buffered']
    #allocation5 [shape = 's32[1]{0}', space=sflag, size = 0x4, scoped, tag = 'scoped memory for transformer_forward.6']
    %10 = vsyncpa [#allocation3], 0
    %11 = vsyncpa [#allocation5], 0
    // Predicated region
    $region2: #{transformer_forward.6} parent=1 // pred_check
      _
    $region3: #{transformer_forward.6} parent=1 // pred_check_branch
      %13 = sbr.rel (0) target = $region5
    $region4: #{transformer_forward.6} parent=1 // pred_region
      %s15 = ssub.s32 512, 512
      %16 = vsyncadd [#allocation3], %s15
      %s17 = sshll.u32 [#allocation2], 4
      %s18 = int_to_ptr.vmem [resolvable:$true] %s17
      %23 = dma.hbm_to_vmem [thread:$0]  %s0, 512, %s18, [#allocation3], 128, 128, 8
    $region5: #{transformer_forward.6} parent=1 // pred_fallthru
      _
    // Predicated region
    $region6: #{transformer_forward.6} parent=1 // pred_check
      _
    $region7: #{transformer_forward.6} parent=1 // pred_check_branch
      %25 = sbr.rel (0) target = $region9
    $region8: #{transformer_forward.6} parent=1 // pred_region
      _
    $region9: #{transformer_forward.6} parent=1 // pred_fallthru
      _
    // Predicated region
    $region10: #{transformer_forward.6} parent=1 // pred_check
      _
    $region11: #{transformer_forward.6} parent=1 // pred_check_branch
      %27 = sbr.rel (0) target = $region13
    $region12: #{transformer_forward.6} parent=1 // pred_region
      _
    $region13: #{transformer_forward.6} parent=1 // pred_fallthru
      _
    // Predicated region
    $region14: #{transformer_forward.6} parent=1 // pred_check
      _
    $region15: #{transformer_forward.6} parent=1 // pred_check_branch
      %29 = sbr.rel (0) target = $region17
    $region16: #{transformer_forward.6} parent=1 // pred_region
      %s31 = ssub.s32 3072, 3072
      %32 = vsyncadd [#allocation5], %s31
      %s33 = sshll.u32 [#allocation4], 4
      %s34 = int_to_ptr.vmem [resolvable:$true] %s33
      %39 = dma.hbm_to_vmem [thread:$0]  %s3, 3072, %s34, [#allocation5], 192, 192, 12
    $region17: #{transformer_forward.6} parent=1 // pred_fallthru
      _
    // Predicated region
    $region18: #{transformer_forward.6} parent=1 // pred_check
      _
    $region19: #{transformer_forward.6} parent=1 // pred_check_branch
      %41 = sbr.rel (0) target = $region21
    $region20: #{transformer_forward.6} parent=1 // pred_region
      _
    $region21: #{transformer_forward.6} parent=1 // pred_fallthru
      _
    // Predicated region
    $region22: #{transformer_forward.6} parent=1 // pred_check
      _
    $region23: #{transformer_forward.6} parent=1 // pred_check_branch
      %43 = sbr.rel (0) target = $region25
    $region24: #{transformer_forward.6} parent=1 // pred_region
      %44 = dma.done [#allocation3], 512
    $region25: #{transformer_forward.6} parent=1 // pred_fallthru
      _
    // Predicated region
    $region26: #{transformer_forward.6} parent=1 // pred_check
      _
    $region27: #{transformer_forward.6} parent=1 // pred_check_branch
      %46 = sbr.rel (0) target = $region29
    $region28: #{transformer_forward.6} parent=1 // pred_region
      %47 = dma.done [#allocation5], 3072
    $region29: #{transformer_forward.6} parent=1 // pred_fallthru
      _
    %v49 = vld [vmem:[#allocation2] sm:$0xff]
    %v50 = vld [vmem:[#allocation2 + $0x8] sm:$0xff]
    %v51 = vld [vmem:[#allocation2 + $0x10] sm:$0xff]
    %v52 = vld [vmem:[#allocation2 + $0x18] sm:$0xff]
    %v53 = vld [vmem:[%s1] sm:$0x1]
    %v54 = vld [vmem:[%s2] sm:$0x1]
    %55 = vadd.xlane.f32.xlu0 %v49
    %v56 = vpop.xlane.xlu0 %55
    %57 = vadd.xlane.f32.xlu0 %v50
    %v58 = vpop.xlane.xlu0 %57
    %59 = vadd.xlane.f32.xlu0 %v51
    %v60 = vpop.xlane.xlu0 %59
    %61 = vadd.xlane.f32.xlu0 %v52
    %v62 = vpop.xlane.xlu0 %61
    %v63 = vrcp.pop 128.0
    %v64 = vmul.f32 %v56, %v63
    %v65 = vmul.f32 %v58, %v63
    %v66 = vmul.f32 %v60, %v63
    %v67 = vmul.f32 %v62, %v63
    %v68 = vsub.f32 %v49, %v64
    %v69 = vsub.f32 %v50, %v65
    %v70 = vsub.f32 %v51, %v66
    %v71 = vsub.f32 %v52, %v67
    %v72 = vmul.f32 %v68, %v68
    %v73 = vmul.f32 %v69, %v69
    %v74 = vmul.f32 %v70, %v70
    %v75 = vmul.f32 %v71, %v71
    %76 = vadd.xlane.f32.xlu0 %v72
    %v77 = vpop.xlane.xlu0 %76
    %78 = vadd.xlane.f32.xlu0 %v73
    %v79 = vpop.xlane.xlu0 %78
    %80 = vadd.xlane.f32.xlu0 %v74
    %v81 = vpop.xlane.xlu0 %80
    %82 = vadd.xlane.f32.xlu0 %v75
    %v83 = vpop.xlane.xlu0 %82
    %v84 = vmul.f32 %v77, %v63
    %v85 = vmul.f32 %v79, %v63
    %v86 = vmul.f32 %v81, %v63
    %v87 = vmul.f32 %v83, %v63
    %v88 = vadd.f32 %v84, 1e-05
    %v89 = vadd.f32 %v85, 1e-05
    %v90 = vadd.f32 %v86, 1e-05
    %v91 = vadd.f32 %v87, 1e-05
    %v92 = vrsqrt.pop %v88
    %v93 = vrsqrt.pop %v89
    %v94 = vrsqrt.pop %v90
    %v95 = vrsqrt.pop %v91
    %v96 = vmul.f32 %v68, %v92
    %v97 = vmul.f32 %v69, %v93
    %v98 = vmul.f32 %v70, %v94
    %v99 = vmul.f32 %v71, %v95
    %v101 = vlaneseq
    %v102 = vshrl.u32 %v101, 7
    %v103 = vsub.s32 0, %v102
    %v104 = vrot.slane %v53, %v103
    %v106 = vmul.f32 %v96, %v104
    %v107 = vmul.f32 %v97, %v104
    %v108 = vmul.f32 %v98, %v104
    %v109 = vmul.f32 %v99, %v104
    %v111 = vlaneseq
    %v112 = vshrl.u32 %v111, 7
    %v113 = vsub.s32 0, %v112
    %v114 = vrot.slane %v54, %v113
    %v116 = vadd.f32 %v106, %v114
    %v117 = vadd.f32 %v107, %v114
    %v118 = vadd.f32 %v108, %v114
    %v119 = vadd.f32 %v109, %v114
    %v120 = vpack.c.bf16 %v117, %v116
    %v121 = vpack.c.bf16 %v119, %v118
    %v122 = vld [vmem:[#allocation4] sm:$0xff]
    %v123 = vld [vmem:[#allocation4 + $0x8] sm:$0xf]
    %v124 = vld [vmem:[#allocation4 + $0xc] sm:$0xff]
    %v125 = vld [vmem:[#allocation4 + $0x14] sm:$0xf]
    %v126 = vld [vmem:[#allocation4 + $0x18] sm:$0xff]
    %v127 = vld [vmem:[#allocation4 + $0x20] sm:$0xf]
    %v128 = vld [vmem:[#allocation4 + $0x24] sm:$0xff]
    %v129 = vld [vmem:[#allocation4 + $0x2c] sm:$0xf]
    %v130 = vld [vmem:[#allocation4 + $0x30] sm:$0xff]
    %v131 = vld [vmem:[#allocation4 + $0x38] sm:$0xf]
    %v132 = vld [vmem:[#allocation4 + $0x3c] sm:$0xff]
    %v133 = vld [vmem:[#allocation4 + $0x44] sm:$0xf]
    %v134 = vld [vmem:[#allocation4 + $0x48] sm:$0xff]
    %v135 = vld [vmem:[#allocation4 + $0x50] sm:$0xf]
    %v136 = vld [vmem:[#allocation4 + $0x54] sm:$0xff]
    %v137 = vld [vmem:[#allocation4 + $0x5c] sm:$0xf]
    %v138 = vld [vmem:[#allocation4 + $0x60] sm:$0xff]
    %v139 = vld [vmem:[#allocation4 + $0x68] sm:$0xf]
    %v140 = vld [vmem:[#allocation4 + $0x6c] sm:$0xff]
    %v141 = vld [vmem:[#allocation4 + $0x74] sm:$0xf]
    %v142 = vld [vmem:[#allocation4 + $0x78] sm:$0xff]
    %v143 = vld [vmem:[#allocation4 + $0x80] sm:$0xf]
    %v144 = vld [vmem:[#allocation4 + $0x84] sm:$0xff]
    %v145 = vld [vmem:[#allocation4 + $0x8c] sm:$0xf]
    %v146 = vld [vmem:[#allocation4 + $0x90] sm:$0xff]
    %v147 = vld [vmem:[#allocation4 + $0x98] sm:$0xf]
    %v148 = vld [vmem:[#allocation4 + $0x9c] sm:$0xff]
    %v149 = vld [vmem:[#allocation4 + $0xa4] sm:$0xf]
    %v150 = vld [vmem:[#allocation4 + $0xa8] sm:$0xff]
    %v151 = vld [vmem:[#allocation4 + $0xb0] sm:$0xf]
    %v152 = vld [vmem:[#allocation4 + $0xb4] sm:$0xff]
    %v153 = vld [vmem:[#allocation4 + $0xbc] sm:$0xf]
    %v154 = vld [vmem:[%s4] sm:$0x7]
    %v156 = vlaneseq
    %v157 = vshrl.u32 %v156, 7
    %v158 = vsub.s32 0, %v157
    %v159 = vrot.slane %v154, %v158
    %v160 = vlaneseq
    %v161 = vshrl.u32 %v160, 7
    %v162 = vsub.s32 1, %v161
    %v163 = vrot.slane %v154, %v162
    %v164 = vlaneseq
    %v165 = vshrl.u32 %v164, 7
    %v166 = vsub.s32 2, %v165
    %v167 = vrot.slane %v154, %v166
    %v203 = vunpack.c.l.b16 %v122
    %v204 = vunpack.c.h.b16 %v122
    %v205 = vunpack.c.l.b16 %v123
    %v206 = vunpack.c.l.b16 %v124
    %v207 = vunpack.c.h.b16 %v124
    %v208 = vunpack.c.l.b16 %v125
    %v209 = vunpack.c.l.b16 %v126
    %v210 = vunpack.c.h.b16 %v126
    %v211 = vunpack.c.l.b16 %v127
    %v212 = vunpack.c.l.b16 %v128
    %v213 = vunpack.c.h.b16 %v128
    %v214 = vunpack.c.l.b16 %v129
    %v215 = vunpack.c.l.b16 %v130
    %v216 = vunpack.c.h.b16 %v130
    %v217 = vunpack.c.l.b16 %v131
    %v218 = vunpack.c.l.b16 %v132
    %v219 = vunpack.c.h.b16 %v132
    %v220 = vunpack.c.l.b16 %v133
    %v221 = vunpack.c.l.b16 %v134
    %v222 = vunpack.c.h.b16 %v134
    %v223 = vunpack.c.l.b16 %v135
    %v224 = vunpack.c.l.b16 %v136
    %v225 = vunpack.c.h.b16 %v136
    %v226 = vunpack.c.l.b16 %v137
    %v227 = vunpack.c.l.b16 %v138
    %v228 = vunpack.c.h.b16 %v138
    %v229 = vunpack.c.l.b16 %v139
    %v230 = vunpack.c.l.b16 %v140
    %v231 = vunpack.c.h.b16 %v140
    %v232 = vunpack.c.l.b16 %v141
    %v233 = vunpack.c.l.b16 %v142
    %v234 = vunpack.c.h.b16 %v142
    %v235 = vunpack.c.l.b16 %v143
    %v236 = vunpack.c.l.b16 %v144
    %v237 = vunpack.c.h.b16 %v144
    %v238 = vunpack.c.l.b16 %v145
    %v239 = vunpack.c.l.b16 %v146
    %v240 = vunpack.c.h.b16 %v146
    %v241 = vunpack.c.l.b16 %v147
    %v242 = vunpack.c.l.b16 %v148
    %v243 = vunpack.c.h.b16 %v148
    %v244 = vunpack.c.l.b16 %v149
    %v245 = vunpack.c.l.b16 %v150
    %v246 = vunpack.c.h.b16 %v150
    %v247 = vunpack.c.l.b16 %v151
    %v248 = vunpack.c.l.b16 %v152
    %v249 = vunpack.c.h.b16 %v152
    %v250 = vunpack.c.l.b16 %v153
    %v251 = vpack.c.b16 %v206, %v203
    %v252 = vpack.c.b16 %v207, %v204
    %v253 = vpack.c.b16 %v208, %v205
    %v254 = vpack.c.b16 %v212, %v209
    %v255 = vpack.c.b16 %v213, %v210
    %v256 = vpack.c.b16 %v214, %v211
    %v257 = vpack.c.b16 %v218, %v215
    %v258 = vpack.c.b16 %v219, %v216
    %v259 = vpack.c.b16 %v220, %v217
    %v260 = vpack.c.b16 %v224, %v221
    %v261 = vpack.c.b16 %v225, %v222
    %v262 = vpack.c.b16 %v226, %v223
    %v263 = vpack.c.b16 %v230, %v227
    %v264 = vpack.c.b16 %v231, %v228
    %v265 = vpack.c.b16 %v232, %v229
    %v266 = vpack.c.b16 %v236, %v233
    %v267 = vpack.c.b16 %v237, %v234
    %v268 = vpack.c.b16 %v238, %v235
    %v269 = vpack.c.b16 %v242, %v239
    %v270 = vpack.c.b16 %v243, %v240
    %v271 = vpack.c.b16 %v244, %v241
    %v272 = vpack.c.b16 %v248, %v245
    %v273 = vpack.c.b16 %v249, %v246
    %v274 = vpack.c.b16 %v250, %v247
    %299 = vmatprep.subr.bf16.mxu0 %v252
    %300 = vmatpush1.bf16.msra.mxu0 %v251
    %301 = vmatprep.subr.bf16.mxu0 %v255
    %302 = vmatpush1.bf16.msra.mxu0 %v254
    %303 = vmatprep.subr.bf16.mxu0 %v258
    %304 = vmatpush1.bf16.msra.mxu0 %v257
    %305 = vmatprep.subr.bf16.mxu0 %v261
    %306 = vmatpush1.bf16.msra.mxu0 %v260
    %307 = vmatprep.subr.bf16.mxu0 %v264
    %308 = vmatpush1.bf16.msra.mxu0 %v263
    %309 = vmatprep.subr.bf16.mxu0 %v267
    %310 = vmatpush1.bf16.msra.mxu0 %v266
    %311 = vmatprep.subr.bf16.mxu0 %v270
    %312 = vmatpush1.bf16.msra.mxu0 %v269
    %313 = vmatprep.subr.bf16.mxu0 %v273
    %314 = vmatpush1.bf16.msra.mxu0 %v272
    %315 = vmatprep.subr.bf16.mxu0 0
    %316 = vmatpush1.bf16.msra.mxu0 0
    %317 = vmatprep.subr.bf16.mxu0 0
    %318 = vmatpush1.bf16.msra.mxu0 0
    %319 = vmatprep.subr.bf16.mxu0 0
    %320 = vmatpush1.bf16.msra.mxu0 0
    %321 = vmatprep.subr.bf16.mxu0 0
    %322 = vmatpush1.bf16.msra.mxu0 0
    %323 = vmatprep.subr.bf16.mxu0 0
    %324 = vmatpush1.bf16.msra.mxu0 0
    %325 = vmatprep.subr.bf16.mxu0 0
    %326 = vmatpush1.bf16.msra.mxu0 0
    %327 = vmatprep.subr.bf16.mxu0 0
    %328 = vmatpush1.bf16.msra.mxu0 0
    %329 = vmatprep.subr.bf16.mxu0 0
    %330 = vmatpush1.bf16.msra.mxu0 0
    %331 = vmatprep.mubr.bf16.mxu0 0
    %332 = vmatmul.mubr.bf16.gmra.mrb[0].mxu0 %v120
    %v333 = vpop.f32.mrb[0].mxu0
    %v334 = vadd.f32 %v159, %v333
    %v335 = vpop.f32.mrb[0].mxu0
    %v336 = vadd.f32 %v163, %v335
    %v337 = vpop.f32.mrb[0].mxu0
    %v338 = vadd.f32 %v159, %v337
    %v339 = vpop.f32.mrb[0].mxu0
    %v340 = vadd.f32 %v163, %v339
    %341 = vmatprep.mubr.bf16.mxu0 0
    %342 = vmatmul.mubr.bf16.gmra.mrb[0].mxu0 %v121
    %v343 = vpop.f32.mrb[0].mxu0
    %v344 = vadd.f32 %v159, %v343
    %v345 = vpop.f32.mrb[0].mxu0
    %v346 = vadd.f32 %v163, %v345
    %v347 = vpop.f32.mrb[0].mxu0
    %v348 = vadd.f32 %v159, %v347
    %v349 = vpop.f32.mrb[0].mxu0
    %v350 = vadd.f32 %v163, %v349
    %351 = vdwg.mxu0
    %352 = vmatprep.subr.bf16.mxu0 0
    %353 = vmatpush1.bf16.msra.mxu0 %v253
    %354 = vmatprep.subr.bf16.mxu0 0
    %355 = vmatpush1.bf16.msra.mxu0 %v256
    %356 = vmatprep.subr.bf16.mxu0 0
    %357 = vmatpush1.bf16.msra.mxu0 %v259
    %358 = vmatprep.subr.bf16.mxu0 0
    %359 = vmatpush1.bf16.msra.mxu0 %v262
    %360 = vmatprep.subr.bf16.mxu0 0
    %361 = vmatpush1.bf16.msra.mxu0 %v265
    %362 = vmatprep.subr.bf16.mxu0 0
    %363 = vmatpush1.bf16.msra.mxu0 %v268
    %364 = vmatprep.subr.bf16.mxu0 0
    %365 = vmatpush1.bf16.msra.mxu0 %v271
    %366 = vmatprep.subr.bf16.mxu0 0
    %367 = vmatpush1.bf16.msra.mxu0 %v274
    %368 = vmatprep.subr.bf16.mxu0 0
    %369 = vmatpush1.bf16.msra.mxu0 0
    %370 = vmatprep.subr.bf16.mxu0 0
    %371 = vmatpush1.bf16.msra.mxu0 0
    %372 = vmatprep.subr.bf16.mxu0 0
    %373 = vmatpush1.bf16.msra.mxu0 0
    %374 = vmatprep.subr.bf16.mxu0 0
    %375 = vmatpush1.bf16.msra.mxu0 0
    %376 = vmatprep.subr.bf16.mxu0 0
    %377 = vmatpush1.bf16.msra.mxu0 0
    %378 = vmatprep.subr.bf16.mxu0 0
    %379 = vmatpush1.bf16.msra.mxu0 0
    %380 = vmatprep.subr.bf16.mxu0 0
    %381 = vmatpush1.bf16.msra.mxu0 0
    %382 = vmatprep.subr.bf16.mxu0 0
    %383 = vmatpush1.bf16.msra.mxu0 0
    %384 = vmatprep.mubr.bf16.mxu0 0
    %385 = vmatmul.mubr.bf16.gmra.mrb[0].mxu0 %v120
    %v386 = vpop.f32.mrb[0].mxu0
    %v387 = vadd.f32 %v167, %v386
    %v388 = vpop.f32.mrb[0].mxu0
    %v389 = vpop.f32.mrb[0].mxu0
    %v390 = vadd.f32 %v167, %v389
    %v391 = vpop.f32.mrb[0].mxu0
    %392 = vmatprep.mubr.bf16.mxu0 0
    %393 = vmatmul.mubr.bf16.gmra.mrb[0].mxu0 %v121
    %v394 = vpop.f32.mrb[0].mxu0
    %v395 = vadd.f32 %v167, %v394
    %v396 = vpop.f32.mrb[0].mxu0
    %v397 = vpop.f32.mrb[0].mxu0
    %v398 = vadd.f32 %v167, %v397
    %v399 = vpop.f32.mrb[0].mxu0
    %400 = vdwg.mxu0
    %v401 = vpack.c.bf16 %v338, %v334
    %v402 = vpack.c.bf16 %v340, %v336
    %v403 = vpack.c.bf16 %v390, %v387
    %v404 = vpack.c.bf16 %v348, %v344
    %v405 = vpack.c.bf16 %v350, %v346
    %v406 = vpack.c.bf16 %v398, %v395
    %v413 = vunpack.c.l.b16 %v401
    %v414 = vunpack.c.l.b16 %v402
    %v415 = vunpack.c.l.b16 %v403
    %v416 = vunpack.c.h.b16 %v401
    %v417 = vunpack.c.h.b16 %v402
    %v418 = vunpack.c.h.b16 %v403
    %v419 = vunpack.c.l.b16 %v404
    %v420 = vunpack.c.l.b16 %v405
    %v421 = vunpack.c.l.b16 %v406
    %v422 = vunpack.c.h.b16 %v404
    %v423 = vunpack.c.h.b16 %v405
    %v424 = vunpack.c.h.b16 %v406
    %v425 = vpack.c.b16 %v414, %v413
    %v426 = vpack.c.b16 %v415, %v415
    %v427 = vpack.c.b16 %v417, %v416
    %v428 = vpack.c.b16 %v418, %v418
    %v429 = vpack.c.b16 %v420, %v419
    %v430 = vpack.c.b16 %v421, %v421
    %v431 = vpack.c.b16 %v423, %v422
    %v432 = vpack.c.b16 %v424, %v424
    %441 = vst [vmem:[%s5] sm:$0xff] %v425
    %442 = vst [vmem:[%s5 + $0x8] sm:$0xf] %v426
    %443 = vst [vmem:[%s5 + $0xc] sm:$0xff] %v427
    %444 = vst [vmem:[%s5 + $0x14] sm:$0xf] %v428
    %445 = vst [vmem:[%s5 + $0x18] sm:$0xff] %v429
    %446 = vst [vmem:[%s5 + $0x20] sm:$0xf] %v430
    %447 = vst [vmem:[%s5 + $0x24] sm:$0xff] %v431
    %448 = vst [vmem:[%s5 + $0x2c] sm:$0xf] %v432
    // Predicated region
    $region30: #{transformer_forward.6} parent=1 // pred_check
      _
    $region31: #{transformer_forward.6} parent=1 // pred_check_branch
      %450 = sbr.rel (0) target = $region33
    $region32: #{transformer_forward.6} parent=1 // pred_region
      _
    $region33: #{transformer_forward.6} parent=1 // pred_fallthru
      _
    // Predicated region
    $region34: #{transformer_forward.6} parent=1 // pred_check
      _
    $region35: #{transformer_forward.6} parent=1 // pred_check_branch
      %452 = sbr.rel (0) target = $region37
    $region36: #{transformer_forward.6} parent=1 // pred_region
      _
    $region37: #{transformer_forward.6} parent=1 // pred_fallthru
      _
    %453 = vsyncpa [#allocation3], 1
    %454 = vsyncpa [#allocation5], 1

// kernel: transformer_forward.9
$region0: #{transformer_forward.9}
  #allocation0 [shape = 'u32[]', space=smem, size = 0x4, offset = 0x4, fixed_abs, tag = 'smem constant byte address 0x4 - core index']
  #allocation1 [shape = 'u32[144,128]{1,0:T(1,128)}', space=vmem, size = 0x12000, scoped, tag = 'internal scratch']
  %s0 = inlined_call_operand.vmem [shape: f32[32,128], index: 0, kind: input, shape index: {}]
  %s1 = inlined_call_operand.vmem [shape: f32[1,128], index: 1, kind: input, shape index: {}]
  %s2 = inlined_call_operand.vmem [shape: f32[1,128], index: 2, kind: input, shape index: {}]
  %s3 = inlined_call_operand.vmem [shape: bf16[128,384], index: 3, kind: input, shape index: {}]
  %s4 = inlined_call_operand.vmem [shape: f32[1,384], index: 4, kind: input, shape index: {}]
  %s5 = inlined_call_operand.vmem [shape: bf16[32,384], index: 5, kind: output, shape index: {}]
  %s6 = sld [smem:[#allocation0]]
  $region30: #{transformer_forward.9} parent=0
    _
  %s8 = ssub.s32 1, %s6
  %s9 = scalar_select 0, %s8, %s6
  // Predicated region
  $region2: #{transformer_forward.9} parent=0 // pred_check
    _
  $region3: #{transformer_forward.9} parent=0 // pred_check_branch
    %11 = sbr.rel (0) target = $region5
  $region4: #{transformer_forward.9} parent=0 // pred_region
    _
  $region5: #{transformer_forward.9} parent=0 // pred_fallthru
    _
  // Predicated region
  $region6: #{transformer_forward.9} parent=0 // pred_check
    _
  $region7: #{transformer_forward.9} parent=0 // pred_check_branch
    %13 = sbr.rel (0) target = $region9
  $region8: #{transformer_forward.9} parent=0 // pred_region
    _
  $region9: #{transformer_forward.9} parent=0 // pred_fallthru
    _
  // Predicated region
  $region10: #{transformer_forward.9} parent=0 // pred_check
    _
  $region11: #{transformer_forward.9} parent=0 // pred_check_branch
    %15 = sbr.rel (0) target = $region13
  $region12: #{transformer_forward.9} parent=0 // pred_region
    _
  $region13: #{transformer_forward.9} parent=0 // pred_fallthru
    _
  // Predicated region
  $region14: #{transformer_forward.9} parent=0 // pred_check
    _
  $region15: #{transformer_forward.9} parent=0 // pred_check_branch
    %17 = sbr.rel (0) target = $region17
  $region16: #{transformer_forward.9} parent=0 // pred_region
    _
  $region17: #{transformer_forward.9} parent=0 // pred_fallthru
    _
  // Predicated region
  $region18: #{transformer_forward.9} parent=0 // pred_check
    _
  $region19: #{transformer_forward.9} parent=0 // pred_check_branch
    %19 = sbr.rel (0) target = $region21
  $region20: #{transformer_forward.9} parent=0 // pred_region
    _
  $region21: #{transformer_forward.9} parent=0 // pred_fallthru
    _
  %v21 = vld [vmem:[%s0] sm:$0xff]
  %v22 = vld [vmem:[%s0 + $0x8] sm:$0xff]
  %v23 = vld [vmem:[%s0 + $0x10] sm:$0xff]
  %v24 = vld [vmem:[%s0 + $0x18] sm:$0xff]
  %v25 = vld [vmem:[%s1] sm:$0x1]
  %v26 = vld [vmem:[%s2] sm:$0x1]
  %27 = vadd.xlane.f32.xlu0 %v21
  %v28 = vpop.xlane.xlu0 %27
  %29 = vadd.xlane.f32.xlu0 %v22
  %v30 = vpop.xlane.xlu0 %29
  %31 = vadd.xlane.f32.xlu0 %v23
  %v32 = vpop.xlane.xlu0 %31
  %33 = vadd.xlane.f32.xlu0 %v24
  %v34 = vpop.xlane.xlu0 %33
  %v35 = vrcp.pop 128.0
  %v36 = vmul.f32 %v28, %v35
  %v37 = vmul.f32 %v30, %v35
  %v38 = vmul.f32 %v32, %v35
  %v39 = vmul.f32 %v34, %v35
  %v40 = vsub.f32 %v21, %v36
  %v41 = vsub.f32 %v22, %v37
  %v42 = vsub.f32 %v23, %v38
  %v43 = vsub.f32 %v24, %v39
  %v44 = vmul.f32 %v40, %v40
  %v45 = vmul.f32 %v41, %v41
  %v46 = vmul.f32 %v42, %v42
  %v47 = vmul.f32 %v43, %v43
  %48 = vadd.xlane.f32.xlu0 %v44
  %v49 = vpop.xlane.xlu0 %48
  %50 = vadd.xlane.f32.xlu0 %v45
  %v51 = vpop.xlane.xlu0 %50
  %52 = vadd.xlane.f32.xlu0 %v46
  %v53 = vpop.xlane.xlu0 %52
  %54 = vadd.xlane.f32.xlu0 %v47
  %v55 = vpop.xlane.xlu0 %54
  %v56 = vmul.f32 %v49, %v35
  %v57 = vmul.f32 %v51, %v35
  %v58 = vmul.f32 %v53, %v35
  %v59 = vmul.f32 %v55, %v35
  %v60 = vadd.f32 %v56, 1e-05
  %v61 = vadd.f32 %v57, 1e-05
  %v62 = vadd.f32 %v58, 1e-05
  %v63 = vadd.f32 %v59, 1e-05
  %v64 = vrsqrt.pop %v60
  %v65 = vrsqrt.pop %v61
  %v66 = vrsqrt.pop %v62
  %v67 = vrsqrt.pop %v63
  %v68 = vmul.f32 %v40, %v64
  %v69 = vmul.f32 %v41, %v65
  %v70 = vmul.f32 %v42, %v66
  %v71 = vmul.f32 %v43, %v67
  %v73 = vlaneseq
  %v74 = vshrl.u32 %v73, 7
  %v75 = vsub.s32 0, %v74
  %v76 = vrot.slane %v25, %v75
  %v78 = vmul.f32 %v68, %v76
  %v79 = vmul.f32 %v69, %v76
  %v80 = vmul.f32 %v70, %v76
  %v81 = vmul.f32 %v71, %v76
  %v83 = vlaneseq
  %v84 = vshrl.u32 %v83, 7
  %v85 = vsub.s32 0, %v84
  %v86 = vrot.slane %v26, %v85
  %v88 = vadd.f32 %v78, %v86
  %v89 = vadd.f32 %v79, %v86
  %v90 = vadd.f32 %v80, %v86
  %v91 = vadd.f32 %v81, %v86
  %v92 = vpack.c.bf16 %v89, %v88
  %v93 = vpack.c.bf16 %v91, %v90
  %v94 = vld [vmem:[%s3] sm:$0xff]
  %v95 = vld [vmem:[%s3 + $0x8] sm:$0xf]
  %v96 = vld [vmem:[%s3 + $0xc] sm:$0xff]
  %v97 = vld [vmem:[%s3 + $0x14] sm:$0xf]
  %v98 = vld [vmem:[%s3 + $0x18] sm:$0xff]
  %v99 = vld [vmem:[%s3 + $0x20] sm:$0xf]
  %v100 = vld [vmem:[%s3 + $0x24] sm:$0xff]
  %v101 = vld [vmem:[%s3 + $0x2c] sm:$0xf]
  %v102 = vld [vmem:[%s3 + $0x30] sm:$0xff]
  %v103 = vld [vmem:[%s3 + $0x38] sm:$0xf]
  %v104 = vld [vmem:[%s3 + $0x3c] sm:$0xff]
  %v105 = vld [vmem:[%s3 + $0x44] sm:$0xf]
  %v106 = vld [vmem:[%s3 + $0x48] sm:$0xff]
  %v107 = vld [vmem:[%s3 + $0x50] sm:$0xf]
  %v108 = vld [vmem:[%s3 + $0x54] sm:$0xff]
  %v109 = vld [vmem:[%s3 + $0x5c] sm:$0xf]
  %v110 = vld [vmem:[%s3 + $0x60] sm:$0xff]
  %v111 = vld [vmem:[%s3 + $0x68] sm:$0xf]
  %v112 = vld [vmem:[%s3 + $0x6c] sm:$0xff]
  %v113 = vld [vmem:[%s3 + $0x74] sm:$0xf]
  %v114 = vld [vmem:[%s3 + $0x78] sm:$0xff]
  %v115 = vld [vmem:[%s3 + $0x80] sm:$0xf]
  %v116 = vld [vmem:[%s3 + $0x84] sm:$0xff]
  %v117 = vld [vmem:[%s3 + $0x8c] sm:$0xf]
  %v118 = vld [vmem:[%s3 + $0x90] sm:$0xff]
  %v119 = vld [vmem:[%s3 + $0x98] sm:$0xf]
  %v120 = vld [vmem:[%s3 + $0x9c] sm:$0xff]
  %v121 = vld [vmem:[%s3 + $0xa4] sm:$0xf]
  %v122 = vld [vmem:[%s3 + $0xa8] sm:$0xff]
  %v123 = vld [vmem:[%s3 + $0xb0] sm:$0xf]
  %v124 = vld [vmem:[%s3 + $0xb4] sm:$0xff]
  %v125 = vld [vmem:[%s3 + $0xbc] sm:$0xf]
  %v126 = vld [vmem:[%s4] sm:$0x7]
  %v128 = vlaneseq
  %v129 = vshrl.u32 %v128, 7
  %v130 = vsub.s32 0, %v129
  %v131 = vrot.slane %v126, %v130
  %v132 = vlaneseq
  %v133 = vshrl.u32 %v132, 7
  %v134 = vsub.s32 1, %v133
  %v135 = vrot.slane %v126, %v134
  %v136 = vlaneseq
  %v137 = vshrl.u32 %v136, 7
  %v138 = vsub.s32 2, %v137
  %v139 = vrot.slane %v126, %v138
  %v175 = vunpack.c.l.b16 %v94
  %v176 = vunpack.c.h.b16 %v94
  %v177 = vunpack.c.l.b16 %v95
  %v178 = vunpack.c.l.b16 %v96
  %v179 = vunpack.c.h.b16 %v96
  %v180 = vunpack.c.l.b16 %v97
  %v181 = vunpack.c.l.b16 %v98
  %v182 = vunpack.c.h.b16 %v98
  %v183 = vunpack.c.l.b16 %v99
  %v184 = vunpack.c.l.b16 %v100
  %v185 = vunpack.c.h.b16 %v100
  %v186 = vunpack.c.l.b16 %v101
  %v187 = vunpack.c.l.b16 %v102
  %v188 = vunpack.c.h.b16 %v102
  %v189 = vunpack.c.l.b16 %v103
  %v190 = vunpack.c.l.b16 %v104
  %v191 = vunpack.c.h.b16 %v104
  %v192 = vunpack.c.l.b16 %v105
  %v193 = vunpack.c.l.b16 %v106
  %v194 = vunpack.c.h.b16 %v106
  %v195 = vunpack.c.l.b16 %v107
  %v196 = vunpack.c.l.b16 %v108
  %v197 = vunpack.c.h.b16 %v108
  %v198 = vunpack.c.l.b16 %v109
  %v199 = vunpack.c.l.b16 %v110
  %v200 = vunpack.c.h.b16 %v110
  %v201 = vunpack.c.l.b16 %v111
  %v202 = vunpack.c.l.b16 %v112
  %v203 = vunpack.c.h.b16 %v112
  %v204 = vunpack.c.l.b16 %v113
  %v205 = vunpack.c.l.b16 %v114
  %v206 = vunpack.c.h.b16 %v114
  %v207 = vunpack.c.l.b16 %v115
  %v208 = vunpack.c.l.b16 %v116
  %v209 = vunpack.c.h.b16 %v116
  %v210 = vunpack.c.l.b16 %v117
  %v211 = vunpack.c.l.b16 %v118
  %v212 = vunpack.c.h.b16 %v118
  %v213 = vunpack.c.l.b16 %v119
  %v214 = vunpack.c.l.b16 %v120
  %v215 = vunpack.c.h.b16 %v120
  %v216 = vunpack.c.l.b16 %v121
  %v217 = vunpack.c.l.b16 %v122
  %v218 = vunpack.c.h.b16 %v122
  %v219 = vunpack.c.l.b16 %v123
  %v220 = vunpack.c.l.b16 %v124
  %v221 = vunpack.c.h.b16 %v124
  %v222 = vunpack.c.l.b16 %v125
  %v223 = vpack.c.b16 %v178, %v175
  %v224 = vpack.c.b16 %v179, %v176
  %v225 = vpack.c.b16 %v180, %v177
  %v226 = vpack.c.b16 %v184, %v181
  %v227 = vpack.c.b16 %v185, %v182
  %v228 = vpack.c.b16 %v186, %v183
  %v229 = vpack.c.b16 %v190, %v187
  %v230 = vpack.c.b16 %v191, %v188
  %v231 = vpack.c.b16 %v192, %v189
  %v232 = vpack.c.b16 %v196, %v193
  %v233 = vpack.c.b16 %v197, %v194
  %v234 = vpack.c.b16 %v198, %v195
  %v235 = vpack.c.b16 %v202, %v199
  %v236 = vpack.c.b16 %v203, %v200
  %v237 = vpack.c.b16 %v204, %v201
  %v238 = vpack.c.b16 %v208, %v205
  %v239 = vpack.c.b16 %v209, %v206
  %v240 = vpack.c.b16 %v210, %v207
  %v241 = vpack.c.b16 %v214, %v211
  %v242 = vpack.c.b16 %v215, %v212
  %v243 = vpack.c.b16 %v216, %v213
  %v244 = vpack.c.b16 %v220, %v217
  %v245 = vpack.c.b16 %v221, %v218
  %v246 = vpack.c.b16 %v222, %v219
  %271 = vmatprep.subr.bf16.mxu0 %v224
  %272 = vmatpush1.bf16.msra.mxu0 %v223
  %273 = vmatprep.subr.bf16.mxu0 %v227
  %274 = vmatpush1.bf16.msra.mxu0 %v226
  %275 = vmatprep.subr.bf16.mxu0 %v230
  %276 = vmatpush1.bf16.msra.mxu0 %v229
  %277 = vmatprep.subr.bf16.mxu0 %v233
  %278 = vmatpush1.bf16.msra.mxu0 %v232
  %279 = vmatprep.subr.bf16.mxu0 %v236
  %280 = vmatpush1.bf16.msra.mxu0 %v235
  %281 = vmatprep.subr.bf16.mxu0 %v239
  %282 = vmatpush1.bf16.msra.mxu0 %v238
  %283 = vmatprep.subr.bf16.mxu0 %v242
  %284 = vmatpush1.bf16.msra.mxu0 %v241
  %285 = vmatprep.subr.bf16.mxu0 %v245
  %286 = vmatpush1.bf16.msra.mxu0 %v244
  %287 = vmatprep.subr.bf16.mxu0 0
  %288 = vmatpush1.bf16.msra.mxu0 0
  %289 = vmatprep.subr.bf16.mxu0 0
  %290 = vmatpush1.bf16.msra.mxu0 0
  %291 = vmatprep.subr.bf16.mxu0 0
  %292 = vmatpush1.bf16.msra.mxu0 0
  %293 = vmatprep.subr.bf16.mxu0 0
  %294 = vmatpush1.bf16.msra.mxu0 0
  %295 = vmatprep.subr.bf16.mxu0 0
  %296 = vmatpush1.bf16.msra.mxu0 0
  %297 = vmatprep.subr.bf16.mxu0 0
  %298 = vmatpush1.bf16.msra.mxu0 0
  %299 = vmatprep.subr.bf16.mxu0 0
  %300 = vmatpush1.bf16.msra.mxu0 0
  %301 = vmatprep.subr.bf16.mxu0 0
  %302 = vmatpush1.bf16.msra.mxu0 0
  %303 = vmatprep.mubr.bf16.mxu0 0
  %304 = vmatmul.mubr.bf16.gmra.mrb[0].mxu0 %v92
  %v305 = vpop.f32.mrb[0].mxu0
  %v306 = vadd.f32 %v131, %v305
  %v307 = vpop.f32.mrb[0].mxu0
  %v308 = vadd.f32 %v135, %v307
  %v309 = vpop.f32.mrb[0].mxu0
  %v310 = vadd.f32 %v131, %v309
  %v311 = vpop.f32.mrb[0].mxu0
  %v312 = vadd.f32 %v135, %v311
  %313 = vmatprep.mubr.bf16.mxu0 0
  %314 = vmatmul.mubr.bf16.gmra.mrb[0].mxu0 %v93
  %v315 = vpop.f32.mrb[0].mxu0
  %v316 = vadd.f32 %v131, %v315
  %v317 = vpop.f32.mrb[0].mxu0
  %v318 = vadd.f32 %v135, %v317
  %v319 = vpop.f32.mrb[0].mxu0
  %v320 = vadd.f32 %v131, %v319
  %v321 = vpop.f32.mrb[0].mxu0
  %v322 = vadd.f32 %v135, %v321
  %323 = vdwg.mxu0
  %324 = vmatprep.subr.bf16.mxu0 0
  %325 = vmatpush1.bf16.msra.mxu0 %v225
  %326 = vmatprep.subr.bf16.mxu0 0
  %327 = vmatpush1.bf16.msra.mxu0 %v228
  %328 = vmatprep.subr.bf16.mxu0 0
  %329 = vmatpush1.bf16.msra.mxu0 %v231
  %330 = vmatprep.subr.bf16.mxu0 0
  %331 = vmatpush1.bf16.msra.mxu0 %v234
  %332 = vmatprep.subr.bf16.mxu0 0
  %333 = vmatpush1.bf16.msra.mxu0 %v237
  %334 = vmatprep.subr.bf16.mxu0 0
  %335 = vmatpush1.bf16.msra.mxu0 %v240
  %336 = vmatprep.subr.bf16.mxu0 0
  %337 = vmatpush1.bf16.msra.mxu0 %v243
  %338 = vmatprep.subr.bf16.mxu0 0
  %339 = vmatpush1.bf16.msra.mxu0 %v246
  %340 = vmatprep.subr.bf16.mxu0 0
  %341 = vmatpush1.bf16.msra.mxu0 0
  %342 = vmatprep.subr.bf16.mxu0 0
  %343 = vmatpush1.bf16.msra.mxu0 0
  %344 = vmatprep.subr.bf16.mxu0 0
  %345 = vmatpush1.bf16.msra.mxu0 0
  %346 = vmatprep.subr.bf16.mxu0 0
  %347 = vmatpush1.bf16.msra.mxu0 0
  %348 = vmatprep.subr.bf16.mxu0 0
  %349 = vmatpush1.bf16.msra.mxu0 0
  %350 = vmatprep.subr.bf16.mxu0 0
  %351 = vmatpush1.bf16.msra.mxu0 0
  %352 = vmatprep.subr.bf16.mxu0 0
  %353 = vmatpush1.bf16.msra.mxu0 0
  %354 = vmatprep.subr.bf16.mxu0 0
  %355 = vmatpush1.bf16.msra.mxu0 0
  %356 = vmatprep.mubr.bf16.mxu0 0
  %357 = vmatmul.mubr.bf16.gmra.mrb[0].mxu0 %v92
  %v358 = vpop.f32.mrb[0].mxu0
  %v359 = vadd.f32 %v139, %v358
  %v360 = vpop.f32.mrb[0].mxu0
  %v361 = vpop.f32.mrb[0].mxu0
  %v362 = vadd.f32 %v139, %v361
  %v363 = vpop.f32.mrb[0].mxu0
  %364 = vmatprep.mubr.bf16.mxu0 0
  %365 = vmatmul.mubr.bf16.gmra.mrb[0].mxu0 %v93
  %v366 = vpop.f32.mrb[0].mxu0
  %v367 = vadd.f32 %v139, %v366
  %v368 = vpop.f32.mrb[0].mxu0
  %v369 = vpop.f32.mrb[0].mxu0
  %v370 = vadd.f32 %v139, %v369
  %v371 = vpop.f32.mrb[0].mxu0
  %372 = vdwg.mxu0
  %v373 = vpack.c.bf16 %v310, %v306
  %v374 = vpack.c.bf16 %v312, %v308
  %v375 = vpack.c.bf16 %v362, %v359
  %v376 = vpack.c.bf16 %v320, %v316
  %v377 = vpack.c.bf16 %v322, %v318
  %v378 = vpack.c.bf16 %v370, %v367
  %v385 = vunpack.c.l.b16 %v373
  %v386 = vunpack.c.l.b16 %v374
  %v387 = vunpack.c.l.b16 %v375
  %v388 = vunpack.c.h.b16 %v373
  %v389 = vunpack.c.h.b16 %v374
  %v390 = vunpack.c.h.b16 %v375
  %v391 = vunpack.c.l.b16 %v376
  %v392 = vunpack.c.l.b16 %v377
  %v393 = vunpack.c.l.b16 %v378
  %v394 = vunpack.c.h.b16 %v376
  %v395 = vunpack.c.h.b16 %v377
  %v396 = vunpack.c.h.b16 %v378
  %v397 = vpack.c.b16 %v386, %v385
  %v398 = vpack.c.b16 %v387, %v387
  %v399 = vpack.c.b16 %v389, %v388
  %v400 = vpack.c.b16 %v390, %v390
  %v401 = vpack.c.b16 %v392, %v391
  %v402 = vpack.c.b16 %v393, %v393
  %v403 = vpack.c.b16 %v395, %v394
  %v404 = vpack.c.b16 %v396, %v396
  %413 = vst [vmem:[%s5] sm:$0xff] %v397
  %414 = vst [vmem:[%s5 + $0x8] sm:$0xf] %v398
  %415 = vst [vmem:[%s5 + $0xc] sm:$0xff] %v399
  %416 = vst [vmem:[%s5 + $0x14] sm:$0xf] %v400
  %417 = vst [vmem:[%s5 + $0x18] sm:$0xff] %v401
  %418 = vst [vmem:[%s5 + $0x20] sm:$0xf] %v402
  %419 = vst [vmem:[%s5 + $0x24] sm:$0xff] %v403
  %420 = vst [vmem:[%s5 + $0x2c] sm:$0xf] %v404
  // Predicated region
  $region22: #{transformer_forward.9} parent=0 // pred_check
    _
  $region23: #{transformer_forward.9} parent=0 // pred_check_branch
    %422 = sbr.rel (0) target = $region25
  $region24: #{transformer_forward.9} parent=0 // pred_region
    _
  $region25: #{transformer_forward.9} parent=0 // pred_fallthru
    _
  // Predicated region
  $region26: #{transformer_forward.9} parent=0 // pred_check
    _
  $region27: #{transformer_forward.9} parent=0 // pred_check_branch
    %424 = sbr.rel (0) target = $region29
  $region28: #{transformer_forward.9} parent=0 // pred_region
    _
  $region29: #{transformer_forward.9} parent=0 // pred_fallthru
    _

// kernel: transformer_forward.7
$region0: #{transformer_forward.7}
  #allocation0 [shape = 'u32[]', space=smem, size = 0x4, offset = 0x4, fixed_abs, tag = 'smem constant byte address 0x4 - core index']
  #allocation1 [shape = 'u32[144,128]{1,0:T(1,128)}', space=vmem, size = 0x12000, scoped, tag = 'internal scratch']
  #allocation2 [shape = 's32[1]{0}', space=sflag, size = 0x4, scoped, tag = 'scoped memory for transformer_forward.7']
  #allocation3 [shape = 's32[1]{0:T(128)S(6)}', space=smem, size = 0x200, scoped, tag = 'prefetched SMEM operand 0']
  %s0 = inlined_call_operand.<no memory space> [shape: s32[1], index: 0, kind: input, shape index: {}]
  %s1 = inlined_call_operand.vmem [shape: bf16[32,384], index: 1, kind: input, shape index: {}]
  %s2 = inlined_call_operand.vmem [shape: bf16[32,128], index: 2, kind: output, shape index: {}]
  %s3 = sld [smem:[#allocation0]]
  $region37: #{transformer_forward.7} parent=0
    _
  %s5 = ssub.s32 1, %s3
  %s6 = scalar_select 0, %s5, %s3
  %7 = sst [smem:[#allocation3]] %s0
  loop: start=0, step=1, limit=4
  $region2: #{transformer_forward.7} parent=0 // loop_pre_header
    _
  $region3: #{transformer_forward.7} parent=0 // loop_header
    %s9 = sphi 0, %s13
    %p10 = scmp.ge.s32.totalorder %s9, 4
    %s19 = sphi 0, %s21
    %s22 = sphi 0, %s19
    %s23 = sphi 0, %s22
    %s39 = sphi 0, %s23
    %s45 = sphi 0, %s47
    %s48 = sphi 0, %s45
    %s49 = sphi 0, %s48
    %s65 = sphi 0, %s49
  $region4: #{transformer_forward.7} parent=0 // loop_header_branch
    %12 = sbr.rel (%p10) target = $region8
  $region5: #{transformer_forward.7} parent=0 // loop_body
    %s14 = ssub.s32 %s9, 1
    %s15 = ssub.s32 %s9, 2
    %s16 = sadd.s32 %s9, 1
    %s17 = ssub.s32 %s9, %s16
    %p18 = scmp.eq.s32.totalorder %s17, 0
    %s20 = sadd.s32 %s19, 1
    %s21 = scalar_select %p18, %s19, %s20
    %p24 = pneg %p18
    %p25 = scmp.eq.s32.totalorder %s9, 1
    %p26 = por %p24, %p25
    %p27 = scmp.ne.s32.totalorder %s19, %s22
    %p28 = scmp.eq.s32.totalorder %s9, 0
    %p29 = por %p27, %p28
    %p30 = scmp.ne.s32.totalorder %s19, %s22
    %p31 = scmp.eq.s32.totalorder %s14, 1
    %p32 = por %p30, %p31
    %p33 = scmp.ne.s32.totalorder %s22, %s23
    %p34 = scmp.eq.s32.totalorder %s14, 0
    %p35 = por %p33, %p34
    %p36 = scmp.ne.s32.totalorder %s22, %s23
    %p37 = scmp.eq.s32.totalorder %s15, 1
    %p38 = por %p36, %p37
    %p40 = scmp.ne.s32.totalorder %s23, %s39
    %p41 = scmp.eq.s32.totalorder %s15, 0
    %p42 = por %p40, %p41
    %s43 = ssub.s32 %s9, %s16
    %p44 = scmp.eq.s32.totalorder %s43, 0
    %s46 = sadd.s32 %s45, 1
    %s47 = scalar_select %p44, %s45, %s46
    %p50 = pneg %p44
    %p51 = scmp.eq.s32.totalorder %s9, 1
    %p52 = por %p50, %p51
    %p53 = scmp.ne.s32.totalorder %s45, %s48
    %p54 = scmp.eq.s32.totalorder %s9, 0
    %p55 = por %p53, %p54
    %p56 = scmp.ne.s32.totalorder %s45, %s48
    %p57 = scmp.eq.s32.totalorder %s14, 1
    %p58 = por %p56, %p57
    %p59 = scmp.ne.s32.totalorder %s48, %s49
    %p60 = scmp.eq.s32.totalorder %s14, 0
    %p61 = por %p59, %p60
    %p62 = scmp.ne.s32.totalorder %s48, %s49
    %p63 = scmp.eq.s32.totalorder %s15, 1
    %p64 = por %p62, %p63
    %p66 = scmp.ne.s32.totalorder %s49, %s65
    %p67 = scmp.eq.s32.totalorder %s15, 0
    %p68 = por %p66, %p67
    %p69 = scmp.le.s32.totalorder 1, %s9
    %p70 = scmp.lt.s32.totalorder %s9, 3
    %p71 = pnand %p69, %p70
    %p72 = pneg %p71
    // Predicated region
    $region9: #{transformer_forward.7} parent=5 // pred_check
      _
    $region10: #{transformer_forward.7} parent=5 // pred_check_branch
      %74 = sbr.rel (%p71) target = $region12
    $region11: #{transformer_forward.7} parent=5 // pred_region
      %s75 = ssub.s32 %s9, 1
    $region12: #{transformer_forward.7} parent=5 // pred_fallthru
      _
    %p76 = scmp.lt.s32.totalorder %s9, 2
    // Predicated region
    $region13: #{transformer_forward.7} parent=5 // pred_check
      %p77 = pneg %p76
    $region14: #{transformer_forward.7} parent=5 // pred_check_branch
      %79 = sbr.rel (%p77) target = $region16
    $region15: #{transformer_forward.7} parent=5 // pred_region
      // Predicated region
      $region17: #{transformer_forward.7} parent=15 // pred_check
        %p80 = pneg %p29
      $region18: #{transformer_forward.7} parent=15 // pred_check_branch
        %82 = sbr.rel (%p80) target = $region20
      $region19: #{transformer_forward.7} parent=15 // pred_region
        %s83 = smul.u32 2, %s9
        %p84 = scmp.lt.s32.totalorder %s83, 3
        %s85 = scalar_select %p84, %s83, 3
        %s86 = smul.addr %s85, 3
        %s87 = smul.addr %s86, 4
        %s88 = scalar_lea.vmem %s1, %s87
        %s89 = smul.u32 2, %s9
      $region20: #{transformer_forward.7} parent=15 // pred_fallthru
        _
    $region16: #{transformer_forward.7} parent=5 // pred_fallthru
      _
    %p90 = scmp.le.s32.totalorder 1, %s9
    %p91 = scmp.lt.s32.totalorder %s9, 3
    %p92 = pnand %p90, %p91
    %p93 = pneg %p92
    // Predicated region
    $region21: #{transformer_forward.7} parent=5 // pred_check
      _
    $region22: #{transformer_forward.7} parent=5 // pred_check_branch
      %95 = sbr.rel (%p92) target = $region24
    $region23: #{transformer_forward.7} parent=5 // pred_region
      %s96 = ssub.s32 %s9, 1
      %s97 = smul.u32 2, %s14
      %p98 = scmp.lt.s32.totalorder %s97, 3
      %s99 = scalar_select %p98, %s97, 3
      %s100 = smul.addr %s99, 3
      %s101 = smul.addr %s100, 4
      %s102 = scalar_lea.vmem %s1, %s101
      %p103 = pneg %p35
      %p104 = pneg %p32
      %p105 = pneg %p61
      %p106 = pneg %p58
      %s107 = smul.u32 2, %s14
      %p108 = scmp.lt.s32.totalorder %s107, 3
      %s109 = scalar_select %p108, %s107, 3
      %s110 = smul.addr %s109, 4
      %s111 = scalar_lea.vmem %s2, %s110
      %s112 = smul.u32 2, %s14
      %p113 = scmp.lt.s32.totalorder %s112, 3
      %s114 = scalar_select %p113, %s112, 3
      %s115 = smul.addr %s114, 3
      %s116 = smul.addr %s115, 4
      %s117 = scalar_lea.vmem %s1, %s116
      %s118 = smul.u32 2, %s14
      %s119 = smul.u32 2, %s14
      %p120 = scmp.lt.s32.totalorder %s119, 3
      %s121 = scalar_select %p120, %s119, 3
      %s122 = smul.addr %s121, 4
      %s123 = scalar_lea.vmem %s2, %s122
      %s124 = smul.u32 2, %s14
      %v126 = vld [vmem:[%s117] sm:$0xff]
      %v127 = vld [vmem:[%s117 + $0x8] sm:$0xf]
      %v128 = vld [vmem:[%s117 + $0xc] sm:$0xff]
      %v129 = vld [vmem:[%s117 + $0x14] sm:$0xf]
      %v132 = vunpack.c.l.b16 %v126
      %v133 = vunpack.c.l.b16 %v128
      %v134 = vpack.c.b16 %v133, %v132
      %v135 = vunpack.c.h.b16 %v126
      %v136 = vunpack.c.h.b16 %v128
      %v137 = vpack.c.b16 %v136, %v135
      %vm138 = vcmask 261120
      %v140 = vsel %vm138, %v134, 0
      %v143 = vsel %vm138, %v137, 0
      %145 = vmatprep.subr.bf16.mxu0 0
      %146 = vmatpush1.bf16.xpose.msra.mxu0 %v143
      %147 = vmatprep.subr.bf16.mxu0 0
      %148 = vmatpush1.bf16.xpose.msra.mxu0 0
      %149 = vmatprep.subr.bf16.mxu0 0
      %150 = vmatpush1.bf16.xpose.msra.mxu0 0
      %151 = vmatprep.subr.bf16.mxu0 0
      %152 = vmatpush1.bf16.xpose.msra.mxu0 0
      %153 = vmatprep.subr.bf16.mxu0 0
      %154 = vmatpush1.bf16.xpose.msra.mxu0 0
      %155 = vmatprep.subr.bf16.mxu0 0
      %156 = vmatpush1.bf16.xpose.msra.mxu0 0
      %157 = vmatprep.subr.bf16.mxu0 0
      %158 = vmatpush1.bf16.xpose.msra.mxu0 0
      %159 = vmatprep.subr.bf16.mxu0 0
      %160 = vmatpush1.bf16.xpose.msra.mxu0 0
      %161 = vmatprep.subr.bf16.mxu0 0
      %162 = vmatpush1.bf16.xpose.msra.mxu0 0
      %163 = vmatprep.subr.bf16.mxu0 0
      %164 = vmatpush1.bf16.xpose.msra.mxu0 0
      %165 = vmatprep.subr.bf16.mxu0 0
      %166 = vmatpush1.bf16.xpose.msra.mxu0 0
      %167 = vmatprep.subr.bf16.mxu0 0
      %168 = vmatpush1.bf16.xpose.msra.mxu0 0
      %169 = vmatprep.subr.bf16.mxu0 0
      %170 = vmatpush1.bf16.xpose.msra.mxu0 0
      %171 = vmatprep.subr.bf16.mxu0 0
      %172 = vmatpush1.bf16.xpose.msra.mxu0 0
      %173 = vmatprep.subr.bf16.mxu0 0
      %174 = vmatpush1.bf16.xpose.msra.mxu0 0
      %175 = vmatprep.subr.bf16.mxu0 0
      %176 = vmatpush1.bf16.xpose.msra.mxu0 0
      %177 = vmatprep.mubr.bf16.mxu0 0
      %178 = vmatmul.mubr.bf16.gmra.mrb[0].mxu0 %v140
      %v179 = vpop.f32.mrb[0].mxu0
      %v180 = vadd.f32 0.0, %v179
      %v181 = vpop.f32.mrb[0].mxu0
      %v182 = vpop.f32.mrb[0].mxu0
      %v183 = vadd.f32 0.0, %v182
      %v184 = vpop.f32.mrb[0].mxu0
      %185 = vdwg.mxu0
      %v186 = vmul.f32 %v180, 0.17677669
      %v187 = vmul.f32 %v183, 0.17677669
      %vm188 = vcmask 130048
      %v189 = vsel %vm188, %v186, -inf
      %190 = vmax.xlane.f32.xlu0 %v189
      %v191 = vpop.xlane.xlu0 %190
      %v192 = vsel %vm188, %v187, -inf
      %193 = vmax.xlane.f32.xlu0 %v192
      %v194 = vpop.xlane.xlu0 %193
      %v195 = vsub.f32 %v186, %v191
      %v196 = vsub.f32 %v187, %v194
      %v197 = vmul.f32 %v195, 1.442695
      %v198 = vpow.pop %v197
      %v199 = vmul.f32 %v196, 1.442695
      %v200 = vpow.pop %v199
      %v201 = vsel %vm188, %v198, 0.0
      %202 = vadd.xlane.f32.xlu0 %v201
      %v203 = vpop.xlane.xlu0 %202
      %v204 = vsel %vm188, %v200, 0.0
      %205 = vadd.xlane.f32.xlu0 %v204
      %v206 = vpop.xlane.xlu0 %205
      %v207 = vrcp.pop %v203
      %v208 = vmul.f32 %v198, %v207
      %v209 = vrcp.pop %v206
      %v210 = vmul.f32 %v200, %v209
      %v211 = vpack.c.bf16 %v210, %v208
      %v214 = vunpack.c.l.b16 %v127
      %v215 = vunpack.c.l.b16 %v129
      %v216 = vpack.c.b16 %v215, %v214
      %v219 = vsel %vm188, %v211, 0
      %221 = vmatprep.subr.bf16.mxu0 0
      %222 = vmatpush1.bf16.msra.mxu0 %v216
      %223 = vmatprep.subr.bf16.mxu0 0
      %224 = vmatpush1.bf16.msra.mxu0 0
      %225 = vmatprep.subr.bf16.mxu0 0
      %226 = vmatpush1.bf16.msra.mxu0 0
      %227 = vmatprep.subr.bf16.mxu0 0
      %228 = vmatpush1.bf16.msra.mxu0 0
      %229 = vmatprep.subr.bf16.mxu0 0
      %230 = vmatpush1.bf16.msra.mxu0 0
      %231 = vmatprep.subr.bf16.mxu0 0
      %232 = vmatpush1.bf16.msra.mxu0 0
      %233 = vmatprep.subr.bf16.mxu0 0
      %234 = vmatpush1.bf16.msra.mxu0 0
      %235 = vmatprep.subr.bf16.mxu0 0
      %236 = vmatpush1.bf16.msra.mxu0 0
      %237 = vmatprep.subr.bf16.mxu0 0
      %238 = vmatpush1.bf16.msra.mxu0 0
      %239 = vmatprep.subr.bf16.mxu0 0
      %240 = vmatpush1.bf16.msra.mxu0 0
      %241 = vmatprep.subr.bf16.mxu0 0
      %242 = vmatpush1.bf16.msra.mxu0 0
      %243 = vmatprep.subr.bf16.mxu0 0
      %244 = vmatpush1.bf16.msra.mxu0 0
      %245 = vmatprep.subr.bf16.mxu0 0
      %246 = vmatpush1.bf16.msra.mxu0 0
      %247 = vmatprep.subr.bf16.mxu0 0
      %248 = vmatpush1.bf16.msra.mxu0 0
      %249 = vmatprep.subr.bf16.mxu0 0
      %250 = vmatpush1.bf16.msra.mxu0 0
      %251 = vmatprep.subr.bf16.mxu0 0
      %252 = vmatpush1.bf16.msra.mxu0 0
      %253 = vmatprep.mubr.bf16.mxu0 0
      %254 = vmatmul.mubr.bf16.gmra.mrb[0].mxu0 %v219
      %v255 = vpop.f32.mrb[0].mxu0
      %v256 = vadd.f32 0.0, %v255
      %v257 = vpop.f32.mrb[0].mxu0
      %v258 = vpop.f32.mrb[0].mxu0
      %v259 = vadd.f32 0.0, %v258
      %v260 = vpop.f32.mrb[0].mxu0
      %261 = vdwg.mxu0
      %262 = vrot.lane.b32.xlu0 %v134, 96
      %v263 = vpop.permute.xlu0 %262
      %264 = vrot.lane.b32.xlu0 %v137, 96
      %v265 = vpop.permute.xlu0 %264
      %v267 = vsel %vm138, %v263, 0
      %v270 = vsel %vm138, %v265, 0
      %272 = vmatprep.subr.bf16.mxu0 0
      %273 = vmatpush1.bf16.xpose.msra.mxu0 %v270
      %274 = vmatprep.subr.bf16.mxu0 0
      %275 = vmatpush1.bf16.xpose.msra.mxu0 0
      %276 = vmatprep.subr.bf16.mxu0 0
      %277 = vmatpush1.bf16.xpose.msra.mxu0 0
      %278 = vmatprep.subr.bf16.mxu0 0
      %279 = vmatpush1.bf16.xpose.msra.mxu0 0
      %280 = vmatprep.subr.bf16.mxu0 0
      %281 = vmatpush1.bf16.xpose.msra.mxu0 0
      %282 = vmatprep.subr.bf16.mxu0 0
      %283 = vmatpush1.bf16.xpose.msra.mxu0 0
      %284 = vmatprep.subr.bf16.mxu0 0
      %285 = vmatpush1.bf16.xpose.msra.mxu0 0
      %286 = vmatprep.subr.bf16.mxu0 0
      %287 = vmatpush1.bf16.xpose.msra.mxu0 0
      %288 = vmatprep.subr.bf16.mxu0 0
      %289 = vmatpush1.bf16.xpose.msra.mxu0 0
      %290 = vmatprep.subr.bf16.mxu0 0
      %291 = vmatpush1.bf16.xpose.msra.mxu0 0
      %292 = vmatprep.subr.bf16.mxu0 0
      %293 = vmatpush1.bf16.xpose.msra.mxu0 0
      %294 = vmatprep.subr.bf16.mxu0 0
      %295 = vmatpush1.bf16.xpose.msra.mxu0 0
      %296 = vmatprep.subr.bf16.mxu0 0
      %297 = vmatpush1.bf16.xpose.msra.mxu0 0
      %298 = vmatprep.subr.bf16.mxu0 0
      %299 = vmatpush1.bf16.xpose.msra.mxu0 0
      %300 = vmatprep.subr.bf16.mxu0 0
      %301 = vmatpush1.bf16.xpose.msra.mxu0 0
      %302 = vmatprep.subr.bf16.mxu0 0
      %303 = vmatpush1.bf16.xpose.msra.mxu0 0
      %304 = vmatprep.mubr.bf16.mxu0 0
      %305 = vmatmul.mubr.bf16.gmra.mrb[0].mxu0 %v267
      %v306 = vpop.f32.mrb[0].mxu0
      %v307 = vadd.f32 0.0, %v306
      %v308 = vpop.f32.mrb[0].mxu0
      %v309 = vpop.f32.mrb[0].mxu0
      %v310 = vadd.f32 0.0, %v309
      %v311 = vpop.f32.mrb[0].mxu0
      %312 = vdwg.mxu0
      %v313 = vmul.f32 %v307, 0.17677669
      %v314 = vmul.f32 %v310, 0.17677669
      %v315 = vsel %vm188, %v313, -inf
      %316 = vmax.xlane.f32.xlu0 %v315
      %v317 = vpop.xlane.xlu0 %316
      %v318 = vsel %vm188, %v314, -inf
      %319 = vmax.xlane.f32.xlu0 %v318
      %v320 = vpop.xlane.xlu0 %319
      %v321 = vsub.f32 %v313, %v317
      %v322 = vsub.f32 %v314, %v320
      %v323 = vmul.f32 %v321, 1.442695
      %v324 = vpow.pop %v323
      %v325 = vmul.f32 %v322, 1.442695
      %v326 = vpow.pop %v325
      %v327 = vsel %vm188, %v324, 0.0
      %328 = vadd.xlane.f32.xlu0 %v327
      %v329 = vpop.xlane.xlu0 %328
      %v330 = vsel %vm188, %v326, 0.0
      %331 = vadd.xlane.f32.xlu0 %v330
      %v332 = vpop.xlane.xlu0 %331
      %v333 = vrcp.pop %v329
      %v334 = vmul.f32 %v324, %v333
      %v335 = vrcp.pop %v332
      %v336 = vmul.f32 %v326, %v335
      %v337 = vpack.c.bf16 %v336, %v334
      %338 = vrot.lane.b32.xlu0 %v216, 96
      %v339 = vpop.permute.xlu0 %338
      %v342 = vsel %vm188, %v337, 0
      %344 = vmatprep.subr.bf16.mxu0 0
      %345 = vmatpush1.bf16.msra.mxu0 %v339
      %346 = vmatprep.subr.bf16.mxu0 0
      %347 = vmatpush1.bf16.msra.mxu0 0
      %348 = vmatprep.subr.bf16.mxu0 0
      %349 = vmatpush1.bf16.msra.mxu0 0
      %350 = vmatprep.subr.bf16.mxu0 0
      %351 = vmatpush1.bf16.msra.mxu0 0
      %352 = vmatprep.subr.bf16.mxu0 0
      %353 = vmatpush1.bf16.msra.mxu0 0
      %354 = vmatprep.subr.bf16.mxu0 0
      %355 = vmatpush1.bf16.msra.mxu0 0
      %356 = vmatprep.subr.bf16.mxu0 0
      %357 = vmatpush1.bf16.msra.mxu0 0
      %358 = vmatprep.subr.bf16.mxu0 0
      %359 = vmatpush1.bf16.msra.mxu0 0
      %360 = vmatprep.subr.bf16.mxu0 0
      %361 = vmatpush1.bf16.msra.mxu0 0
      %362 = vmatprep.subr.bf16.mxu0 0
      %363 = vmatpush1.bf16.msra.mxu0 0
      %364 = vmatprep.subr.bf16.mxu0 0
      %365 = vmatpush1.bf16.msra.mxu0 0
      %366 = vmatprep.subr.bf16.mxu0 0
      %367 = vmatpush1.bf16.msra.mxu0 0
      %368 = vmatprep.subr.bf16.mxu0 0
      %369 = vmatpush1.bf16.msra.mxu0 0
      %370 = vmatprep.subr.bf16.mxu0 0
      %371 = vmatpush1.bf16.msra.mxu0 0
      %372 = vmatprep.subr.bf16.mxu0 0
      %373 = vmatpush1.bf16.msra.mxu0 0
      %374 = vmatprep.subr.bf16.mxu0 0
      %375 = vmatpush1.bf16.msra.mxu0 0
      %376 = vmatprep.mubr.bf16.mxu0 0
      %377 = vmatmul.mubr.bf16.gmra.mrb[0].mxu0 %v342
      %v378 = vpop.f32.mrb[0].mxu0
      %v379 = vadd.f32 0.0, %v378
      %v380 = vpop.f32.mrb[0].mxu0
      %v381 = vpop.f32.mrb[0].mxu0
      %v382 = vadd.f32 0.0, %v381
      %v383 = vpop.f32.mrb[0].mxu0
      %384 = vdwg.mxu0
      %385 = vrot.lane.b32.xlu0 %v134, 64
      %v386 = vpop.permute.xlu0 %385
      %387 = vrot.lane.b32.xlu0 %v137, 64
      %v388 = vpop.permute.xlu0 %387
      %v390 = vsel %vm138, %v386, 0
      %v393 = vsel %vm138, %v388, 0
      %395 = vmatprep.subr.bf16.mxu0 0
      %396 = vmatpush1.bf16.xpose.msra.mxu0 %v393
      %397 = vmatprep.subr.bf16.mxu0 0
      %398 = vmatpush1.bf16.xpose.msra.mxu0 0
      %399 = vmatprep.subr.bf16.mxu0 0
      %400 = vmatpush1.bf16.xpose.msra.mxu0 0
      %401 = vmatprep.subr.bf16.mxu0 0
      %402 = vmatpush1.bf16.xpose.msra.mxu0 0
      %403 = vmatprep.subr.bf16.mxu0 0
      %404 = vmatpush1.bf16.xpose.msra.mxu0 0
      %405 = vmatprep.subr.bf16.mxu0 0
      %406 = vmatpush1.bf16.xpose.msra.mxu0 0
      %407 = vmatprep.subr.bf16.mxu0 0
      %408 = vmatpush1.bf16.xpose.msra.mxu0 0
      %409 = vmatprep.subr.bf16.mxu0 0
      %410 = vmatpush1.bf16.xpose.msra.mxu0 0
      %411 = vmatprep.subr.bf16.mxu0 0
      %412 = vmatpush1.bf16.xpose.msra.mxu0 0
      %413 = vmatprep.subr.bf16.mxu0 0
      %414 = vmatpush1.bf16.xpose.msra.mxu0 0
      %415 = vmatprep.subr.bf16.mxu0 0
      %416 = vmatpush1.bf16.xpose.msra.mxu0 0
      %417 = vmatprep.subr.bf16.mxu0 0
      %418 = vmatpush1.bf16.xpose.msra.mxu0 0
      %419 = vmatprep.subr.bf16.mxu0 0
      %420 = vmatpush1.bf16.xpose.msra.mxu0 0
      %421 = vmatprep.subr.bf16.mxu0 0
      %422 = vmatpush1.bf16.xpose.msra.mxu0 0
      %423 = vmatprep.subr.bf16.mxu0 0
      %424 = vmatpush1.bf16.xpose.msra.mxu0 0
      %425 = vmatprep.subr.bf16.mxu0 0
      %426 = vmatpush1.bf16.xpose.msra.mxu0 0
      %427 = vmatprep.mubr.bf16.mxu0 0
      %428 = vmatmul.mubr.bf16.gmra.mrb[0].mxu0 %v390
      %v429 = vpop.f32.mrb[0].mxu0
      %v430 = vadd.f32 0.0, %v429
      %v431 = vpop.f32.mrb[0].mxu0
      %v432 = vpop.f32.mrb[0].mxu0
      %v433 = vadd.f32 0.0, %v432
      %v434 = vpop.f32.mrb[0].mxu0
      %435 = vdwg.mxu0
      %v436 = vmul.f32 %v430, 0.17677669
      %v437 = vmul.f32 %v433, 0.17677669
      %v438 = vsel %vm188, %v436, -inf
      %439 = vmax.xlane.f32.xlu0 %v438
      %v440 = vpop.xlane.xlu0 %439
      %v441 = vsel %vm188, %v437, -inf
      %442 = vmax.xlane.f32.xlu0 %v441
      %v443 = vpop.xlane.xlu0 %442
      %v444 = vsub.f32 %v436, %v440
      %v445 = vsub.f32 %v437, %v443
      %v446 = vmul.f32 %v444, 1.442695
      %v447 = vpow.pop %v446
      %v448 = vmul.f32 %v445, 1.442695
      %v449 = vpow.pop %v448
      %v450 = vsel %vm188, %v447, 0.0
      %451 = vadd.xlane.f32.xlu0 %v450
      %v452 = vpop.xlane.xlu0 %451
      %v453 = vsel %vm188, %v449, 0.0
      %454 = vadd.xlane.f32.xlu0 %v453
      %v455 = vpop.xlane.xlu0 %454
      %v456 = vrcp.pop %v452
      %v457 = vmul.f32 %v447, %v456
      %v458 = vrcp.pop %v455
      %v459 = vmul.f32 %v449, %v458
      %v460 = vpack.c.bf16 %v459, %v457
      %461 = vrot.lane.b32.xlu0 %v216, 64
      %v462 = vpop.permute.xlu0 %461
      %v465 = vsel %vm188, %v460, 0
      %467 = vmatprep.subr.bf16.mxu0 0
      %468 = vmatpush1.bf16.msra.mxu0 %v462
      %469 = vmatprep.subr.bf16.mxu0 0
      %470 = vmatpush1.bf16.msra.mxu0 0
      %471 = vmatprep.subr.bf16.mxu0 0
      %472 = vmatpush1.bf16.msra.mxu0 0
      %473 = vmatprep.subr.bf16.mxu0 0
      %474 = vmatpush1.bf16.msra.mxu0 0
      %475 = vmatprep.subr.bf16.mxu0 0
      %476 = vmatpush1.bf16.msra.mxu0 0
      %477 = vmatprep.subr.bf16.mxu0 0
      %478 = vmatpush1.bf16.msra.mxu0 0
      %479 = vmatprep.subr.bf16.mxu0 0
      %480 = vmatpush1.bf16.msra.mxu0 0
      %481 = vmatprep.subr.bf16.mxu0 0
      %482 = vmatpush1.bf16.msra.mxu0 0
      %483 = vmatprep.subr.bf16.mxu0 0
      %484 = vmatpush1.bf16.msra.mxu0 0
      %485 = vmatprep.subr.bf16.mxu0 0
      %486 = vmatpush1.bf16.msra.mxu0 0
      %487 = vmatprep.subr.bf16.mxu0 0
      %488 = vmatpush1.bf16.msra.mxu0 0
      %489 = vmatprep.subr.bf16.mxu0 0
      %490 = vmatpush1.bf16.msra.mxu0 0
      %491 = vmatprep.subr.bf16.mxu0 0
      %492 = vmatpush1.bf16.msra.mxu0 0
      %493 = vmatprep.subr.bf16.mxu0 0
      %494 = vmatpush1.bf16.msra.mxu0 0
      %495 = vmatprep.subr.bf16.mxu0 0
      %496 = vmatpush1.bf16.msra.mxu0 0
      %497 = vmatprep.subr.bf16.mxu0 0
      %498 = vmatpush1.bf16.msra.mxu0 0
      %499 = vmatprep.mubr.bf16.mxu0 0
      %500 = vmatmul.mubr.bf16.gmra.mrb[0].mxu0 %v465
      %v501 = vpop.f32.mrb[0].mxu0
      %v502 = vadd.f32 0.0, %v501
      %v503 = vpop.f32.mrb[0].mxu0
      %v504 = vpop.f32.mrb[0].mxu0
      %v505 = vadd.f32 0.0, %v504
      %v506 = vpop.f32.mrb[0].mxu0
      %507 = vdwg.mxu0
      %508 = vrot.lane.b32.xlu0 %v134, 32
      %v509 = vpop.permute.xlu0 %508
      %510 = vrot.lane.b32.xlu0 %v137, 32
      %v511 = vpop.permute.xlu0 %510
      %v513 = vsel %vm138, %v509, 0
      %v516 = vsel %vm138, %v511, 0
      %518 = vmatprep.subr.bf16.mxu0 0
      %519 = vmatpush1.bf16.xpose.msra.mxu0 %v516
      %520 = vmatprep.subr.bf16.mxu0 0
      %521 = vmatpush1.bf16.xpose.msra.mxu0 0
      %522 = vmatprep.subr.bf16.mxu0 0
      %523 = vmatpush1.bf16.xpose.msra.mxu0 0
      %524 = vmatprep.subr.bf16.mxu0 0
      %525 = vmatpush1.bf16.xpose.msra.mxu0 0
      %526 = vmatprep.subr.bf16.mxu0 0
      %527 = vmatpush1.bf16.xpose.msra.mxu0 0
      %528 = vmatprep.subr.bf16.mxu0 0
      %529 = vmatpush1.bf16.xpose.msra.mxu0 0
      %530 = vmatprep.subr.bf16.mxu0 0
      %531 = vmatpush1.bf16.xpose.msra.mxu0 0
      %532 = vmatprep.subr.bf16.mxu0 0
      %533 = vmatpush1.bf16.xpose.msra.mxu0 0
      %534 = vmatprep.subr.bf16.mxu0 0
      %535 = vmatpush1.bf16.xpose.msra.mxu0 0
      %536 = vmatprep.subr.bf16.mxu0 0
      %537 = vmatpush1.bf16.xpose.msra.mxu0 0
      %538 = vmatprep.subr.bf16.mxu0 0
      %539 = vmatpush1.bf16.xpose.msra.mxu0 0
      %540 = vmatprep.subr.bf16.mxu0 0
      %541 = vmatpush1.bf16.xpose.msra.mxu0 0
      %542 = vmatprep.subr.bf16.mxu0 0
      %543 = vmatpush1.bf16.xpose.msra.mxu0 0
      %544 = vmatprep.subr.bf16.mxu0 0
      %545 = vmatpush1.bf16.xpose.msra.mxu0 0
      %546 = vmatprep.subr.bf16.mxu0 0
      %547 = vmatpush1.bf16.xpose.msra.mxu0 0
      %548 = vmatprep.subr.bf16.mxu0 0
      %549 = vmatpush1.bf16.xpose.msra.mxu0 0
      %550 = vmatprep.mubr.bf16.mxu0 0
      %551 = vmatmul.mubr.bf16.gmra.mrb[0].mxu0 %v513
      %v552 = vpop.f32.mrb[0].mxu0
      %v553 = vadd.f32 0.0, %v552
      %v554 = vpop.f32.mrb[0].mxu0
      %v555 = vpop.f32.mrb[0].mxu0
      %v556 = vadd.f32 0.0, %v555
      %v557 = vpop.f32.mrb[0].mxu0
      %558 = vdwg.mxu0
      %v559 = vmul.f32 %v553, 0.17677669
      %v560 = vmul.f32 %v556, 0.17677669
      %v561 = vsel %vm188, %v559, -inf
      %562 = vmax.xlane.f32.xlu0 %v561
      %v563 = vpop.xlane.xlu0 %562
      %v564 = vsel %vm188, %v560, -inf
      %565 = vmax.xlane.f32.xlu0 %v564
      %v566 = vpop.xlane.xlu0 %565
      %v567 = vsub.f32 %v559, %v563
      %v568 = vsub.f32 %v560, %v566
      %v569 = vmul.f32 %v567, 1.442695
      %v570 = vpow.pop %v569
      %v571 = vmul.f32 %v568, 1.442695
      %v572 = vpow.pop %v571
      %v573 = vsel %vm188, %v570, 0.0
      %574 = vadd.xlane.f32.xlu0 %v573
      %v575 = vpop.xlane.xlu0 %574
      %v576 = vsel %vm188, %v572, 0.0
      %577 = vadd.xlane.f32.xlu0 %v576
      %v578 = vpop.xlane.xlu0 %577
      %v579 = vrcp.pop %v575
      %v580 = vmul.f32 %v570, %v579
      %v581 = vrcp.pop %v578
      %v582 = vmul.f32 %v572, %v581
      %v583 = vpack.c.bf16 %v582, %v580
      %584 = vrot.lane.b32.xlu0 %v216, 32
      %v585 = vpop.permute.xlu0 %584
      %v588 = vsel %vm188, %v583, 0
      %590 = vmatprep.subr.bf16.mxu0 0
      %591 = vmatpush1.bf16.msra.mxu0 %v585
      %592 = vmatprep.subr.bf16.mxu0 0
      %593 = vmatpush1.bf16.msra.mxu0 0
      %594 = vmatprep.subr.bf16.mxu0 0
      %595 = vmatpush1.bf16.msra.mxu0 0
      %596 = vmatprep.subr.bf16.mxu0 0
      %597 = vmatpush1.bf16.msra.mxu0 0
      %598 = vmatprep.subr.bf16.mxu0 0
      %599 = vmatpush1.bf16.msra.mxu0 0
      %600 = vmatprep.subr.bf16.mxu0 0
      %601 = vmatpush1.bf16.msra.mxu0 0
      %602 = vmatprep.subr.bf16.mxu0 0
      %603 = vmatpush1.bf16.msra.mxu0 0
      %604 = vmatprep.subr.bf16.mxu0 0
      %605 = vmatpush1.bf16.msra.mxu0 0
      %606 = vmatprep.subr.bf16.mxu0 0
      %607 = vmatpush1.bf16.msra.mxu0 0
      %608 = vmatprep.subr.bf16.mxu0 0
      %609 = vmatpush1.bf16.msra.mxu0 0
      %610 = vmatprep.subr.bf16.mxu0 0
      %611 = vmatpush1.bf16.msra.mxu0 0
      %612 = vmatprep.subr.bf16.mxu0 0
      %613 = vmatpush1.bf16.msra.mxu0 0
      %614 = vmatprep.subr.bf16.mxu0 0
      %615 = vmatpush1.bf16.msra.mxu0 0
      %616 = vmatprep.subr.bf16.mxu0 0
      %617 = vmatpush1.bf16.msra.mxu0 0
      %618 = vmatprep.subr.bf16.mxu0 0
      %619 = vmatpush1.bf16.msra.mxu0 0
      %620 = vmatprep.subr.bf16.mxu0 0
      %621 = vmatpush1.bf16.msra.mxu0 0
      %622 = vmatprep.mubr.bf16.mxu0 0
      %623 = vmatmul.mubr.bf16.gmra.mrb[0].mxu0 %v588
      %v624 = vpop.f32.mrb[0].mxu0
      %v625 = vadd.f32 0.0, %v624
      %v626 = vpop.f32.mrb[0].mxu0
      %v627 = vpop.f32.mrb[0].mxu0
      %v628 = vadd.f32 0.0, %v627
      %v629 = vpop.f32.mrb[0].mxu0
      %630 = vdwg.mxu0
      %633 = vrot.lane.b32.xlu0 %v379, 32
      %v634 = vpop.permute.xlu0 %633
      %635 = vrot.lane.b32.xlu0 %v382, 32
      %v636 = vpop.permute.xlu0 %635
      %641 = vrot.lane.b32.xlu0 %v502, 64
      %v642 = vpop.permute.xlu0 %641
      %643 = vrot.lane.b32.xlu0 %v505, 64
      %v644 = vpop.permute.xlu0 %643
      %649 = vrot.lane.b32.xlu0 %v625, 96
      %v650 = vpop.permute.xlu0 %649
      %651 = vrot.lane.b32.xlu0 %v628, 96
      %v652 = vpop.permute.xlu0 %651
      %v655 = vsel %vm138, %v256, %v634
      %v656 = vsel %vm138, %v259, %v636
      %vm657 = vcmask 523264
      %v658 = vsel %vm657, %v655, %v642
      %v659 = vsel %vm657, %v656, %v644
      %vm660 = vcmask 785408
      %v661 = vsel %vm660, %v658, %v650
      %v662 = vsel %vm660, %v659, %v652
      %v663 = vpack.c.bf16 %v662, %v661
      %v665 = vunpack.c.l.b16 %v663
      %v666 = vunpack.c.h.b16 %v663
      %v667 = vpack.c.b16 %v665, %v665
      %v668 = vpack.c.b16 %v666, %v666
      %671 = vst [vmem:[%s123] sm:$0xf] %v667
      %672 = vst [vmem:[%s123 + $0x4] sm:$0xf] %v668
      %s673 = smul.u32 2, %s14
      %p674 = scmp.lt.s32.totalorder %s673, 3
      %s675 = scalar_select %p674, %s673, 3
      %s676 = smul.addr %s675, 4
      %s677 = scalar_lea.vmem %s2, %s676
      // Predicated region
      $region25: #{transformer_forward.7} parent=23 // pred_check
        %p678 = pneg %p58
      $region26: #{transformer_forward.7} parent=23 // pred_check_branch
        %680 = sbr.rel (%p678) target = $region28
      $region27: #{transformer_forward.7} parent=23 // pred_region
        %s681 = smul.u32 2, %s14
      $region28: #{transformer_forward.7} parent=23 // pred_fallthru
        _
    $region24: #{transformer_forward.7} parent=5 // pred_fallthru
      _
    %p682 = scmp.le.s32.totalorder 2, %s9
    // Predicated region
    $region29: #{transformer_forward.7} parent=5 // pred_check
      %p683 = pneg %p682
    $region30: #{transformer_forward.7} parent=5 // pred_check_branch
      %685 = sbr.rel (%p683) target = $region32
    $region31: #{transformer_forward.7} parent=5 // pred_region
      %s686 = ssub.s32 %s9, 2
      // Predicated region
      $region33: #{transformer_forward.7} parent=31 // pred_check
        %p687 = pneg %p64
      $region34: #{transformer_forward.7} parent=31 // pred_check_branch
        %689 = sbr.rel (%p687) target = $region36
      $region35: #{transformer_forward.7} parent=31 // pred_region
        %s690 = smul.u32 2, %s15
        %p691 = scmp.lt.s32.totalorder %s690, 3
        %s692 = scalar_select %p691, %s690, 3
        %s693 = smul.addr %s692, 4
        %s694 = scalar_lea.vmem %s2, %s693
      $region36: #{transformer_forward.7} parent=31 // pred_fallthru
        _
    $region32: #{transformer_forward.7} parent=5 // pred_fallthru
      _
  $region6: #{transformer_forward.7} parent=0 // loop_footer
    %s13 = sadd.s32 1, %s9
  $region7: #{transformer_forward.7} parent=0 // loop_footer_branch
    %8 = sbr.rel target = $region3
  $region8: #{transformer_forward.7} parent=0 // loop_exit
    _

// kernel: transformer_forward.8
$region0: #{transformer_forward.8}
  #allocation0 [shape = 'u32[]', space=smem, size = 0x4, offset = 0x4, fixed_abs, tag = 'smem constant byte address 0x4 - core index']
  #allocation1 [shape = 'u32[144,128]{1,0:T(1,128)}', space=vmem, size = 0x12000, scoped, tag = 'internal scratch']
  #allocation2 [shape = 's32[1]{0}', space=sflag, size = 0x4, scoped, tag = 'scoped memory for transformer_forward.8']
  #allocation3 [shape = 's32[1]{0:T(128)S(6)}', space=smem, size = 0x200, scoped, tag = 'prefetched SMEM operand 0']
  %s0 = inlined_call_operand.<no memory space> [shape: s32[1], index: 0, kind: input, shape index: {}]
  %s1 = inlined_call_operand.vmem [shape: bf16[32,128], index: 1, kind: input, shape index: {}]
  %s2 = inlined_call_operand.vmem [shape: f32[32,128], index: 2, kind: input, shape index: {}]
  %s3 = inlined_call_operand.vmem [shape: bf16[128,128], index: 3, kind: input, shape index: {}]
  %s4 = inlined_call_operand.vmem [shape: f32[1,128], index: 4, kind: input, shape index: {}]
  %s5 = inlined_call_operand.vmem [shape: f32[1,128], index: 5, kind: input, shape index: {}]
  %s6 = inlined_call_operand.vmem [shape: f32[1,128], index: 6, kind: input, shape index: {}]
  %s7 = inlined_call_operand.vmem [shape: bf16[128,256], index: 7, kind: input, shape index: {}]
  %s8 = inlined_call_operand.vmem [shape: f32[1,256], index: 8, kind: input, shape index: {}]
  %s9 = inlined_call_operand.vmem [shape: bf16[256,128], index: 9, kind: input, shape index: {}]
  %s10 = inlined_call_operand.hbm [shape: f32[1,128], index: 10, kind: input, shape index: {}]
  %s11 = inlined_call_operand.vmem [shape: f32[32,128], index: 11, kind: output, shape index: {}]
  %s12 = sld [smem:[#allocation0]]
  $region54: #{transformer_forward.8} parent=0
    _
  %s14 = ssub.s32 1, %s12
  %s15 = scalar_select 0, %s14, %s12
  %16 = sst [smem:[#allocation3]] %s0
  $region1: #{transformer_forward.8} parent=0
    #allocation4 [shape = 'u8[512]{0}', space=vmem, size = 0x400, scoped, tag = 'input window, operand 10, single buffered']
    #allocation5 [shape = 's32[1]{0}', space=sflag, size = 0x4, scoped, tag = 'scoped memory for transformer_forward.8']
    %17 = vsyncpa [#allocation5], 0
    // Predicated region
    $region2: #{transformer_forward.8} parent=1 // pred_check
      _
    $region3: #{transformer_forward.8} parent=1 // pred_check_branch
      %19 = sbr.rel (0) target = $region5
    $region4: #{transformer_forward.8} parent=1 // pred_region
      _
    $region5: #{transformer_forward.8} parent=1 // pred_fallthru
      _
    // Predicated region
    $region6: #{transformer_forward.8} parent=1 // pred_check
      _
    $region7: #{transformer_forward.8} parent=1 // pred_check_branch
      %21 = sbr.rel (0) target = $region9
    $region8: #{transformer_forward.8} parent=1 // pred_region
      _
    $region9: #{transformer_forward.8} parent=1 // pred_fallthru
      _
    // Predicated region
    $region10: #{transformer_forward.8} parent=1 // pred_check
      _
    $region11: #{transformer_forward.8} parent=1 // pred_check_branch
      %23 = sbr.rel (0) target = $region13
    $region12: #{transformer_forward.8} parent=1 // pred_region
      _
    $region13: #{transformer_forward.8} parent=1 // pred_fallthru
      _
    // Predicated region
    $region14: #{transformer_forward.8} parent=1 // pred_check
      _
    $region15: #{transformer_forward.8} parent=1 // pred_check_branch
      %25 = sbr.rel (0) target = $region17
    $region16: #{transformer_forward.8} parent=1 // pred_region
      _
    $region17: #{transformer_forward.8} parent=1 // pred_fallthru
      _
    // Predicated region
    $region18: #{transformer_forward.8} parent=1 // pred_check
      _
    $region19: #{transformer_forward.8} parent=1 // pred_check_branch
      %27 = sbr.rel (0) target = $region21
    $region20: #{transformer_forward.8} parent=1 // pred_region
      _
    $region21: #{transformer_forward.8} parent=1 // pred_fallthru
      _
    // Predicated region
    $region22: #{transformer_forward.8} parent=1 // pred_check
      _
    $region23: #{transformer_forward.8} parent=1 // pred_check_branch
      %29 = sbr.rel (0) target = $region25
    $region24: #{transformer_forward.8} parent=1 // pred_region
      _
    $region25: #{transformer_forward.8} parent=1 // pred_fallthru
      _
    // Predicated region
    $region26: #{transformer_forward.8} parent=1 // pred_check
      _
    $region27: #{transformer_forward.8} parent=1 // pred_check_branch
      %31 = sbr.rel (0) target = $region29
    $region28: #{transformer_forward.8} parent=1 // pred_region
      _
    $region29: #{transformer_forward.8} parent=1 // pred_fallthru
      _
    // Predicated region
    $region30: #{transformer_forward.8} parent=1 // pred_check
      _
    $region31: #{transformer_forward.8} parent=1 // pred_check_branch
      %33 = sbr.rel (0) target = $region33
    $region32: #{transformer_forward.8} parent=1 // pred_region
      _
    $region33: #{transformer_forward.8} parent=1 // pred_fallthru
      _
    // Predicated region
    $region34: #{transformer_forward.8} parent=1 // pred_check
      _
    $region35: #{transformer_forward.8} parent=1 // pred_check_branch
      %35 = sbr.rel (0) target = $region37
    $region36: #{transformer_forward.8} parent=1 // pred_region
      _
    $region37: #{transformer_forward.8} parent=1 // pred_fallthru
      _
    // Predicated region
    $region38: #{transformer_forward.8} parent=1 // pred_check
      _
    $region39: #{transformer_forward.8} parent=1 // pred_check_branch
      %37 = sbr.rel (0) target = $region41
    $region40: #{transformer_forward.8} parent=1 // pred_region
      %s39 = ssub.s32 16, 16
      %40 = vsyncadd [#allocation5], %s39
      %s42 = sshll.u32 [#allocation4], 4
      %s43 = int_to_ptr.vmem [resolvable:$true] %s42
      %45 = dma.hbm_to_vmem [thread:$0]  %s10, 16, %s43, [#allocation5]
    $region41: #{transformer_forward.8} parent=1 // pred_fallthru
      _
    // Predicated region
    $region42: #{transformer_forward.8} parent=1 // pred_check
      _
    $region43: #{transformer_forward.8} parent=1 // pred_check_branch
      %47 = sbr.rel (0) target = $region45
    $region44: #{transformer_forward.8} parent=1 // pred_region
      %48 = dma.done [#allocation5], 16
    $region45: #{transformer_forward.8} parent=1 // pred_fallthru
      _
    %v50 = vld [vmem:[%s1] sm:$0xf]
    %v51 = vld [vmem:[%s1 + $0x4] sm:$0xf]
    %v52 = vld [vmem:[%s1 + $0x8] sm:$0xf]
    %v53 = vld [vmem:[%s1 + $0xc] sm:$0xf]
    %v54 = vld [vmem:[%s3] sm:$0xf]
    %v55 = vld [vmem:[%s3 + $0x4] sm:$0xf]
    %v56 = vld [vmem:[%s3 + $0x8] sm:$0xf]
    %v57 = vld [vmem:[%s3 + $0xc] sm:$0xf]
    %v58 = vld [vmem:[%s3 + $0x10] sm:$0xf]
    %v59 = vld [vmem:[%s3 + $0x14] sm:$0xf]
    %v60 = vld [vmem:[%s3 + $0x18] sm:$0xf]
    %v61 = vld [vmem:[%s3 + $0x1c] sm:$0xf]
    %v62 = vld [vmem:[%s3 + $0x20] sm:$0xf]
    %v63 = vld [vmem:[%s3 + $0x24] sm:$0xf]
    %v64 = vld [vmem:[%s3 + $0x28] sm:$0xf]
    %v65 = vld [vmem:[%s3 + $0x2c] sm:$0xf]
    %v66 = vld [vmem:[%s3 + $0x30] sm:$0xf]
    %v67 = vld [vmem:[%s3 + $0x34] sm:$0xf]
    %v68 = vld [vmem:[%s3 + $0x38] sm:$0xf]
    %v69 = vld [vmem:[%s3 + $0x3c] sm:$0xf]
    %v70 = vld [vmem:[%s4] sm:$0x1]
    %v72 = vlaneseq
    %v73 = vshrl.u32 %v72, 7
    %v74 = vsub.s32 0, %v73
    %v75 = vrot.slane %v70, %v74
    %v81 = vunpack.c.l.b16 %v50
    %v82 = vunpack.c.l.b16 %v51
    %v83 = vunpack.c.l.b16 %v52
    %v84 = vunpack.c.l.b16 %v53
    %v85 = vpack.c.b16 %v82, %v81
    %v86 = vpack.c.b16 %v84, %v83
    %v105 = vunpack.c.l.b16 %v54
    %v106 = vunpack.c.l.b16 %v55
    %v107 = vunpack.c.l.b16 %v56
    %v108 = vunpack.c.l.b16 %v57
    %v109 = vunpack.c.l.b16 %v58
    %v110 = vunpack.c.l.b16 %v59
    %v111 = vunpack.c.l.b16 %v60
    %v112 = vunpack.c.l.b16 %v61
    %v113 = vunpack.c.l.b16 %v62
    %v114 = vunpack.c.l.b16 %v63
    %v115 = vunpack.c.l.b16 %v64
    %v116 = vunpack.c.l.b16 %v65
    %v117 = vunpack.c.l.b16 %v66
    %v118 = vunpack.c.l.b16 %v67
    %v119 = vunpack.c.l.b16 %v68
    %v120 = vunpack.c.l.b16 %v69
    %v121 = vpack.c.b16 %v106, %v105
    %v122 = vpack.c.b16 %v108, %v107
    %v123 = vpack.c.b16 %v110, %v109
    %v124 = vpack.c.b16 %v112, %v111
    %v125 = vpack.c.b16 %v114, %v113
    %v126 = vpack.c.b16 %v116, %v115
    %v127 = vpack.c.b16 %v118, %v117
    %v128 = vpack.c.b16 %v120, %v119
    %137 = vmatprep.subr.bf16.mxu0 0
    %138 = vmatpush1.bf16.msra.mxu0 %v121
    %139 = vmatprep.subr.bf16.mxu0 0
    %140 = vmatpush1.bf16.msra.mxu0 %v122
    %141 = vmatprep.subr.bf16.mxu0 0
    %142 = vmatpush1.bf16.msra.mxu0 %v123
    %143 = vmatprep.subr.bf16.mxu0 0
    %144 = vmatpush1.bf16.msra.mxu0 %v124
    %145 = vmatprep.subr.bf16.mxu0 0
    %146 = vmatpush1.bf16.msra.mxu0 %v125
    %147 = vmatprep.subr.bf16.mxu0 0
    %148 = vmatpush1.bf16.msra.mxu0 %v126
    %149 = vmatprep.subr.bf16.mxu0 0
    %150 = vmatpush1.bf16.msra.mxu0 %v127
    %151 = vmatprep.subr.bf16.mxu0 0
    %152 = vmatpush1.bf16.msra.mxu0 %v128
    %153 = vmatprep.subr.bf16.mxu0 0
    %154 = vmatpush1.bf16.msra.mxu0 0
    %155 = vmatprep.subr.bf16.mxu0 0
    %156 = vmatpush1.bf16.msra.mxu0 0
    %157 = vmatprep.subr.bf16.mxu0 0
    %158 = vmatpush1.bf16.msra.mxu0 0
    %159 = vmatprep.subr.bf16.mxu0 0
    %160 = vmatpush1.bf16.msra.mxu0 0
    %161 = vmatprep.subr.bf16.mxu0 0
    %162 = vmatpush1.bf16.msra.mxu0 0
    %163 = vmatprep.subr.bf16.mxu0 0
    %164 = vmatpush1.bf16.msra.mxu0 0
    %165 = vmatprep.subr.bf16.mxu0 0
    %166 = vmatpush1.bf16.msra.mxu0 0
    %167 = vmatprep.subr.bf16.mxu0 0
    %168 = vmatpush1.bf16.msra.mxu0 0
    %169 = vmatprep.mubr.bf16.mxu0 0
    %170 = vmatmul.mubr.bf16.gmra.mrb[0].mxu0 %v85
    %v171 = vpop.f32.mrb[0].mxu0
    %v172 = vadd.f32 %v75, %v171
    %v173 = vpop.f32.mrb[0].mxu0
    %v174 = vpop.f32.mrb[0].mxu0
    %v175 = vadd.f32 %v75, %v174
    %v176 = vpop.f32.mrb[0].mxu0
    %177 = vmatprep.mubr.bf16.mxu0 0
    %178 = vmatmul.mubr.bf16.gmra.mrb[0].mxu0 %v86
    %v179 = vpop.f32.mrb[0].mxu0
    %v180 = vadd.f32 %v75, %v179
    %v181 = vpop.f32.mrb[0].mxu0
    %v182 = vpop.f32.mrb[0].mxu0
    %v183 = vadd.f32 %v75, %v182
    %v184 = vpop.f32.mrb[0].mxu0
    %185 = vdwg.mxu0
    %v186 = vld [vmem:[%s2] sm:$0xff]
    %v187 = vld [vmem:[%s2 + $0x8] sm:$0xff]
    %v188 = vld [vmem:[%s2 + $0x10] sm:$0xff]
    %v189 = vld [vmem:[%s2 + $0x18] sm:$0xff]
    %v190 = vadd.f32 %v186, %v172
    %v191 = vadd.f32 %v187, %v175
    %v192 = vadd.f32 %v188, %v180
    %v193 = vadd.f32 %v189, %v183
    %v194 = vld [vmem:[%s5] sm:$0x1]
    %v195 = vld [vmem:[%s6] sm:$0x1]
    %196 = vadd.xlane.f32.xlu0 %v190
    %v197 = vpop.xlane.xlu0 %196
    %198 = vadd.xlane.f32.xlu0 %v191
    %v199 = vpop.xlane.xlu0 %198
    %200 = vadd.xlane.f32.xlu0 %v192
    %v201 = vpop.xlane.xlu0 %200
    %202 = vadd.xlane.f32.xlu0 %v193
    %v203 = vpop.xlane.xlu0 %202
    %v204 = vrcp.pop 128.0
    %v205 = vmul.f32 %v197, %v204
    %v206 = vmul.f32 %v199, %v204
    %v207 = vmul.f32 %v201, %v204
    %v208 = vmul.f32 %v203, %v204
    %v209 = vsub.f32 %v190, %v205
    %v210 = vsub.f32 %v191, %v206
    %v211 = vsub.f32 %v192, %v207
    %v212 = vsub.f32 %v193, %v208
    %v213 = vmul.f32 %v209, %v209
    %v214 = vmul.f32 %v210, %v210
    %v215 = vmul.f32 %v211, %v211
    %v216 = vmul.f32 %v212, %v212
    %217 = vadd.xlane.f32.xlu0 %v213
    %v218 = vpop.xlane.xlu0 %217
    %219 = vadd.xlane.f32.xlu0 %v214
    %v220 = vpop.xlane.xlu0 %219
    %221 = vadd.xlane.f32.xlu0 %v215
    %v222 = vpop.xlane.xlu0 %221
    %223 = vadd.xlane.f32.xlu0 %v216
    %v224 = vpop.xlane.xlu0 %223
    %v225 = vmul.f32 %v218, %v204
    %v226 = vmul.f32 %v220, %v204
    %v227 = vmul.f32 %v222, %v204
    %v228 = vmul.f32 %v224, %v204
    %v229 = vadd.f32 %v225, 1e-05
    %v230 = vadd.f32 %v226, 1e-05
    %v231 = vadd.f32 %v227, 1e-05
    %v232 = vadd.f32 %v228, 1e-05
    %v233 = vrsqrt.pop %v229
    %v234 = vrsqrt.pop %v230
    %v235 = vrsqrt.pop %v231
    %v236 = vrsqrt.pop %v232
    %v237 = vmul.f32 %v209, %v233
    %v238 = vmul.f32 %v210, %v234
    %v239 = vmul.f32 %v211, %v235
    %v240 = vmul.f32 %v212, %v236
    %v242 = vlaneseq
    %v243 = vshrl.u32 %v242, 7
    %v244 = vsub.s32 0, %v243
    %v245 = vrot.slane %v194, %v244
    %v247 = vmul.f32 %v237, %v245
    %v248 = vmul.f32 %v238, %v245
    %v249 = vmul.f32 %v239, %v245
    %v250 = vmul.f32 %v240, %v245
    %v252 = vlaneseq
    %v253 = vshrl.u32 %v252, 7
    %v254 = vsub.s32 0, %v253
    %v255 = vrot.slane %v195, %v254
    %v257 = vadd.f32 %v247, %v255
    %v258 = vadd.f32 %v248, %v255
    %v259 = vadd.f32 %v249, %v255
    %v260 = vadd.f32 %v250, %v255
    %v261 = vpack.c.bf16 %v258, %v257
    %v262 = vpack.c.bf16 %v260, %v259
    %v263 = vld [vmem:[%s7] sm:$0xff]
    %v264 = vld [vmem:[%s7 + $0x8] sm:$0xff]
    %v265 = vld [vmem:[%s7 + $0x10] sm:$0xff]
    %v266 = vld [vmem:[%s7 + $0x18] sm:$0xff]
    %v267 = vld [vmem:[%s7 + $0x20] sm:$0xff]
    %v268 = vld [vmem:[%s7 + $0x28] sm:$0xff]
    %v269 = vld [vmem:[%s7 + $0x30] sm:$0xff]
    %v270 = vld [vmem:[%s7 + $0x38] sm:$0xff]
    %v271 = vld [vmem:[%s7 + $0x40] sm:$0xff]
    %v272 = vld [vmem:[%s7 + $0x48] sm:$0xff]
    %v273 = vld [vmem:[%s7 + $0x50] sm:$0xff]
    %v274 = vld [vmem:[%s7 + $0x58] sm:$0xff]
    %v275 = vld [vmem:[%s7 + $0x60] sm:$0xff]
    %v276 = vld [vmem:[%s7 + $0x68] sm:$0xff]
    %v277 = vld [vmem:[%s7 + $0x70] sm:$0xff]
    %v278 = vld [vmem:[%s7 + $0x78] sm:$0xff]
    %v279 = vld [vmem:[%s8] sm:$0x3]
    %v281 = vlaneseq
    %v282 = vshrl.u32 %v281, 7
    %v283 = vsub.s32 0, %v282
    %v284 = vrot.slane %v279, %v283
    %v285 = vlaneseq
    %v286 = vshrl.u32 %v285, 7
    %v287 = vsub.s32 1, %v286
    %v288 = vrot.slane %v279, %v287
    %v307 = vunpack.c.l.b16 %v263
    %v308 = vunpack.c.h.b16 %v263
    %v309 = vunpack.c.l.b16 %v264
    %v310 = vunpack.c.h.b16 %v264
    %v311 = vunpack.c.l.b16 %v265
    %v312 = vunpack.c.h.b16 %v265
    %v313 = vunpack.c.l.b16 %v266
    %v314 = vunpack.c.h.b16 %v266
    %v315 = vunpack.c.l.b16 %v267
    %v316 = vunpack.c.h.b16 %v267
    %v317 = vunpack.c.l.b16 %v268
    %v318 = vunpack.c.h.b16 %v268
    %v319 = vunpack.c.l.b16 %v269
    %v320 = vunpack.c.h.b16 %v269
    %v321 = vunpack.c.l.b16 %v270
    %v322 = vunpack.c.h.b16 %v270
    %v323 = vunpack.c.l.b16 %v271
    %v324 = vunpack.c.h.b16 %v271
    %v325 = vunpack.c.l.b16 %v272
    %v326 = vunpack.c.h.b16 %v272
    %v327 = vunpack.c.l.b16 %v273
    %v328 = vunpack.c.h.b16 %v273
    %v329 = vunpack.c.l.b16 %v274
    %v330 = vunpack.c.h.b16 %v274
    %v331 = vunpack.c.l.b16 %v275
    %v332 = vunpack.c.h.b16 %v275
    %v333 = vunpack.c.l.b16 %v276
    %v334 = vunpack.c.h.b16 %v276
    %v335 = vunpack.c.l.b16 %v277
    %v336 = vunpack.c.h.b16 %v277
    %v337 = vunpack.c.l.b16 %v278
    %v338 = vunpack.c.h.b16 %v278
    %v339 = vpack.c.b16 %v309, %v307
    %v340 = vpack.c.b16 %v310, %v308
    %v341 = vpack.c.b16 %v313, %v311
    %v342 = vpack.c.b16 %v314, %v312
    %v343 = vpack.c.b16 %v317, %v315
    %v344 = vpack.c.b16 %v318, %v316
    %v345 = vpack.c.b16 %v321, %v319
    %v346 = vpack.c.b16 %v322, %v320
    %v347 = vpack.c.b16 %v325, %v323
    %v348 = vpack.c.b16 %v326, %v324
    %v349 = vpack.c.b16 %v329, %v327
    %v350 = vpack.c.b16 %v330, %v328
    %v351 = vpack.c.b16 %v333, %v331
    %v352 = vpack.c.b16 %v334, %v332
    %v353 = vpack.c.b16 %v337, %v335
    %v354 = vpack.c.b16 %v338, %v336
    %371 = vmatprep.subr.bf16.mxu0 %v340
    %372 = vmatpush1.bf16.msra.mxu0 %v339
    %373 = vmatprep.subr.bf16.mxu0 %v342
    %374 = vmatpush1.bf16.msra.mxu0 %v341
    %375 = vmatprep.subr.bf16.mxu0 %v344
    %376 = vmatpush1.bf16.msra.mxu0 %v343
    %377 = vmatprep.subr.bf16.mxu0 %v346
    %378 = vmatpush1.bf16.msra.mxu0 %v345
    %379 = vmatprep.subr.bf16.mxu0 %v348
    %380 = vmatpush1.bf16.msra.mxu0 %v347
    %381 = vmatprep.subr.bf16.mxu0 %v350
    %382 = vmatpush1.bf16.msra.mxu0 %v349
    %383 = vmatprep.subr.bf16.mxu0 %v352
    %384 = vmatpush1.bf16.msra.mxu0 %v351
    %385 = vmatprep.subr.bf16.mxu0 %v354
    %386 = vmatpush1.bf16.msra.mxu0 %v353
    %387 = vmatprep.subr.bf16.mxu0 0
    %388 = vmatpush1.bf16.msra.mxu0 0
    %389 = vmatprep.subr.bf16.mxu0 0
    %390 = vmatpush1.bf16.msra.mxu0 0
    %391 = vmatprep.subr.bf16.mxu0 0
    %392 = vmatpush1.bf16.msra.mxu0 0
    %393 = vmatprep.subr.bf16.mxu0 0
    %394 = vmatpush1.bf16.msra.mxu0 0
    %395 = vmatprep.subr.bf16.mxu0 0
    %396 = vmatpush1.bf16.msra.mxu0 0
    %397 = vmatprep.subr.bf16.mxu0 0
    %398 = vmatpush1.bf16.msra.mxu0 0
    %399 = vmatprep.subr.bf16.mxu0 0
    %400 = vmatpush1.bf16.msra.mxu0 0
    %401 = vmatprep.subr.bf16.mxu0 0
    %402 = vmatpush1.bf16.msra.mxu0 0
    %403 = vmatprep.mubr.bf16.mxu0 0
    %404 = vmatmul.mubr.bf16.gmra.mrb[0].mxu0 %v261
    %v405 = vpop.f32.mrb[0].mxu0
    %v406 = vadd.f32 %v284, %v405
    %v407 = vpop.f32.mrb[0].mxu0
    %v408 = vadd.f32 %v288, %v407
    %v409 = vpop.f32.mrb[0].mxu0
    %v410 = vadd.f32 %v284, %v409
    %v411 = vpop.f32.mrb[0].mxu0
    %v412 = vadd.f32 %v288, %v411
    %413 = vmatprep.mubr.bf16.mxu0 0
    %414 = vmatmul.mubr.bf16.gmra.mrb[0].mxu0 %v262
    %v415 = vpop.f32.mrb[0].mxu0
    %v416 = vadd.f32 %v284, %v415
    %v417 = vpop.f32.mrb[0].mxu0
    %v418 = vadd.f32 %v288, %v417
    %v419 = vpop.f32.mrb[0].mxu0
    %v420 = vadd.f32 %v284, %v419
    %v421 = vpop.f32.mrb[0].mxu0
    %v422 = vadd.f32 %v288, %v421
    %423 = vdwg.mxu0
    %v424 = vmul.f32 %v406, 0.5
    %v425 = vmul.f32 %v408, 0.5
    %v426 = vmul.f32 %v410, 0.5
    %v427 = vmul.f32 %v412, 0.5
    %v428 = vmul.f32 %v416, 0.5
    %v429 = vmul.f32 %v418, 0.5
    %v430 = vmul.f32 %v420, 0.5
    %v431 = vmul.f32 %v422, 0.5
    %v432 = vmul.f32 %v406, %v406
    %v433 = vmul.f32 %v408, %v408
    %v434 = vmul.f32 %v410, %v410
    %v435 = vmul.f32 %v412, %v412
    %v436 = vmul.f32 %v416, %v416
    %v437 = vmul.f32 %v418, %v418
    %v438 = vmul.f32 %v420, %v420
    %v439 = vmul.f32 %v422, %v422
    %v440 = vmul.f32 %v432, %v406
    %v441 = vmul.f32 %v433, %v408
    %v442 = vmul.f32 %v434, %v410
    %v443 = vmul.f32 %v435, %v412
    %v444 = vmul.f32 %v436, %v416
    %v445 = vmul.f32 %v437, %v418
    %v446 = vmul.f32 %v438, %v420
    %v447 = vmul.f32 %v439, %v422
    %v448 = vmul.f32 %v440, 0.044715
    %v449 = vmul.f32 %v441, 0.044715
    %v450 = vmul.f32 %v442, 0.044715
    %v451 = vmul.f32 %v443, 0.044715
    %v452 = vmul.f32 %v444, 0.044715
    %v453 = vmul.f32 %v445, 0.044715
    %v454 = vmul.f32 %v446, 0.044715
    %v455 = vmul.f32 %v447, 0.044715
    %v456 = vadd.f32 %v406, %v448
    %v457 = vadd.f32 %v408, %v449
    %v458 = vadd.f32 %v410, %v450
    %v459 = vadd.f32 %v412, %v451
    %v460 = vadd.f32 %v416, %v452
    %v461 = vadd.f32 %v418, %v453
    %v462 = vadd.f32 %v420, %v454
    %v463 = vadd.f32 %v422, %v455
    %v464 = vmul.f32 %v456, 0.7978846
    %v465 = vmul.f32 %v457, 0.7978846
    %v466 = vmul.f32 %v458, 0.7978846
    %v467 = vmul.f32 %v459, 0.7978846
    %v468 = vmul.f32 %v460, 0.7978846
    %v469 = vmul.f32 %v461, 0.7978846
    %v470 = vmul.f32 %v462, 0.7978846
    %v471 = vmul.f32 %v463, 0.7978846
    %v472 = vtanh.pop %v464
    %v473 = vtanh.pop %v465
    %v474 = vtanh.pop %v466
    %v475 = vtanh.pop %v467
    %v476 = vtanh.pop %v468
    %v477 = vtanh.pop %v469
    %v478 = vtanh.pop %v470
    %v479 = vtanh.pop %v471
    %v480 = vadd.f32 %v472, 1.0
    %v481 = vadd.f32 %v473, 1.0
    %v482 = vadd.f32 %v474, 1.0
    %v483 = vadd.f32 %v475, 1.0
    %v484 = vadd.f32 %v476, 1.0
    %v485 = vadd.f32 %v477, 1.0
    %v486 = vadd.f32 %v478, 1.0
    %v487 = vadd.f32 %v479, 1.0
    %v488 = vmul.f32 %v424, %v480
    %v489 = vmul.f32 %v425, %v481
    %v490 = vmul.f32 %v426, %v482
    %v491 = vmul.f32 %v427, %v483
    %v492 = vmul.f32 %v428, %v484
    %v493 = vmul.f32 %v429, %v485
    %v494 = vmul.f32 %v430, %v486
    %v495 = vmul.f32 %v431, %v487
    %v496 = vpack.c.bf16 %v490, %v488
    %v497 = vpack.c.bf16 %v491, %v489
    %v498 = vpack.c.bf16 %v494, %v492
    %v499 = vpack.c.bf16 %v495, %v493
    %v500 = vld [vmem:[%s9] sm:$0xf]
    %v501 = vld [vmem:[%s9 + $0x4] sm:$0xf]
    %v502 = vld [vmem:[%s9 + $0x8] sm:$0xf]
    %v503 = vld [vmem:[%s9 + $0xc] sm:$0xf]
    %v504 = vld [vmem:[%s9 + $0x10] sm:$0xf]
    %v505 = vld [vmem:[%s9 + $0x14] sm:$0xf]
    %v506 = vld [vmem:[%s9 + $0x18] sm:$0xf]
    %v507 = vld [vmem:[%s9 + $0x1c] sm:$0xf]
    %v508 = vld [vmem:[%s9 + $0x20] sm:$0xf]
    %v509 = vld [vmem:[%s9 + $0x24] sm:$0xf]
    %v510 = vld [vmem:[%s9 + $0x28] sm:$0xf]
    %v511 = vld [vmem:[%s9 + $0x2c] sm:$0xf]
    %v512 = vld [vmem:[%s9 + $0x30] sm:$0xf]
    %v513 = vld [vmem:[%s9 + $0x34] sm:$0xf]
    %v514 = vld [vmem:[%s9 + $0x38] sm:$0xf]
    %v515 = vld [vmem:[%s9 + $0x3c] sm:$0xf]
    %v516 = vld [vmem:[%s9 + $0x40] sm:$0xf]
    %v517 = vld [vmem:[%s9 + $0x44] sm:$0xf]
    %v518 = vld [vmem:[%s9 + $0x48] sm:$0xf]
    %v519 = vld [vmem:[%s9 + $0x4c] sm:$0xf]
    %v520 = vld [vmem:[%s9 + $0x50] sm:$0xf]
    %v521 = vld [vmem:[%s9 + $0x54] sm:$0xf]
    %v522 = vld [vmem:[%s9 + $0x58] sm:$0xf]
    %v523 = vld [vmem:[%s9 + $0x5c] sm:$0xf]
    %v524 = vld [vmem:[%s9 + $0x60] sm:$0xf]
    %v525 = vld [vmem:[%s9 + $0x64] sm:$0xf]
    %v526 = vld [vmem:[%s9 + $0x68] sm:$0xf]
    %v527 = vld [vmem:[%s9 + $0x6c] sm:$0xf]
    %v528 = vld [vmem:[%s9 + $0x70] sm:$0xf]
    %v529 = vld [vmem:[%s9 + $0x74] sm:$0xf]
    %v530 = vld [vmem:[%s9 + $0x78] sm:$0xf]
    %v531 = vld [vmem:[%s9 + $0x7c] sm:$0xf]
    %v532 = vld [vmem:[#allocation4] sm:$0x1]
    %v534 = vlaneseq
    %v535 = vshrl.u32 %v534, 7
    %v536 = vsub.s32 0, %v535
    %v537 = vrot.slane %v532, %v536
    %v571 = vunpack.c.l.b16 %v500
    %v572 = vunpack.c.l.b16 %v501
    %v573 = vunpack.c.l.b16 %v502
    %v574 = vunpack.c.l.b16 %v503
    %v575 = vunpack.c.l.b16 %v504
    %v576 = vunpack.c.l.b16 %v505
    %v577 = vunpack.c.l.b16 %v506
    %v578 = vunpack.c.l.b16 %v507
    %v579 = vunpack.c.l.b16 %v508
    %v580 = vunpack.c.l.b16 %v509
    %v581 = vunpack.c.l.b16 %v510
    %v582 = vunpack.c.l.b16 %v511
    %v583 = vunpack.c.l.b16 %v512
    %v584 = vunpack.c.l.b16 %v513
    %v585 = vunpack.c.l.b16 %v514
    %v586 = vunpack.c.l.b16 %v515
    %v587 = vunpack.c.l.b16 %v516
    %v588 = vunpack.c.l.b16 %v517
    %v589 = vunpack.c.l.b16 %v518
    %v590 = vunpack.c.l.b16 %v519
    %v591 = vunpack.c.l.b16 %v520
    %v592 = vunpack.c.l.b16 %v521
    %v593 = vunpack.c.l.b16 %v522
    %v594 = vunpack.c.l.b16 %v523
    %v595 = vunpack.c.l.b16 %v524
    %v596 = vunpack.c.l.b16 %v525
    %v597 = vunpack.c.l.b16 %v526
    %v598 = vunpack.c.l.b16 %v527
    %v599 = vunpack.c.l.b16 %v528
    %v600 = vunpack.c.l.b16 %v529
    %v601 = vunpack.c.l.b16 %v530
    %v602 = vunpack.c.l.b16 %v531
    %v603 = vpack.c.b16 %v572, %v571
    %v604 = vpack.c.b16 %v574, %v573
    %v605 = vpack.c.b16 %v576, %v575
    %v606 = vpack.c.b16 %v578, %v577
    %v607 = vpack.c.b16 %v580, %v579
    %v608 = vpack.c.b16 %v582, %v581
    %v609 = vpack.c.b16 %v584, %v583
    %v610 = vpack.c.b16 %v586, %v585
    %v611 = vpack.c.b16 %v588, %v587
    %v612 = vpack.c.b16 %v590, %v589
    %v613 = vpack.c.b16 %v592, %v591
    %v614 = vpack.c.b16 %v594, %v593
    %v615 = vpack.c.b16 %v596, %v595
    %v616 = vpack.c.b16 %v598, %v597
    %v617 = vpack.c.b16 %v600, %v599
    %v618 = vpack.c.b16 %v602, %v601
    %635 = vmatprep.subr.bf16.mxu0 0
    %636 = vmatpush1.bf16.msra.mxu0 %v603
    %637 = vmatprep.subr.bf16.mxu0 0
    %638 = vmatpush1.bf16.msra.mxu0 %v604
    %639 = vmatprep.subr.bf16.mxu0 0
    %640 = vmatpush1.bf16.msra.mxu0 %v605
    %641 = vmatprep.subr.bf16.mxu0 0
    %642 = vmatpush1.bf16.msra.mxu0 %v606
    %643 = vmatprep.subr.bf16.mxu0 0
    %644 = vmatpush1.bf16.msra.mxu0 %v607
    %645 = vmatprep.subr.bf16.mxu0 0
    %646 = vmatpush1.bf16.msra.mxu0 %v608
    %647 = vmatprep.subr.bf16.mxu0 0
    %648 = vmatpush1.bf16.msra.mxu0 %v609
    %649 = vmatprep.subr.bf16.mxu0 0
    %650 = vmatpush1.bf16.msra.mxu0 %v610
    %651 = vmatprep.subr.bf16.mxu0 0
    %652 = vmatpush1.bf16.msra.mxu0 %v611
    %653 = vmatprep.subr.bf16.mxu0 0
    %654 = vmatpush1.bf16.msra.mxu0 %v612
    %655 = vmatprep.subr.bf16.mxu0 0
    %656 = vmatpush1.bf16.msra.mxu0 %v613
    %657 = vmatprep.subr.bf16.mxu0 0
    %658 = vmatpush1.bf16.msra.mxu0 %v614
    %659 = vmatprep.subr.bf16.mxu0 0
    %660 = vmatpush1.bf16.msra.mxu0 %v615
    %661 = vmatprep.subr.bf16.mxu0 0
    %662 = vmatpush1.bf16.msra.mxu0 %v616
    %663 = vmatprep.subr.bf16.mxu0 0
    %664 = vmatpush1.bf16.msra.mxu0 %v617
    %665 = vmatprep.subr.bf16.mxu0 0
    %666 = vmatpush1.bf16.msra.mxu0 %v618
    %667 = vmatprep.mubr.bf16.mxu0 %v497
    %668 = vmatmul.mubr.bf16.gmra.mrb[0].mxu0 %v496
    %v669 = vpop.f32.mrb[0].mxu0
    %v670 = vadd.f32 %v537, %v669
    %v671 = vpop.f32.mrb[0].mxu0
    %v672 = vpop.f32.mrb[0].mxu0
    %v673 = vadd.f32 %v537, %v672
    %v674 = vpop.f32.mrb[0].mxu0
    %675 = vmatprep.mubr.bf16.mxu0 %v499
    %676 = vmatmul.mubr.bf16.gmra.mrb[0].mxu0 %v498
    %v677 = vpop.f32.mrb[0].mxu0
    %v678 = vadd.f32 %v537, %v677
    %v679 = vpop.f32.mrb[0].mxu0
    %v680 = vpop.f32.mrb[0].mxu0
    %v681 = vadd.f32 %v537, %v680
    %v682 = vpop.f32.mrb[0].mxu0
    %683 = vdwg.mxu0
    %v684 = vadd.f32 %v190, %v670
    %v685 = vadd.f32 %v191, %v673
    %v686 = vadd.f32 %v192, %v678
    %v687 = vadd.f32 %v193, %v681
    %688 = vst [vmem:[%s11] sm:$0xff] %v684
    %689 = vst [vmem:[%s11 + $0x8] sm:$0xff] %v685
    %690 = vst [vmem:[%s11 + $0x10] sm:$0xff] %v686
    %691 = vst [vmem:[%s11 + $0x18] sm:$0xff] %v687
    // Predicated region
    $region46: #{transformer_forward.8} parent=1 // pred_check
      _
    $region47: #{transformer_forward.8} parent=1 // pred_check_branch
      %693 = sbr.rel (0) target = $region49
    $region48: #{transformer_forward.8} parent=1 // pred_region
      _
    $region49: #{transformer_forward.8} parent=1 // pred_fallthru
      _
    // Predicated region
    $region50: #{transformer_forward.8} parent=1 // pred_check
      _
    $region51: #{transformer_forward.8} parent=1 // pred_check_branch
      %695 = sbr.rel (0) target = $region53
    $region52: #{transformer_forward.8} parent=1 // pred_region
      _
    $region53: #{transformer_forward.8} parent=1 // pred_fallthru
      _
    %696 = vsyncpa [#allocation5], 1

// kernel: transformer_forward.11
$region0: #{transformer_forward.11}
  #allocation0 [shape = 'u32[]', space=smem, size = 0x4, offset = 0x4, fixed_abs, tag = 'smem constant byte address 0x4 - core index']
  #allocation1 [shape = 'u32[144,128]{1,0:T(1,128)}', space=vmem, size = 0x12000, scoped, tag = 'internal scratch']
  #allocation2 [shape = 's32[1]{0}', space=sflag, size = 0x4, scoped, tag = 'scoped memory for transformer_forward.11']
  #allocation3 [shape = 's32[1]{0:T(128)S(6)}', space=smem, size = 0x200, scoped, tag = 'prefetched SMEM operand 0']
  %s0 = inlined_call_operand.<no memory space> [shape: s32[1], index: 0, kind: input, shape index: {}]
  %s1 = inlined_call_operand.vmem [shape: bf16[32,128], index: 1, kind: input, shape index: {}]
  %s2 = inlined_call_operand.vmem [shape: f32[32,128], index: 2, kind: input, shape index: {}]
  %s3 = inlined_call_operand.vmem [shape: bf16[128,128], index: 3, kind: input, shape index: {}]
  %s4 = inlined_call_operand.vmem [shape: f32[1,128], index: 4, kind: input, shape index: {}]
  %s5 = inlined_call_operand.vmem [shape: f32[1,128], index: 5, kind: input, shape index: {}]
  %s6 = inlined_call_operand.vmem [shape: f32[1,128], index: 6, kind: input, shape index: {}]
  %s7 = inlined_call_operand.vmem [shape: bf16[128,256], index: 7, kind: input, shape index: {}]
  %s8 = inlined_call_operand.vmem [shape: f32[1,256], index: 8, kind: input, shape index: {}]
  %s9 = inlined_call_operand.vmem [shape: bf16[256,128], index: 9, kind: input, shape index: {}]
  %s10 = inlined_call_operand.vmem [shape: f32[1,128], index: 10, kind: input, shape index: {}]
  %s11 = inlined_call_operand.hbm [shape: f32[32,128], index: 11, kind: output, shape index: {}]
  %s12 = sld [smem:[#allocation0]]
  $region50: #{transformer_forward.11} parent=0
    _
  %s14 = ssub.s32 1, %s12
  %s15 = scalar_select 0, %s14, %s12
  %16 = sst [smem:[#allocation3]] %s0
  $region1: #{transformer_forward.11} parent=0
    #allocation4 [shape = 'u8[16384]{0}', space=vmem, size = 0x4000, scoped, tag = 'output window, operand 0, single buffered']
    #allocation5 [shape = 's32[1]{0}', space=sflag, size = 0x4, scoped, tag = 'scoped memory for transformer_forward.11']
    %17 = vsyncpa [#allocation5], 0
    // Predicated region
    $region2: #{transformer_forward.11} parent=1 // pred_check
      _
    $region3: #{transformer_forward.11} parent=1 // pred_check_branch
      %19 = sbr.rel (0) target = $region5
    $region4: #{transformer_forward.11} parent=1 // pred_region
      _
    $region5: #{transformer_forward.11} parent=1 // pred_fallthru
      _
    // Predicated region
    $region6: #{transformer_forward.11} parent=1 // pred_check
      _
    $region7: #{transformer_forward.11} parent=1 // pred_check_branch
      %21 = sbr.rel (0) target = $region9
    $region8: #{transformer_forward.11} parent=1 // pred_region
      _
    $region9: #{transformer_forward.11} parent=1 // pred_fallthru
      _
    // Predicated region
    $region10: #{transformer_forward.11} parent=1 // pred_check
      _
    $region11: #{transformer_forward.11} parent=1 // pred_check_branch
      %23 = sbr.rel (0) target = $region13
    $region12: #{transformer_forward.11} parent=1 // pred_region
      _
    $region13: #{transformer_forward.11} parent=1 // pred_fallthru
      _
    // Predicated region
    $region14: #{transformer_forward.11} parent=1 // pred_check
      _
    $region15: #{transformer_forward.11} parent=1 // pred_check_branch
      %25 = sbr.rel (0) target = $region17
    $region16: #{transformer_forward.11} parent=1 // pred_region
      _
    $region17: #{transformer_forward.11} parent=1 // pred_fallthru
      _
    // Predicated region
    $region18: #{transformer_forward.11} parent=1 // pred_check
      _
    $region19: #{transformer_forward.11} parent=1 // pred_check_branch
      %27 = sbr.rel (0) target = $region21
    $region20: #{transformer_forward.11} parent=1 // pred_region
      _
    $region21: #{transformer_forward.11} parent=1 // pred_fallthru
      _
    // Predicated region
    $region22: #{transformer_forward.11} parent=1 // pred_check
      _
    $region23: #{transformer_forward.11} parent=1 // pred_check_branch
      %29 = sbr.rel (0) target = $region25
    $region24: #{transformer_forward.11} parent=1 // pred_region
      _
    $region25: #{transformer_forward.11} parent=1 // pred_fallthru
      _
    // Predicated region
    $region26: #{transformer_forward.11} parent=1 // pred_check
      _
    $region27: #{transformer_forward.11} parent=1 // pred_check_branch
      %31 = sbr.rel (0) target = $region29
    $region28: #{transformer_forward.11} parent=1 // pred_region
      _
    $region29: #{transformer_forward.11} parent=1 // pred_fallthru
      _
    // Predicated region
    $region30: #{transformer_forward.11} parent=1 // pred_check
      _
    $region31: #{transformer_forward.11} parent=1 // pred_check_branch
      %33 = sbr.rel (0) target = $region33
    $region32: #{transformer_forward.11} parent=1 // pred_region
      _
    $region33: #{transformer_forward.11} parent=1 // pred_fallthru
      _
    // Predicated region
    $region34: #{transformer_forward.11} parent=1 // pred_check
      _
    $region35: #{transformer_forward.11} parent=1 // pred_check_branch
      %35 = sbr.rel (0) target = $region37
    $region36: #{transformer_forward.11} parent=1 // pred_region
      _
    $region37: #{transformer_forward.11} parent=1 // pred_fallthru
      _
    // Predicated region
    $region38: #{transformer_forward.11} parent=1 // pred_check
      _
    $region39: #{transformer_forward.11} parent=1 // pred_check_branch
      %37 = sbr.rel (0) target = $region41
    $region40: #{transformer_forward.11} parent=1 // pred_region
      _
    $region41: #{transformer_forward.11} parent=1 // pred_fallthru
      _
    %v39 = vld [vmem:[%s1] sm:$0xf]
    %v40 = vld [vmem:[%s1 + $0x4] sm:$0xf]
    %v41 = vld [vmem:[%s1 + $0x8] sm:$0xf]
    %v42 = vld [vmem:[%s1 + $0xc] sm:$0xf]
    %v43 = vld [vmem:[%s3] sm:$0xf]
    %v44 = vld [vmem:[%s3 + $0x4] sm:$0xf]
    %v45 = vld [vmem:[%s3 + $0x8] sm:$0xf]
    %v46 = vld [vmem:[%s3 + $0xc] sm:$0xf]
    %v47 = vld [vmem:[%s3 + $0x10] sm:$0xf]
    %v48 = vld [vmem:[%s3 + $0x14] sm:$0xf]
    %v49 = vld [vmem:[%s3 + $0x18] sm:$0xf]
    %v50 = vld [vmem:[%s3 + $0x1c] sm:$0xf]
    %v51 = vld [vmem:[%s3 + $0x20] sm:$0xf]
    %v52 = vld [vmem:[%s3 + $0x24] sm:$0xf]
    %v53 = vld [vmem:[%s3 + $0x28] sm:$0xf]
    %v54 = vld [vmem:[%s3 + $0x2c] sm:$0xf]
    %v55 = vld [vmem:[%s3 + $0x30] sm:$0xf]
    %v56 = vld [vmem:[%s3 + $0x34] sm:$0xf]
    %v57 = vld [vmem:[%s3 + $0x38] sm:$0xf]
    %v58 = vld [vmem:[%s3 + $0x3c] sm:$0xf]
    %v59 = vld [vmem:[%s4] sm:$0x1]
    %v61 = vlaneseq
    %v62 = vshrl.u32 %v61, 7
    %v63 = vsub.s32 0, %v62
    %v64 = vrot.slane %v59, %v63
    %v70 = vunpack.c.l.b16 %v39
    %v71 = vunpack.c.l.b16 %v40
    %v72 = vunpack.c.l.b16 %v41
    %v73 = vunpack.c.l.b16 %v42
    %v74 = vpack.c.b16 %v71, %v70
    %v75 = vpack.c.b16 %v73, %v72
    %v94 = vunpack.c.l.b16 %v43
    %v95 = vunpack.c.l.b16 %v44
    %v96 = vunpack.c.l.b16 %v45
    %v97 = vunpack.c.l.b16 %v46
    %v98 = vunpack.c.l.b16 %v47
    %v99 = vunpack.c.l.b16 %v48
    %v100 = vunpack.c.l.b16 %v49
    %v101 = vunpack.c.l.b16 %v50
    %v102 = vunpack.c.l.b16 %v51
    %v103 = vunpack.c.l.b16 %v52
    %v104 = vunpack.c.l.b16 %v53
    %v105 = vunpack.c.l.b16 %v54
    %v106 = vunpack.c.l.b16 %v55
    %v107 = vunpack.c.l.b16 %v56
    %v108 = vunpack.c.l.b16 %v57
    %v109 = vunpack.c.l.b16 %v58
    %v110 = vpack.c.b16 %v95, %v94
    %v111 = vpack.c.b16 %v97, %v96
    %v112 = vpack.c.b16 %v99, %v98
    %v113 = vpack.c.b16 %v101, %v100
    %v114 = vpack.c.b16 %v103, %v102
    %v115 = vpack.c.b16 %v105, %v104
    %v116 = vpack.c.b16 %v107, %v106
    %v117 = vpack.c.b16 %v109, %v108
    %126 = vmatprep.subr.bf16.mxu0 0
    %127 = vmatpush1.bf16.msra.mxu0 %v110
    %128 = vmatprep.subr.bf16.mxu0 0
    %129 = vmatpush1.bf16.msra.mxu0 %v111
    %130 = vmatprep.subr.bf16.mxu0 0
    %131 = vmatpush1.bf16.msra.mxu0 %v112
    %132 = vmatprep.subr.bf16.mxu0 0
    %133 = vmatpush1.bf16.msra.mxu0 %v113
    %134 = vmatprep.subr.bf16.mxu0 0
    %135 = vmatpush1.bf16.msra.mxu0 %v114
    %136 = vmatprep.subr.bf16.mxu0 0
    %137 = vmatpush1.bf16.msra.mxu0 %v115
    %138 = vmatprep.subr.bf16.mxu0 0
    %139 = vmatpush1.bf16.msra.mxu0 %v116
    %140 = vmatprep.subr.bf16.mxu0 0
    %141 = vmatpush1.bf16.msra.mxu0 %v117
    %142 = vmatprep.subr.bf16.mxu0 0
    %143 = vmatpush1.bf16.msra.mxu0 0
    %144 = vmatprep.subr.bf16.mxu0 0
    %145 = vmatpush1.bf16.msra.mxu0 0
    %146 = vmatprep.subr.bf16.mxu0 0
    %147 = vmatpush1.bf16.msra.mxu0 0
    %148 = vmatprep.subr.bf16.mxu0 0
    %149 = vmatpush1.bf16.msra.mxu0 0
    %150 = vmatprep.subr.bf16.mxu0 0
    %151 = vmatpush1.bf16.msra.mxu0 0
    %152 = vmatprep.subr.bf16.mxu0 0
    %153 = vmatpush1.bf16.msra.mxu0 0
    %154 = vmatprep.subr.bf16.mxu0 0
    %155 = vmatpush1.bf16.msra.mxu0 0
    %156 = vmatprep.subr.bf16.mxu0 0
    %157 = vmatpush1.bf16.msra.mxu0 0
    %158 = vmatprep.mubr.bf16.mxu0 0
    %159 = vmatmul.mubr.bf16.gmra.mrb[0].mxu0 %v74
    %v160 = vpop.f32.mrb[0].mxu0
    %v161 = vadd.f32 %v64, %v160
    %v162 = vpop.f32.mrb[0].mxu0
    %v163 = vpop.f32.mrb[0].mxu0
    %v164 = vadd.f32 %v64, %v163
    %v165 = vpop.f32.mrb[0].mxu0
    %166 = vmatprep.mubr.bf16.mxu0 0
    %167 = vmatmul.mubr.bf16.gmra.mrb[0].mxu0 %v75
    %v168 = vpop.f32.mrb[0].mxu0
    %v169 = vadd.f32 %v64, %v168
    %v170 = vpop.f32.mrb[0].mxu0
    %v171 = vpop.f32.mrb[0].mxu0
    %v172 = vadd.f32 %v64, %v171
    %v173 = vpop.f32.mrb[0].mxu0
    %174 = vdwg.mxu0
    %v175 = vld [vmem:[%s2] sm:$0xff]
    %v176 = vld [vmem:[%s2 + $0x8] sm:$0xff]
    %v177 = vld [vmem:[%s2 + $0x10] sm:$0xff]
    %v178 = vld [vmem:[%s2 + $0x18] sm:$0xff]
    %v179 = vadd.f32 %v175, %v161
    %v180 = vadd.f32 %v176, %v164
    %v181 = vadd.f32 %v177, %v169
    %v182 = vadd.f32 %v178, %v172
    %v183 = vld [vmem:[%s5] sm:$0x1]
    %v184 = vld [vmem:[%s6] sm:$0x1]
    %185 = vadd.xlane.f32.xlu0 %v179
    %v186 = vpop.xlane.xlu0 %185
    %187 = vadd.xlane.f32.xlu0 %v180
    %v188 = vpop.xlane.xlu0 %187
    %189 = vadd.xlane.f32.xlu0 %v181
    %v190 = vpop.xlane.xlu0 %189
    %191 = vadd.xlane.f32.xlu0 %v182
    %v192 = vpop.xlane.xlu0 %191
    %v193 = vrcp.pop 128.0
    %v194 = vmul.f32 %v186, %v193
    %v195 = vmul.f32 %v188, %v193
    %v196 = vmul.f32 %v190, %v193
    %v197 = vmul.f32 %v192, %v193
    %v198 = vsub.f32 %v179, %v194
    %v199 = vsub.f32 %v180, %v195
    %v200 = vsub.f32 %v181, %v196
    %v201 = vsub.f32 %v182, %v197
    %v202 = vmul.f32 %v198, %v198
    %v203 = vmul.f32 %v199, %v199
    %v204 = vmul.f32 %v200, %v200
    %v205 = vmul.f32 %v201, %v201
    %206 = vadd.xlane.f32.xlu0 %v202
    %v207 = vpop.xlane.xlu0 %206
    %208 = vadd.xlane.f32.xlu0 %v203
    %v209 = vpop.xlane.xlu0 %208
    %210 = vadd.xlane.f32.xlu0 %v204
    %v211 = vpop.xlane.xlu0 %210
    %212 = vadd.xlane.f32.xlu0 %v205
    %v213 = vpop.xlane.xlu0 %212
    %v214 = vmul.f32 %v207, %v193
    %v215 = vmul.f32 %v209, %v193
    %v216 = vmul.f32 %v211, %v193
    %v217 = vmul.f32 %v213, %v193
    %v218 = vadd.f32 %v214, 1e-05
    %v219 = vadd.f32 %v215, 1e-05
    %v220 = vadd.f32 %v216, 1e-05
    %v221 = vadd.f32 %v217, 1e-05
    %v222 = vrsqrt.pop %v218
    %v223 = vrsqrt.pop %v219
    %v224 = vrsqrt.pop %v220
    %v225 = vrsqrt.pop %v221
    %v226 = vmul.f32 %v198, %v222
    %v227 = vmul.f32 %v199, %v223
    %v228 = vmul.f32 %v200, %v224
    %v229 = vmul.f32 %v201, %v225
    %v231 = vlaneseq
    %v232 = vshrl.u32 %v231, 7
    %v233 = vsub.s32 0, %v232
    %v234 = vrot.slane %v183, %v233
    %v236 = vmul.f32 %v226, %v234
    %v237 = vmul.f32 %v227, %v234
    %v238 = vmul.f32 %v228, %v234
    %v239 = vmul.f32 %v229, %v234
    %v241 = vlaneseq
    %v242 = vshrl.u32 %v241, 7
    %v243 = vsub.s32 0, %v242
    %v244 = vrot.slane %v184, %v243
    %v246 = vadd.f32 %v236, %v244
    %v247 = vadd.f32 %v237, %v244
    %v248 = vadd.f32 %v238, %v244
    %v249 = vadd.f32 %v239, %v244
    %v250 = vpack.c.bf16 %v247, %v246
    %v251 = vpack.c.bf16 %v249, %v248
    %v252 = vld [vmem:[%s7] sm:$0xff]
    %v253 = vld [vmem:[%s7 + $0x8] sm:$0xff]
    %v254 = vld [vmem:[%s7 + $0x10] sm:$0xff]
    %v255 = vld [vmem:[%s7 + $0x18] sm:$0xff]
    %v256 = vld [vmem:[%s7 + $0x20] sm:$0xff]
    %v257 = vld [vmem:[%s7 + $0x28] sm:$0xff]
    %v258 = vld [vmem:[%s7 + $0x30] sm:$0xff]
    %v259 = vld [vmem:[%s7 + $0x38] sm:$0xff]
    %v260 = vld [vmem:[%s7 + $0x40] sm:$0xff]
    %v261 = vld [vmem:[%s7 + $0x48] sm:$0xff]
    %v262 = vld [vmem:[%s7 + $0x50] sm:$0xff]
    %v263 = vld [vmem:[%s7 + $0x58] sm:$0xff]
    %v264 = vld [vmem:[%s7 + $0x60] sm:$0xff]
    %v265 = vld [vmem:[%s7 + $0x68] sm:$0xff]
    %v266 = vld [vmem:[%s7 + $0x70] sm:$0xff]
    %v267 = vld [vmem:[%s7 + $0x78] sm:$0xff]
    %v268 = vld [vmem:[%s8] sm:$0x3]
    %v270 = vlaneseq
    %v271 = vshrl.u32 %v270, 7
    %v272 = vsub.s32 0, %v271
    %v273 = vrot.slane %v268, %v272
    %v274 = vlaneseq
    %v275 = vshrl.u32 %v274, 7
    %v276 = vsub.s32 1, %v275
    %v277 = vrot.slane %v268, %v276
    %v296 = vunpack.c.l.b16 %v252
    %v297 = vunpack.c.h.b16 %v252
    %v298 = vunpack.c.l.b16 %v253
    %v299 = vunpack.c.h.b16 %v253
    %v300 = vunpack.c.l.b16 %v254
    %v301 = vunpack.c.h.b16 %v254
    %v302 = vunpack.c.l.b16 %v255
    %v303 = vunpack.c.h.b16 %v255
    %v304 = vunpack.c.l.b16 %v256
    %v305 = vunpack.c.h.b16 %v256
    %v306 = vunpack.c.l.b16 %v257
    %v307 = vunpack.c.h.b16 %v257
    %v308 = vunpack.c.l.b16 %v258
    %v309 = vunpack.c.h.b16 %v258
    %v310 = vunpack.c.l.b16 %v259
    %v311 = vunpack.c.h.b16 %v259
    %v312 = vunpack.c.l.b16 %v260
    %v313 = vunpack.c.h.b16 %v260
    %v314 = vunpack.c.l.b16 %v261
    %v315 = vunpack.c.h.b16 %v261
    %v316 = vunpack.c.l.b16 %v262
    %v317 = vunpack.c.h.b16 %v262
    %v318 = vunpack.c.l.b16 %v263
    %v319 = vunpack.c.h.b16 %v263
    %v320 = vunpack.c.l.b16 %v264
    %v321 = vunpack.c.h.b16 %v264
    %v322 = vunpack.c.l.b16 %v265
    %v323 = vunpack.c.h.b16 %v265
    %v324 = vunpack.c.l.b16 %v266
    %v325 = vunpack.c.h.b16 %v266
    %v326 = vunpack.c.l.b16 %v267
    %v327 = vunpack.c.h.b16 %v267
    %v328 = vpack.c.b16 %v298, %v296
    %v329 = vpack.c.b16 %v299, %v297
    %v330 = vpack.c.b16 %v302, %v300
    %v331 = vpack.c.b16 %v303, %v301
    %v332 = vpack.c.b16 %v306, %v304
    %v333 = vpack.c.b16 %v307, %v305
    %v334 = vpack.c.b16 %v310, %v308
    %v335 = vpack.c.b16 %v311, %v309
    %v336 = vpack.c.b16 %v314, %v312
    %v337 = vpack.c.b16 %v315, %v313
    %v338 = vpack.c.b16 %v318, %v316
    %v339 = vpack.c.b16 %v319, %v317
    %v340 = vpack.c.b16 %v322, %v320
    %v341 = vpack.c.b16 %v323, %v321
    %v342 = vpack.c.b16 %v326, %v324
    %v343 = vpack.c.b16 %v327, %v325
    %360 = vmatprep.subr.bf16.mxu0 %v329
    %361 = vmatpush1.bf16.msra.mxu0 %v328
    %362 = vmatprep.subr.bf16.mxu0 %v331
    %363 = vmatpush1.bf16.msra.mxu0 %v330
    %364 = vmatprep.subr.bf16.mxu0 %v333
    %365 = vmatpush1.bf16.msra.mxu0 %v332
    %366 = vmatprep.subr.bf16.mxu0 %v335
    %367 = vmatpush1.bf16.msra.mxu0 %v334
    %368 = vmatprep.subr.bf16.mxu0 %v337
    %369 = vmatpush1.bf16.msra.mxu0 %v336
    %370 = vmatprep.subr.bf16.mxu0 %v339
    %371 = vmatpush1.bf16.msra.mxu0 %v338
    %372 = vmatprep.subr.bf16.mxu0 %v341
    %373 = vmatpush1.bf16.msra.mxu0 %v340
    %374 = vmatprep.subr.bf16.mxu0 %v343
    %375 = vmatpush1.bf16.msra.mxu0 %v342
    %376 = vmatprep.subr.bf16.mxu0 0
    %377 = vmatpush1.bf16.msra.mxu0 0
    %378 = vmatprep.subr.bf16.mxu0 0
    %379 = vmatpush1.bf16.msra.mxu0 0
    %380 = vmatprep.subr.bf16.mxu0 0
    %381 = vmatpush1.bf16.msra.mxu0 0
    %382 = vmatprep.subr.bf16.mxu0 0
    %383 = vmatpush1.bf16.msra.mxu0 0
    %384 = vmatprep.subr.bf16.mxu0 0
    %385 = vmatpush1.bf16.msra.mxu0 0
    %386 = vmatprep.subr.bf16.mxu0 0
    %387 = vmatpush1.bf16.msra.mxu0 0
    %388 = vmatprep.subr.bf16.mxu0 0
    %389 = vmatpush1.bf16.msra.mxu0 0
    %390 = vmatprep.subr.bf16.mxu0 0
    %391 = vmatpush1.bf16.msra.mxu0 0
    %392 = vmatprep.mubr.bf16.mxu0 0
    %393 = vmatmul.mubr.bf16.gmra.mrb[0].mxu0 %v250
    %v394 = vpop.f32.mrb[0].mxu0
    %v395 = vadd.f32 %v273, %v394
    %v396 = vpop.f32.mrb[0].mxu0
    %v397 = vadd.f32 %v277, %v396
    %v398 = vpop.f32.mrb[0].mxu0
    %v399 = vadd.f32 %v273, %v398
    %v400 = vpop.f32.mrb[0].mxu0
    %v401 = vadd.f32 %v277, %v400
    %402 = vmatprep.mubr.bf16.mxu0 0
    %403 = vmatmul.mubr.bf16.gmra.mrb[0].mxu0 %v251
    %v404 = vpop.f32.mrb[0].mxu0
    %v405 = vadd.f32 %v273, %v404
    %v406 = vpop.f32.mrb[0].mxu0
    %v407 = vadd.f32 %v277, %v406
    %v408 = vpop.f32.mrb[0].mxu0
    %v409 = vadd.f32 %v273, %v408
    %v410 = vpop.f32.mrb[0].mxu0
    %v411 = vadd.f32 %v277, %v410
    %412 = vdwg.mxu0
    %v413 = vmul.f32 %v395, 0.5
    %v414 = vmul.f32 %v397, 0.5
    %v415 = vmul.f32 %v399, 0.5
    %v416 = vmul.f32 %v401, 0.5
    %v417 = vmul.f32 %v405, 0.5
    %v418 = vmul.f32 %v407, 0.5
    %v419 = vmul.f32 %v409, 0.5
    %v420 = vmul.f32 %v411, 0.5
    %v421 = vmul.f32 %v395, %v395
    %v422 = vmul.f32 %v397, %v397
    %v423 = vmul.f32 %v399, %v399
    %v424 = vmul.f32 %v401, %v401
    %v425 = vmul.f32 %v405, %v405
    %v426 = vmul.f32 %v407, %v407
    %v427 = vmul.f32 %v409, %v409
    %v428 = vmul.f32 %v411, %v411
    %v429 = vmul.f32 %v421, %v395
    %v430 = vmul.f32 %v422, %v397
    %v431 = vmul.f32 %v423, %v399
    %v432 = vmul.f32 %v424, %v401
    %v433 = vmul.f32 %v425, %v405
    %v434 = vmul.f32 %v426, %v407
    %v435 = vmul.f32 %v427, %v409
    %v436 = vmul.f32 %v428, %v411
    %v437 = vmul.f32 %v429, 0.044715
    %v438 = vmul.f32 %v430, 0.044715
    %v439 = vmul.f32 %v431, 0.044715
    %v440 = vmul.f32 %v432, 0.044715
    %v441 = vmul.f32 %v433, 0.044715
    %v442 = vmul.f32 %v434, 0.044715
    %v443 = vmul.f32 %v435, 0.044715
    %v444 = vmul.f32 %v436, 0.044715
    %v445 = vadd.f32 %v395, %v437
    %v446 = vadd.f32 %v397, %v438
    %v447 = vadd.f32 %v399, %v439
    %v448 = vadd.f32 %v401, %v440
    %v449 = vadd.f32 %v405, %v441
    %v450 = vadd.f32 %v407, %v442
    %v451 = vadd.f32 %v409, %v443
    %v452 = vadd.f32 %v411, %v444
    %v453 = vmul.f32 %v445, 0.7978846
    %v454 = vmul.f32 %v446, 0.7978846
    %v455 = vmul.f32 %v447, 0.7978846
    %v456 = vmul.f32 %v448, 0.7978846
    %v457 = vmul.f32 %v449, 0.7978846
    %v458 = vmul.f32 %v450, 0.7978846
    %v459 = vmul.f32 %v451, 0.7978846
    %v460 = vmul.f32 %v452, 0.7978846
    %v461 = vtanh.pop %v453
    %v462 = vtanh.pop %v454
    %v463 = vtanh.pop %v455
    %v464 = vtanh.pop %v456
    %v465 = vtanh.pop %v457
    %v466 = vtanh.pop %v458
    %v467 = vtanh.pop %v459
    %v468 = vtanh.pop %v460
    %v469 = vadd.f32 %v461, 1.0
    %v470 = vadd.f32 %v462, 1.0
    %v471 = vadd.f32 %v463, 1.0
    %v472 = vadd.f32 %v464, 1.0
    %v473 = vadd.f32 %v465, 1.0
    %v474 = vadd.f32 %v466, 1.0
    %v475 = vadd.f32 %v467, 1.0
    %v476 = vadd.f32 %v468, 1.0
    %v477 = vmul.f32 %v413, %v469
    %v478 = vmul.f32 %v414, %v470
    %v479 = vmul.f32 %v415, %v471
    %v480 = vmul.f32 %v416, %v472
    %v481 = vmul.f32 %v417, %v473
    %v482 = vmul.f32 %v418, %v474
    %v483 = vmul.f32 %v419, %v475
    %v484 = vmul.f32 %v420, %v476
    %v485 = vpack.c.bf16 %v479, %v477
    %v486 = vpack.c.bf16 %v480, %v478
    %v487 = vpack.c.bf16 %v483, %v481
    %v488 = vpack.c.bf16 %v484, %v482
    %v489 = vld [vmem:[%s9] sm:$0xf]
    %v490 = vld [vmem:[%s9 + $0x4] sm:$0xf]
    %v491 = vld [vmem:[%s9 + $0x8] sm:$0xf]
    %v492 = vld [vmem:[%s9 + $0xc] sm:$0xf]
    %v493 = vld [vmem:[%s9 + $0x10] sm:$0xf]
    %v494 = vld [vmem:[%s9 + $0x14] sm:$0xf]
    %v495 = vld [vmem:[%s9 + $0x18] sm:$0xf]
    %v496 = vld [vmem:[%s9 + $0x1c] sm:$0xf]
    %v497 = vld [vmem:[%s9 + $0x20] sm:$0xf]
    %v498 = vld [vmem:[%s9 + $0x24] sm:$0xf]
    %v499 = vld [vmem:[%s9 + $0x28] sm:$0xf]
    %v500 = vld [vmem:[%s9 + $0x2c] sm:$0xf]
    %v501 = vld [vmem:[%s9 + $0x30] sm:$0xf]
    %v502 = vld [vmem:[%s9 + $0x34] sm:$0xf]
    %v503 = vld [vmem:[%s9 + $0x38] sm:$0xf]
    %v504 = vld [vmem:[%s9 + $0x3c] sm:$0xf]
    %v505 = vld [vmem:[%s9 + $0x40] sm:$0xf]
    %v506 = vld [vmem:[%s9 + $0x44] sm:$0xf]
    %v507 = vld [vmem:[%s9 + $0x48] sm:$0xf]
    %v508 = vld [vmem:[%s9 + $0x4c] sm:$0xf]
    %v509 = vld [vmem:[%s9 + $0x50] sm:$0xf]
    %v510 = vld [vmem:[%s9 + $0x54] sm:$0xf]
    %v511 = vld [vmem:[%s9 + $0x58] sm:$0xf]
    %v512 = vld [vmem:[%s9 + $0x5c] sm:$0xf]
    %v513 = vld [vmem:[%s9 + $0x60] sm:$0xf]
    %v514 = vld [vmem:[%s9 + $0x64] sm:$0xf]
    %v515 = vld [vmem:[%s9 + $0x68] sm:$0xf]
    %v516 = vld [vmem:[%s9 + $0x6c] sm:$0xf]
    %v517 = vld [vmem:[%s9 + $0x70] sm:$0xf]
    %v518 = vld [vmem:[%s9 + $0x74] sm:$0xf]
    %v519 = vld [vmem:[%s9 + $0x78] sm:$0xf]
    %v520 = vld [vmem:[%s9 + $0x7c] sm:$0xf]
    %v521 = vld [vmem:[%s10] sm:$0x1]
    %v523 = vlaneseq
    %v524 = vshrl.u32 %v523, 7
    %v525 = vsub.s32 0, %v524
    %v526 = vrot.slane %v521, %v525
    %v560 = vunpack.c.l.b16 %v489
    %v561 = vunpack.c.l.b16 %v490
    %v562 = vunpack.c.l.b16 %v491
    %v563 = vunpack.c.l.b16 %v492
    %v564 = vunpack.c.l.b16 %v493
    %v565 = vunpack.c.l.b16 %v494
    %v566 = vunpack.c.l.b16 %v495
    %v567 = vunpack.c.l.b16 %v496
    %v568 = vunpack.c.l.b16 %v497
    %v569 = vunpack.c.l.b16 %v498
    %v570 = vunpack.c.l.b16 %v499
    %v571 = vunpack.c.l.b16 %v500
    %v572 = vunpack.c.l.b16 %v501
    %v573 = vunpack.c.l.b16 %v502
    %v574 = vunpack.c.l.b16 %v503
    %v575 = vunpack.c.l.b16 %v504
    %v576 = vunpack.c.l.b16 %v505
    %v577 = vunpack.c.l.b16 %v506
    %v578 = vunpack.c.l.b16 %v507
    %v579 = vunpack.c.l.b16 %v508
    %v580 = vunpack.c.l.b16 %v509
    %v581 = vunpack.c.l.b16 %v510
    %v582 = vunpack.c.l.b16 %v511
    %v583 = vunpack.c.l.b16 %v512
    %v584 = vunpack.c.l.b16 %v513
    %v585 = vunpack.c.l.b16 %v514
    %v586 = vunpack.c.l.b16 %v515
    %v587 = vunpack.c.l.b16 %v516
    %v588 = vunpack.c.l.b16 %v517
    %v589 = vunpack.c.l.b16 %v518
    %v590 = vunpack.c.l.b16 %v519
    %v591 = vunpack.c.l.b16 %v520
    %v592 = vpack.c.b16 %v561, %v560
    %v593 = vpack.c.b16 %v563, %v562
    %v594 = vpack.c.b16 %v565, %v564
    %v595 = vpack.c.b16 %v567, %v566
    %v596 = vpack.c.b16 %v569, %v568
    %v597 = vpack.c.b16 %v571, %v570
    %v598 = vpack.c.b16 %v573, %v572
    %v599 = vpack.c.b16 %v575, %v574
    %v600 = vpack.c.b16 %v577, %v576
    %v601 = vpack.c.b16 %v579, %v578
    %v602 = vpack.c.b16 %v581, %v580
    %v603 = vpack.c.b16 %v583, %v582
    %v604 = vpack.c.b16 %v585, %v584
    %v605 = vpack.c.b16 %v587, %v586
    %v606 = vpack.c.b16 %v589, %v588
    %v607 = vpack.c.b16 %v591, %v590
    %624 = vmatprep.subr.bf16.mxu0 0
    %625 = vmatpush1.bf16.msra.mxu0 %v592
    %626 = vmatprep.subr.bf16.mxu0 0
    %627 = vmatpush1.bf16.msra.mxu0 %v593
    %628 = vmatprep.subr.bf16.mxu0 0
    %629 = vmatpush1.bf16.msra.mxu0 %v594
    %630 = vmatprep.subr.bf16.mxu0 0
    %631 = vmatpush1.bf16.msra.mxu0 %v595
    %632 = vmatprep.subr.bf16.mxu0 0
    %633 = vmatpush1.bf16.msra.mxu0 %v596
    %634 = vmatprep.subr.bf16.mxu0 0
    %635 = vmatpush1.bf16.msra.mxu0 %v597
    %636 = vmatprep.subr.bf16.mxu0 0
    %637 = vmatpush1.bf16.msra.mxu0 %v598
    %638 = vmatprep.subr.bf16.mxu0 0
    %639 = vmatpush1.bf16.msra.mxu0 %v599
    %640 = vmatprep.subr.bf16.mxu0 0
    %641 = vmatpush1.bf16.msra.mxu0 %v600
    %642 = vmatprep.subr.bf16.mxu0 0
    %643 = vmatpush1.bf16.msra.mxu0 %v601
    %644 = vmatprep.subr.bf16.mxu0 0
    %645 = vmatpush1.bf16.msra.mxu0 %v602
    %646 = vmatprep.subr.bf16.mxu0 0
    %647 = vmatpush1.bf16.msra.mxu0 %v603
    %648 = vmatprep.subr.bf16.mxu0 0
    %649 = vmatpush1.bf16.msra.mxu0 %v604
    %650 = vmatprep.subr.bf16.mxu0 0
    %651 = vmatpush1.bf16.msra.mxu0 %v605
    %652 = vmatprep.subr.bf16.mxu0 0
    %653 = vmatpush1.bf16.msra.mxu0 %v606
    %654 = vmatprep.subr.bf16.mxu0 0
    %655 = vmatpush1.bf16.msra.mxu0 %v607
    %656 = vmatprep.mubr.bf16.mxu0 %v486
    %657 = vmatmul.mubr.bf16.gmra.mrb[0].mxu0 %v485
    %v658 = vpop.f32.mrb[0].mxu0
    %v659 = vadd.f32 %v526, %v658
    %v660 = vpop.f32.mrb[0].mxu0
    %v661 = vpop.f32.mrb[0].mxu0
    %v662 = vadd.f32 %v526, %v661
    %v663 = vpop.f32.mrb[0].mxu0
    %664 = vmatprep.mubr.bf16.mxu0 %v488
    %665 = vmatmul.mubr.bf16.gmra.mrb[0].mxu0 %v487
    %v666 = vpop.f32.mrb[0].mxu0
    %v667 = vadd.f32 %v526, %v666
    %v668 = vpop.f32.mrb[0].mxu0
    %v669 = vpop.f32.mrb[0].mxu0
    %v670 = vadd.f32 %v526, %v669
    %v671 = vpop.f32.mrb[0].mxu0
    %672 = vdwg.mxu0
    %v673 = vadd.f32 %v179, %v659
    %v674 = vadd.f32 %v180, %v662
    %v675 = vadd.f32 %v181, %v667
    %v676 = vadd.f32 %v182, %v670
    %677 = vst [vmem:[#allocation4] sm:$0xff] %v673
    %678 = vst [vmem:[#allocation4 + $0x8] sm:$0xff] %v674
    %679 = vst [vmem:[#allocation4 + $0x10] sm:$0xff] %v675
    %680 = vst [vmem:[#allocation4 + $0x18] sm:$0xff] %v676
    // Predicated region
    $region42: #{transformer_forward.11} parent=1 // pred_check
      _
    $region43: #{transformer_forward.11} parent=1 // pred_check_branch
      %682 = sbr.rel (0) target = $region45
    $region44: #{transformer_forward.11} parent=1 // pred_region
      %s684 = ssub.s32 512, 512
      %685 = vsyncadd [#allocation5], %s684
      %s686 = sshll.u32 [#allocation4], 4
      %s687 = int_to_ptr.vmem [resolvable:$true] %s686
      %692 = dma.vmem_to_hbm [thread:$0]  %s687, 512, %s11, [#allocation5], 128, 128, 8
    $region45: #{transformer_forward.11} parent=1 // pred_fallthru
      _
    // Predicated region
    $region46: #{transformer_forward.11} parent=1 // pred_check
      _
    $region47: #{transformer_forward.11} parent=1 // pred_check_branch
      %694 = sbr.rel (0) target = $region49
    $region48: #{transformer_forward.11} parent=1 // pred_region
      %695 = dma.done [#allocation5], 512
    $region49: #{transformer_forward.11} parent=1 // pred_fallthru
      _
    %696 = vsyncpa [#allocation5], 1

</llo_original>
